<compile_context>
chip_gen: v5e
topology: v5e:2x2
jax: 0.10.0
libtpu: 0.0.40
codegen_flags: <defaults>
</compile_context>

<pallas_src>
import functools
import math

import jax
import jax.numpy as jnp
from jax.experimental import pallas as pl
from jax.experimental.pallas import tpu as pltpu

HIDDEN = 256
BN_EPS = 1e-5
LANE = 128


def _leaky_relu(x, slope=0.2):
    return jnp.where(x > 0, x, slope * x)


def _round_up(v, m):
    return ((v + m - 1) // m) * m


# --------------------------------------------------------------------------
# Stage 1: Linear -> LReLU -> Linear -> LReLU -> Linear, plus per-tile partial
#          BatchNorm statistics (sum / sum-of-squares over the batch tile).
# --------------------------------------------------------------------------
def _stage1_kernel(x_ref, w1_ref, b1_ref, w2_ref, b2_ref, w3_ref, b3_ref,
                   h3_ref, psum_ref, psq_ref, *, tile_b, valid_b, needs_mask):
    x = x_ref[...]
    h1 = _leaky_relu(
        jnp.dot(x, w1_ref[...], preferred_element_type=jnp.float32) + b1_ref[...])
    h2 = _leaky_relu(
        jnp.dot(h1.astype(w2_ref.dtype), w2_ref[...],
                preferred_element_type=jnp.float32) + b2_ref[...])
    h3 = (jnp.dot(h2.astype(w3_ref.dtype), w3_ref[...],
                  preferred_element_type=jnp.float32) + b3_ref[...])

    # h3 intermediate goes to HBM in the (possibly bf16) compute dtype.
    h3_ref[...] = h3.astype(h3_ref.dtype)

    # Per-feature partial batch statistics (f32), padded rows masked out.
    if needs_mask:
        row = (pl.program_id(0) * tile_b
               + jax.lax.broadcasted_iota(jnp.int32, (tile_b, 1), 0))
        h3 = jnp.where(row < valid_b, h3, 0.0)
    psum_ref[...] = jnp.sum(h3, axis=0, keepdims=True)[None]
    psq_ref[...] = jnp.sum(h3 * h3, axis=0, keepdims=True)[None]


# --------------------------------------------------------------------------
# Stage 2: reduce partial stats -> affine BatchNorm -> LeakyReLU -> Linear(256, nx_pad)
# --------------------------------------------------------------------------
def _stage2_kernel(h3_ref, psum_ref, psq_ref, gamma_ref, beta_ref, w4_ref, b4_ref,
                   o_ref, *, inv_b):
    ssum = jnp.sum(psum_ref[...], axis=0)          # (1, HIDDEN)
    ssq = jnp.sum(psq_ref[...], axis=0)            # (1, HIDDEN)
    mean = ssum * inv_b
    var = jnp.maximum(ssq * inv_b - mean * mean, 0.0)   # biased variance (training BN)
    inv_std = jax.lax.rsqrt(var + BN_EPS)
    scale = gamma_ref[...] * inv_std
    shift = beta_ref[...] - mean * scale

    h = _leaky_relu(h3_ref[...].astype(jnp.float32) * scale + shift)
    o_ref[...] = (jnp.dot(h.astype(w4_ref.dtype), w4_ref[...],
                          preferred_element_type=jnp.float32)
                  + b4_ref[...]).astype(o_ref.dtype)


def generator_forward(x, params, *, tile_b=512, use_bf16=True):
    (w1, b1, w2, b2, w3, b3, gamma, beta, w4, b4) = params
    B, nz = x.shape
    nx = w4.shape[1]

    cdt = jnp.bfloat16 if use_bf16 else jnp.float32
    itm = jnp.dtype(cdt).itemsize

    # Batch tiling: pad B up to a tile multiple (no whole-batch fallback).
    tile = min(_round_up(tile_b, 8), _round_up(B, 8))
    B_pad = _round_up(B, tile)
    num_tiles = B_pad // tile
    needs_mask = B_pad != B

    # Lane-dense output: pad nx up to a multiple of 128 (unmasked vst).
    nx_pad = _round_up(max(nx, LANE), LANE)

    x_p = jnp.pad(x, ((0, B_pad - B), (0, 0))) if needs_mask else x
    x_c = x_p.astype(cdt)

    # Cast weights once in the wrapper (not per tile); pad final layer to nx_pad.
    w1c = w1.astype(cdt)
    w2c = w2.astype(cdt)
    w3c = w3.astype(cdt)
    w4c = jnp.pad(w4, ((0, 0), (0, nx_pad - nx))).astype(cdt)
    b4c = jnp.pad(b4, ((0, 0), (0, nx_pad - nx)))

    def resident(shape):
        # Same block index every grid step -> DMA'd once, stays VMEM-resident.
        nd = len(shape)
        return pl.BlockSpec(shape, lambda i, _nd=nd: (0,) * _nd)

    # ---------------- Stage 1 ----------------
    k1 = functools.partial(_stage1_kernel, tile_b=tile, valid_b=B,
                           needs_mask=needs_mask)
    flops1 = 2 * B_pad * (nz * HIDDEN + 2 * HIDDEN * HIDDEN) + 6 * B_pad * HIDDEN
    bytes1 = (B_pad * nz * itm + (nz + 2 * HIDDEN) * HIDDEN * itm + 3 * HIDDEN * 4
              + B_pad * HIDDEN * itm + 2 * num_tiles * HIDDEN * 4)

    h3, psum, psq = pl.pallas_call(
        k1,
        out_shape=(jax.ShapeDtypeStruct((B_pad, HIDDEN), cdt),
                   jax.ShapeDtypeStruct((num_tiles, 1, HIDDEN), jnp.float32),
                   jax.ShapeDtypeStruct((num_tiles, 1, HIDDEN), jnp.float32)),
        grid=(num_tiles,),
        in_specs=[pl.BlockSpec((tile, nz), lambda i: (i, 0)),
                  resident((nz, HIDDEN)), resident((1, HIDDEN)),
                  resident((HIDDEN, HIDDEN)), resident((1, HIDDEN)),
                  resident((HIDDEN, HIDDEN)), resident((1, HIDDEN))],
        out_specs=(pl.BlockSpec((tile, HIDDEN), lambda i: (i, 0)),
                   pl.BlockSpec((1, 1, HIDDEN), lambda i: (i, 0, 0)),
                   pl.BlockSpec((1, 1, HIDDEN), lambda i: (i, 0, 0))),
        compiler_params=pltpu.CompilerParams(
            dimension_semantics=("parallel",)),     # independent tiles (v7x dual-TC)
        cost_estimate=pl.CostEstimate(flops=flops1, transcendentals=0,
                                      bytes_accessed=bytes1),
    )(x_c, w1c, b1, w2c, b2, w3c, b3)

    # ---------------- Stage 2 ----------------
    k2 = functools.partial(_stage2_kernel, inv_b=1.0 / B)   # real B, not padded
    flops2 = 2 * B_pad * HIDDEN * nx_pad + 6 * B_pad * HIDDEN
    bytes2 = (B_pad * HIDDEN * itm + 2 * num_tiles * HIDDEN * 4 + 2 * HIDDEN * 4
              + HIDDEN * nx_pad * itm + nx_pad * 4 + B_pad * nx_pad * 4)

    out = pl.pallas_call(
        k2,
        out_shape=jax.ShapeDtypeStruct((B_pad, nx_pad), jnp.float32),
        grid=(num_tiles,),
        in_specs=[pl.BlockSpec((tile, HIDDEN), lambda i: (i, 0)),
                  resident((num_tiles, 1, HIDDEN)),
                  resident((num_tiles, 1, HIDDEN)),
                  resident((1, HIDDEN)), resident((1, HIDDEN)),
                  resident((HIDDEN, nx_pad)), resident((1, nx_pad))],
        out_specs=pl.BlockSpec((tile, nx_pad), lambda i: (i, 0)),
        compiler_params=pltpu.CompilerParams(
            dimension_semantics=("parallel",)),
        cost_estimate=pl.CostEstimate(flops=flops2, transcendentals=0,
                                      bytes_accessed=bytes2),
    )(h3, psum, psq, gamma, beta, w4c, b4c)

    # TODO(synk): BatchNorm1d running_mean/running_var buffer updates (a
    # training-time side effect, not part of the forward output) are not emitted.
    return out[:B, :nx]


def init_params(key, nz, nx, hidden=HIDDEN):
    """Deterministic init mimicking PyTorch nn.Linear default U(-1/sqrt(in), 1/sqrt(in))."""
    ks = jax.random.split(key, 8)

    def linear(kw, kb, fan_in, fan_out):
        bound = 1.0 / math.sqrt(fan_in)
        # stored as (in, out) = transpose of PyTorch's (out, in)
        w = jax.random.uniform(kw, (fan_in, fan_out), jnp.float32, -bound, bound)
        b = jax.random.uniform(kb, (1, fan_out), jnp.float32, -bound, bound)
        return w, b

    w1, b1 = linear(ks[0], ks[1], nz, hidden)
    w2, b2 = linear(ks[2], ks[3], hidden, hidden)
    w3, b3 = linear(ks[4], ks[5], hidden, hidden)
    w4, b4 = linear(ks[6], ks[7], hidden, nx)
    gamma = jnp.ones((1, hidden), jnp.float32)   # BatchNorm1d weight default
    beta = jnp.zeros((1, hidden), jnp.float32)   # BatchNorm1d bias default
    return (w1, b1, w2, b2, w3, b3, gamma, beta, w4, b4)


def reference_forward(x, params):
    (w1, b1, w2, b2, w3, b3, gamma, beta, w4, b4) = params

    def lrelu(t):
        return jnp.where(t > 0, t, 0.2 * t)

    h1 = lrelu(x @ w1 + b1)
    h2 = lrelu(h1 @ w2 + b2)
    h3 = h2 @ w3 + b3
    mean = jnp.mean(h3, axis=0, keepdims=True)
    var = jnp.mean((h3 - mean) ** 2, axis=0, keepdims=True)
    h3n = (h3 - mean) * jax.lax.rsqrt(var + BN_EPS) * gamma + beta
    h3n = lrelu(h3n)
    return h3n @ w4 + b4


if __name__ == "__main__":
    key = jax.random.PRNGKey(0)
    k_x, k_p, k_x2 = jax.random.split(key, 3)

    B, nz, nx = 256, 16, 16            # small demo shapes; hidden fixed at 256 by module
    x = jax.random.normal(k_x, (B, nz), jnp.float32)
    params = init_params(k_p, nz, nx)

    fwd_bf16 = jax.jit(functools.partial(generator_forward, tile_b=512, use_bf16=True))
    fwd_f32 = jax.jit(functools.partial(generator_forward, tile_b=128, use_bf16=False))

    out_bf16 = jax.block_until_ready(fwd_bf16(x, params))
    out_f32 = jax.block_until_ready(fwd_f32(x, params))
    ref = reference_forward(x, params)

    assert out_bf16.shape == (B, nx)
    assert jnp.allclose(out_f32, ref, atol=1e-3, rtol=1e-3), "f32 path mismatch"
    assert jnp.allclose(out_bf16, ref, atol=5e-2, rtol=5e-2), "bf16 path mismatch"

    # Ragged batch exercises pad-to-tile + masked BN statistics (multi-tile).
    B2 = 200
    x2 = jax.random.normal(k_x2, (B2, nz), jnp.float32)
    out2 = jax.block_until_ready(
        jax.jit(functools.partial(generator_forward, tile_b=64, use_bf16=False))(x2, params))
    ref2 = reference_forward(x2, params)
    assert out2.shape == (B2, nx)
    assert jnp.allclose(out2, ref2, atol=1e-3, rtol=1e-3), "ragged path mismatch"

    print("KERNEL_OK")
</pallas_src>

<mosaic_0001>
module attributes {stable_mosaic.version = 11 : i64} {
  func.func @_stage2_kernel(%arg0: i32, %arg1: memref<256x256xbf16, #tpu.memory_space<vmem>>, %arg2: memref<1x1x256xf32, #tpu.memory_space<vmem>>, %arg3: memref<1x1x256xf32, #tpu.memory_space<vmem>>, %arg4: memref<1x256xf32, #tpu.memory_space<vmem>>, %arg5: memref<1x256xf32, #tpu.memory_space<vmem>>, %arg6: memref<256x128xbf16, #tpu.memory_space<vmem>>, %arg7: memref<1x128xf32, #tpu.memory_space<vmem>>, %arg8: memref<256x128xf32, #tpu.memory_space<vmem>>) attributes {dimension_semantics = [#tpu.dimension_semantics<parallel>], iteration_bounds = array<i64: 1>, scalar_prefetch = 0 : i64, scratch_operands = 0 : i64, tpu.core_type = #tpu.core_type<tc>, window_params = [{transform_indices = @transform_0, window_bounds = array<i64: 256, 256>}, {pipeline_mode = #tpu.pipeline_mode<synchronous>, transform_indices = @transform_1, window_bounds = array<i64: 1, 1, 256>}, {pipeline_mode = #tpu.pipeline_mode<synchronous>, transform_indices = @transform_2, window_bounds = array<i64: 1, 1, 256>}, {pipeline_mode = #tpu.pipeline_mode<synchronous>, transform_indices = @transform_3, window_bounds = array<i64: 1, 256>}, {pipeline_mode = #tpu.pipeline_mode<synchronous>, transform_indices = @transform_4, window_bounds = array<i64: 1, 256>}, {pipeline_mode = #tpu.pipeline_mode<synchronous>, transform_indices = @transform_5, window_bounds = array<i64: 256, 128>}, {pipeline_mode = #tpu.pipeline_mode<synchronous>, transform_indices = @transform_6, window_bounds = array<i64: 1, 128>}, {transform_indices = @transform_7, window_bounds = array<i64: 256, 128>}]} {
    %c0 = arith.constant 0 : index
    %c0_0 = arith.constant 0 : index
    %c0_1 = arith.constant 0 : index
    %0 = vector.load %arg2[%c0, %c0_0, %c0_1] : memref<1x1x256xf32, #tpu.memory_space<vmem>>, vector<1x1x256xf32>
    %cst = arith.constant dense<0.000000e+00> : vector<1x256xf32>
    %1 = vector.multi_reduction <add>, %0, %cst [0] : vector<1x1x256xf32> to vector<1x256xf32>
    %c0_2 = arith.constant 0 : index
    %c0_3 = arith.constant 0 : index
    %c0_4 = arith.constant 0 : index
    %2 = vector.load %arg3[%c0_2, %c0_3, %c0_4] : memref<1x1x256xf32, #tpu.memory_space<vmem>>, vector<1x1x256xf32>
    %cst_5 = arith.constant dense<0.000000e+00> : vector<1x256xf32>
    %3 = vector.multi_reduction <add>, %2, %cst_5 [0] : vector<1x1x256xf32> to vector<1x256xf32>
    %cst_6 = arith.constant 3.906250e-03 : f32
    %4 = vector.broadcast %cst_6 : f32 to vector<1x256xf32>
    %5 = arith.mulf %1, %4 : vector<1x256xf32>
    %cst_7 = arith.constant 3.906250e-03 : f32
    %6 = vector.broadcast %cst_7 : f32 to vector<1x256xf32>
    %7 = arith.mulf %3, %6 : vector<1x256xf32>
    %8 = arith.mulf %5, %5 : vector<1x256xf32>
    %9 = arith.subf %7, %8 : vector<1x256xf32>
    %cst_8 = arith.constant 0.000000e+00 : f32
    %10 = vector.broadcast %cst_8 : f32 to vector<1x256xf32>
    %11 = arith.maximumf %9, %10 : vector<1x256xf32>
    %cst_9 = arith.constant 9.99999974E-6 : f32
    %12 = vector.broadcast %cst_9 : f32 to vector<1x256xf32>
    %13 = arith.addf %11, %12 : vector<1x256xf32>
    %14 = math.rsqrt %13 : vector<1x256xf32>
    %c0_10 = arith.constant 0 : index
    %c0_11 = arith.constant 0 : index
    %15 = vector.load %arg4[%c0_10, %c0_11] : memref<1x256xf32, #tpu.memory_space<vmem>>, vector<1x256xf32>
    %16 = arith.mulf %15, %14 : vector<1x256xf32>
    %c0_12 = arith.constant 0 : index
    %c0_13 = arith.constant 0 : index
    %17 = vector.load %arg5[%c0_12, %c0_13] : memref<1x256xf32, #tpu.memory_space<vmem>>, vector<1x256xf32>
    %18 = arith.mulf %5, %16 : vector<1x256xf32>
    %19 = arith.subf %17, %18 : vector<1x256xf32>
    %c0_14 = arith.constant 0 : index
    %c0_15 = arith.constant 0 : index
    %20 = vector.load %arg1[%c0_14, %c0_15] : memref<256x256xbf16, #tpu.memory_space<vmem>>, vector<256x256xbf16>
    %21 = arith.extf %20 : vector<256x256xbf16> to vector<256x256xf32>
    %22 = vector.broadcast %16 : vector<1x256xf32> to vector<256x256xf32>
    %23 = arith.mulf %21, %22 : vector<256x256xf32>
    %24 = vector.broadcast %19 : vector<1x256xf32> to vector<256x256xf32>
    %25 = arith.addf %23, %24 : vector<256x256xf32>
    %cst_16 = arith.constant 0.000000e+00 : f32
    %26 = vector.broadcast %cst_16 : f32 to vector<256x256xf32>
    %27 = arith.cmpf ogt, %25, %26 : vector<256x256xf32>
    %cst_17 = arith.constant 2.000000e-01 : f32
    %28 = vector.broadcast %cst_17 : f32 to vector<256x256xf32>
    %29 = arith.mulf %28, %25 : vector<256x256xf32>
    %30 = arith.select %27, %25, %29 : vector<256x256xi1>, vector<256x256xf32>
    %31 = arith.truncf %30 : vector<256x256xf32> to vector<256x256xbf16>
    %c0_18 = arith.constant 0 : index
    %c0_19 = arith.constant 0 : index
    %32 = vector.load %arg6[%c0_18, %c0_19] : memref<256x128xbf16, #tpu.memory_space<vmem>>, vector<256x128xbf16>
    %cst_20 = arith.constant dense<0.000000e+00> : vector<256x128xf32>
    %33 = tpu.matmul %31, %32, %cst_20 {dimension_numbers = #tpu.dot_dimension_numbers<[1], [0], [0], [1], [0, 0, 1, 1], [], []>} : vector<256x256xbf16>, vector<256x128xbf16>, vector<256x128xf32> -> vector<256x128xf32>
    %c0_21 = arith.constant 0 : index
    %c0_22 = arith.constant 0 : index
    %34 = vector.load %arg7[%c0_21, %c0_22] : memref<1x128xf32, #tpu.memory_space<vmem>>, vector<1x128xf32>
    %35 = vector.broadcast %34 : vector<1x128xf32> to vector<256x128xf32>
    %36 = arith.addf %33, %35 : vector<256x128xf32>
    %c0_23 = arith.constant 0 : index
    %c0_24 = arith.constant 0 : index
    %37 = vector.load %arg8[%c0_23, %c0_24] : memref<256x128xf32, #tpu.memory_space<vmem>>, vector<256x128xf32>
    tpu.vector_store %arg8[%c0_23, %c0_24], %36 {strides = array<i32>} : memref<256x128xf32, #tpu.memory_space<vmem>>, vector<256x128xf32>,
    return
  }
  func.func @transform_0(%arg0: i32) -> (i32, i32) {
    %c0_i32 = arith.constant 0 : i32
    %c0_i32_0 = arith.constant 0 : i32
    return %arg0, %c0_i32 : i32, i32
  }
  func.func @transform_1(%arg0: i32) -> (i32, i32, i32) {
    %c0_i32 = arith.constant 0 : i32
    %c0_i32_0 = arith.constant 0 : i32
    %c0_i32_1 = arith.constant 0 : i32
    %c0_i32_2 = arith.constant 0 : i32
    return %c0_i32, %c0_i32_0, %c0_i32_1 : i32, i32, i32
  }
  func.func @transform_2(%arg0: i32) -> (i32, i32, i32) {
    %c0_i32 = arith.constant 0 : i32
    %c0_i32_0 = arith.constant 0 : i32
    %c0_i32_1 = arith.constant 0 : i32
    %c0_i32_2 = arith.constant 0 : i32
    return %c0_i32, %c0_i32_0, %c0_i32_1 : i32, i32, i32
  }
  func.func @transform_3(%arg0: i32) -> (i32, i32) {
    %c0_i32 = arith.constant 0 : i32
    %c0_i32_0 = arith.constant 0 : i32
    %c0_i32_1 = arith.constant 0 : i32
    return %c0_i32, %c0_i32_0 : i32, i32
  }
  func.func @transform_4(%arg0: i32) -> (i32, i32) {
    %c0_i32 = arith.constant 0 : i32
    %c0_i32_0 = arith.constant 0 : i32
    %c0_i32_1 = arith.constant 0 : i32
    return %c0_i32, %c0_i32_0 : i32, i32
  }
  func.func @transform_5(%arg0: i32) -> (i32, i32) {
    %c0_i32 = arith.constant 0 : i32
    %c0_i32_0 = arith.constant 0 : i32
    %c0_i32_1 = arith.constant 0 : i32
    return %c0_i32, %c0_i32_0 : i32, i32
  }
  func.func @transform_6(%arg0: i32) -> (i32, i32) {
    %c0_i32 = arith.constant 0 : i32
    %c0_i32_0 = arith.constant 0 : i32
    %c0_i32_1 = arith.constant 0 : i32
    return %c0_i32, %c0_i32_0 : i32, i32
  }
  func.func @transform_7(%arg0: i32) -> (i32, i32) {
    %c0_i32 = arith.constant 0 : i32
    %c0_i32_0 = arith.constant 0 : i32
    return %arg0, %c0_i32 : i32, i32
  }
}

module attributes {stable_mosaic.version = 11 : i64} {
  func.func @_stage1_kernel(%arg0: i32, %arg1: memref<256x16xbf16, #tpu.memory_space<vmem>>, %arg2: memref<16x256xbf16, #tpu.memory_space<vmem>>, %arg3: memref<1x256xf32, #tpu.memory_space<vmem>>, %arg4: memref<256x256xbf16, #tpu.memory_space<vmem>>, %arg5: memref<1x256xf32, #tpu.memory_space<vmem>>, %arg6: memref<256x256xbf16, #tpu.memory_space<vmem>>, %arg7: memref<1x256xf32, #tpu.memory_space<vmem>>, %arg8: memref<256x256xbf16, #tpu.memory_space<vmem>>, %arg9: memref<1x1x256xf32, #tpu.memory_space<vmem>>, %arg10: memref<1x1x256xf32, #tpu.memory_space<vmem>>) attributes {dimension_semantics = [#tpu.dimension_semantics<parallel>], iteration_bounds = array<i64: 1>, scalar_prefetch = 0 : i64, scratch_operands = 0 : i64, tpu.core_type = #tpu.core_type<tc>, window_params = [{transform_indices = @transform_0, window_bounds = array<i64: 256, 16>}, {pipeline_mode = #tpu.pipeline_mode<synchronous>, transform_indices = @transform_1, window_bounds = array<i64: 16, 256>}, {pipeline_mode = #tpu.pipeline_mode<synchronous>, transform_indices = @transform_2, window_bounds = array<i64: 1, 256>}, {pipeline_mode = #tpu.pipeline_mode<synchronous>, transform_indices = @transform_3, window_bounds = array<i64: 256, 256>}, {pipeline_mode = #tpu.pipeline_mode<synchronous>, transform_indices = @transform_4, window_bounds = array<i64: 1, 256>}, {pipeline_mode = #tpu.pipeline_mode<synchronous>, transform_indices = @transform_5, window_bounds = array<i64: 256, 256>}, {pipeline_mode = #tpu.pipeline_mode<synchronous>, transform_indices = @transform_6, window_bounds = array<i64: 1, 256>}, {transform_indices = @transform_7, window_bounds = array<i64: 256, 256>}, {transform_indices = @transform_8, window_bounds = array<i64: 1, 1, 256>}, {transform_indices = @transform_9, window_bounds = array<i64: 1, 1, 256>}]} {
    %c0 = arith.constant 0 : index
    %c0_0 = arith.constant 0 : index
    %0 = vector.load %arg1[%c0, %c0_0] : memref<256x16xbf16, #tpu.memory_space<vmem>>, vector<256x16xbf16>
    %c0_1 = arith.constant 0 : index
    %c0_2 = arith.constant 0 : index
    %1 = vector.load %arg2[%c0_1, %c0_2] : memref<16x256xbf16, #tpu.memory_space<vmem>>, vector<16x256xbf16>
    %cst = arith.constant dense<0.000000e+00> : vector<256x256xf32>
    %2 = tpu.matmul %0, %1, %cst {dimension_numbers = #tpu.dot_dimension_numbers<[1], [0], [0], [1], [0, 0, 1, 1], [], []>} : vector<256x16xbf16>, vector<16x256xbf16>, vector<256x256xf32> -> vector<256x256xf32>
    %c0_3 = arith.constant 0 : index
    %c0_4 = arith.constant 0 : index
    %3 = vector.load %arg3[%c0_3, %c0_4] : memref<1x256xf32, #tpu.memory_space<vmem>>, vector<1x256xf32>
    %4 = vector.broadcast %3 : vector<1x256xf32> to vector<256x256xf32>
    %5 = arith.addf %2, %4 : vector<256x256xf32>
    %cst_5 = arith.constant 0.000000e+00 : f32
    %6 = vector.broadcast %cst_5 : f32 to vector<256x256xf32>
    %7 = arith.cmpf ogt, %5, %6 : vector<256x256xf32>
    %cst_6 = arith.constant 2.000000e-01 : f32
    %8 = vector.broadcast %cst_6 : f32 to vector<256x256xf32>
    %9 = arith.mulf %8, %5 : vector<256x256xf32>
    %10 = arith.select %7, %5, %9 : vector<256x256xi1>, vector<256x256xf32>
    %11 = arith.truncf %10 : vector<256x256xf32> to vector<256x256xbf16>
    %c0_7 = arith.constant 0 : index
    %c0_8 = arith.constant 0 : index
    %12 = vector.load %arg4[%c0_7, %c0_8] : memref<256x256xbf16, #tpu.memory_space<vmem>>, vector<256x256xbf16>
    %cst_9 = arith.constant dense<0.000000e+00> : vector<256x256xf32>
    %13 = tpu.matmul %11, %12, %cst_9 {dimension_numbers = #tpu.dot_dimension_numbers<[1], [0], [0], [1], [0, 0, 1, 1], [], []>} : vector<256x256xbf16>, vector<256x256xbf16>, vector<256x256xf32> -> vector<256x256xf32>
    %c0_10 = arith.constant 0 : index
    %c0_11 = arith.constant 0 : index
    %14 = vector.load %arg5[%c0_10, %c0_11] : memref<1x256xf32, #tpu.memory_space<vmem>>, vector<1x256xf32>
    %15 = vector.broadcast %14 : vector<1x256xf32> to vector<256x256xf32>
    %16 = arith.addf %13, %15 : vector<256x256xf32>
    %cst_12 = arith.constant 0.000000e+00 : f32
    %17 = vector.broadcast %cst_12 : f32 to vector<256x256xf32>
    %18 = arith.cmpf ogt, %16, %17 : vector<256x256xf32>
    %cst_13 = arith.constant 2.000000e-01 : f32
    %19 = vector.broadcast %cst_13 : f32 to vector<256x256xf32>
    %20 = arith.mulf %19, %16 : vector<256x256xf32>
    %21 = arith.select %18, %16, %20 : vector<256x256xi1>, vector<256x256xf32>
    %22 = arith.truncf %21 : vector<256x256xf32> to vector<256x256xbf16>
    %c0_14 = arith.constant 0 : index
    %c0_15 = arith.constant 0 : index
    %23 = vector.load %arg6[%c0_14, %c0_15] : memref<256x256xbf16, #tpu.memory_space<vmem>>, vector<256x256xbf16>
    %cst_16 = arith.constant dense<0.000000e+00> : vector<256x256xf32>
    %24 = tpu.matmul %22, %23, %cst_16 {dimension_numbers = #tpu.dot_dimension_numbers<[1], [0], [0], [1], [0, 0, 1, 1], [], []>} : vector<256x256xbf16>, vector<256x256xbf16>, vector<256x256xf32> -> vector<256x256xf32>
    %c0_17 = arith.constant 0 : index
    %c0_18 = arith.constant 0 : index
    %25 = vector.load %arg7[%c0_17, %c0_18] : memref<1x256xf32, #tpu.memory_space<vmem>>, vector<1x256xf32>
    %26 = vector.broadcast %25 : vector<1x256xf32> to vector<256x256xf32>
    %27 = arith.addf %24, %26 : vector<256x256xf32>
    %28 = arith.truncf %27 : vector<256x256xf32> to vector<256x256xbf16>
    %c0_19 = arith.constant 0 : index
    %c0_20 = arith.constant 0 : index
    %29 = vector.load %arg8[%c0_19, %c0_20] : memref<256x256xbf16, #tpu.memory_space<vmem>>, vector<256x256xbf16>
    tpu.vector_store %arg8[%c0_19, %c0_20], %28 {strides = array<i32>} : memref<256x256xbf16, #tpu.memory_space<vmem>>, vector<256x256xbf16>,
    %cst_21 = arith.constant dense<0.000000e+00> : vector<256xf32>
    %30 = vector.multi_reduction <add>, %27, %cst_21 [0] : vector<256x256xf32> to vector<256xf32>
    %31 = vector.shape_cast %30 : vector<256xf32> to vector<1x256xf32>
    %32 = vector.shape_cast %31 : vector<1x256xf32> to vector<1x1x256xf32>
    %c0_22 = arith.constant 0 : index
    %c0_23 = arith.constant 0 : index
    %c0_24 = arith.constant 0 : index
    %33 = vector.load %arg9[%c0_22, %c0_23, %c0_24] : memref<1x1x256xf32, #tpu.memory_space<vmem>>, vector<1x1x256xf32>
    tpu.vector_store %arg9[%c0_22, %c0_23, %c0_24], %32 {strides = array<i32>} : memref<1x1x256xf32, #tpu.memory_space<vmem>>, vector<1x1x256xf32>,
    %34 = arith.mulf %27, %27 : vector<256x256xf32>
    %cst_25 = arith.constant dense<0.000000e+00> : vector<256xf32>
    %35 = vector.multi_reduction <add>, %34, %cst_25 [0] : vector<256x256xf32> to vector<256xf32>
    %36 = vector.shape_cast %35 : vector<256xf32> to vector<1x256xf32>
    %37 = vector.shape_cast %36 : vector<1x256xf32> to vector<1x1x256xf32>
    %c0_26 = arith.constant 0 : index
    %c0_27 = arith.constant 0 : index
    %c0_28 = arith.constant 0 : index
    %38 = vector.load %arg10[%c0_26, %c0_27, %c0_28] : memref<1x1x256xf32, #tpu.memory_space<vmem>>, vector<1x1x256xf32>
    tpu.vector_store %arg10[%c0_26, %c0_27, %c0_28], %37 {strides = array<i32>} : memref<1x1x256xf32, #tpu.memory_space<vmem>>, vector<1x1x256xf32>,
    return
  }
  func.func @transform_0(%arg0: i32) -> (i32, i32) {
    %c0_i32 = arith.constant 0 : i32
    %c0_i32_0 = arith.constant 0 : i32
    return %arg0, %c0_i32 : i32, i32
  }
  func.func @transform_1(%arg0: i32) -> (i32, i32) {
    %c0_i32 = arith.constant 0 : i32
    %c0_i32_0 = arith.constant 0 : i32
    %c0_i32_1 = arith.constant 0 : i32
    return %c0_i32, %c0_i32_0 : i32, i32
  }
  func.func @transform_2(%arg0: i32) -> (i32, i32) {
    %c0_i32 = arith.constant 0 : i32
    %c0_i32_0 = arith.constant 0 : i32
    %c0_i32_1 = arith.constant 0 : i32
    return %c0_i32, %c0_i32_0 : i32, i32
  }
  func.func @transform_3(%arg0: i32) -> (i32, i32) {
    %c0_i32 = arith.constant 0 : i32
    %c0_i32_0 = arith.constant 0 : i32
    %c0_i32_1 = arith.constant 0 : i32
    return %c0_i32, %c0_i32_0 : i32, i32
  }
  func.func @transform_4(%arg0: i32) -> (i32, i32) {
    %c0_i32 = arith.constant 0 : i32
    %c0_i32_0 = arith.constant 0 : i32
    %c0_i32_1 = arith.constant 0 : i32
    return %c0_i32, %c0_i32_0 : i32, i32
  }
  func.func @transform_5(%arg0: i32) -> (i32, i32) {
    %c0_i32 = arith.constant 0 : i32
    %c0_i32_0 = arith.constant 0 : i32
    %c0_i32_1 = arith.constant 0 : i32
    return %c0_i32, %c0_i32_0 : i32, i32
  }
  func.func @transform_6(%arg0: i32) -> (i32, i32) {
    %c0_i32 = arith.constant 0 : i32
    %c0_i32_0 = arith.constant 0 : i32
    %c0_i32_1 = arith.constant 0 : i32
    return %c0_i32, %c0_i32_0 : i32, i32
  }
  func.func @transform_7(%arg0: i32) -> (i32, i32) {
    %c0_i32 = arith.constant 0 : i32
    %c0_i32_0 = arith.constant 0 : i32
    return %arg0, %c0_i32 : i32, i32
  }
  func.func @transform_8(%arg0: i32) -> (i32, i32, i32) {
    %c0_i32 = arith.constant 0 : i32
    %c0_i32_0 = arith.constant 0 : i32
    %c0_i32_1 = arith.constant 0 : i32
    return %arg0, %c0_i32, %c0_i32_0 : i32, i32, i32
  }
  func.func @transform_9(%arg0: i32) -> (i32, i32, i32) {
    %c0_i32 = arith.constant 0 : i32
    %c0_i32_0 = arith.constant 0 : i32
    %c0_i32_1 = arith.constant 0 : i32
    return %arg0, %c0_i32, %c0_i32_0 : i32, i32, i32
  }
}

</mosaic_0001>

<llo_original>
// kernel: generator_forward.3
$region0: #{generator_forward.3}
  #allocation0 [shape = 'u32[]', space=smem, size = 0x4, offset = 0x4, fixed_abs, tag = 'smem constant byte address 0x4 - core index']
  #allocation1 [shape = 'u32[72,128]{1,0:T(1,128)}', space=vmem, size = 0x9000, scoped, tag = 'internal scratch']
  %s0 = inlined_call_operand.vmem [shape: bf16[256,256], index: 0, kind: input, shape index: {}]
  %s1 = inlined_call_operand.vmem [shape: f32[1,1,256], index: 1, kind: input, shape index: {}]
  %s2 = inlined_call_operand.vmem [shape: f32[1,1,256], index: 2, kind: input, shape index: {}]
  %s3 = inlined_call_operand.vmem [shape: f32[1,256], index: 3, kind: input, shape index: {}]
  %s4 = inlined_call_operand.vmem [shape: f32[1,256], index: 4, kind: input, shape index: {}]
  %s5 = inlined_call_operand.vmem [shape: bf16[256,128], index: 5, kind: input, shape index: {}]
  %s6 = inlined_call_operand.vmem [shape: f32[1,128], index: 6, kind: input, shape index: {}]
  %s7 = inlined_call_operand.vmem [shape: f32[256,128], index: 7, kind: output, shape index: {}]
  %s8 = sld [smem:[#allocation0]]
  $region38: #{generator_forward.3} parent=0
    _
  %s10 = ssub.s32 1, %s8
  %s11 = scalar_select 0, %s10, %s8
  // Predicated region
  $region2: #{generator_forward.3} parent=0 // pred_check
    _
  $region3: #{generator_forward.3} parent=0 // pred_check_branch
    %13 = sbr.rel (0) target = $region5
  $region4: #{generator_forward.3} parent=0 // pred_region
    _
  $region5: #{generator_forward.3} parent=0 // pred_fallthru
    _
  // Predicated region
  $region6: #{generator_forward.3} parent=0 // pred_check
    _
  $region7: #{generator_forward.3} parent=0 // pred_check_branch
    %15 = sbr.rel (0) target = $region9
  $region8: #{generator_forward.3} parent=0 // pred_region
    _
  $region9: #{generator_forward.3} parent=0 // pred_fallthru
    _
  // Predicated region
  $region10: #{generator_forward.3} parent=0 // pred_check
    _
  $region11: #{generator_forward.3} parent=0 // pred_check_branch
    %17 = sbr.rel (0) target = $region13
  $region12: #{generator_forward.3} parent=0 // pred_region
    _
  $region13: #{generator_forward.3} parent=0 // pred_fallthru
    _
  // Predicated region
  $region14: #{generator_forward.3} parent=0 // pred_check
    _
  $region15: #{generator_forward.3} parent=0 // pred_check_branch
    %19 = sbr.rel (0) target = $region17
  $region16: #{generator_forward.3} parent=0 // pred_region
    _
  $region17: #{generator_forward.3} parent=0 // pred_fallthru
    _
  // Predicated region
  $region18: #{generator_forward.3} parent=0 // pred_check
    _
  $region19: #{generator_forward.3} parent=0 // pred_check_branch
    %21 = sbr.rel (0) target = $region21
  $region20: #{generator_forward.3} parent=0 // pred_region
    _
  $region21: #{generator_forward.3} parent=0 // pred_fallthru
    _
  // Predicated region
  $region22: #{generator_forward.3} parent=0 // pred_check
    _
  $region23: #{generator_forward.3} parent=0 // pred_check_branch
    %23 = sbr.rel (0) target = $region25
  $region24: #{generator_forward.3} parent=0 // pred_region
    _
  $region25: #{generator_forward.3} parent=0 // pred_fallthru
    _
  // Predicated region
  $region26: #{generator_forward.3} parent=0 // pred_check
    _
  $region27: #{generator_forward.3} parent=0 // pred_check_branch
    %25 = sbr.rel (0) target = $region29
  $region28: #{generator_forward.3} parent=0 // pred_region
    _
  $region29: #{generator_forward.3} parent=0 // pred_fallthru
    _
  %v26 = vld [vmem:[%s1] sm:$0x3]
  %v27 = vadd.f32 %v26, 0.0
  %v28 = vld [vmem:[%s2] sm:$0x3]
  %v29 = vadd.f32 %v28, 0.0
  %v30 = vmul.f32 %v27, 0.00390625
  %v31 = vmul.f32 %v29, 0.00390625
  %v32 = vmul.f32 %v30, %v30
  %v33 = vsub.f32 %v31, %v32
  %v34 = vmax.f32 %v33, 0.0
  %v35 = vadd.f32 %v34, 1e-05
  %v36 = vrsqrt.pop %v35
  %v37 = vmul.f32 %v36, %v35
  %v38 = vmul.f32 %v37, %v36
  %v39 = vmul.f32 0.5, %v38
  %v40 = vsub.f32 1.5, %v39
  %v41 = vmul.f32 %v36, %v40
  %vm42 = vweird.f32 %v35
  %vm43 = vweird.f32 %v36
  %vm44 = vmor %vm42, %vm43
  %v45 = vsel %vm44, %v36, %v41
  %v46 = vld [vmem:[%s3] sm:$0x3]
  %v47 = vmul.f32 %v46, %v45
  %v48 = vld [vmem:[%s4] sm:$0x3]
  %v49 = vmul.f32 %v30, %v47
  %v50 = vsub.f32 %v48, %v49
  %v51 = vld [vmem:[%s0] sm:$0xff]
  %v52 = vld [vmem:[%s0 + $0x8] sm:$0xff]
  %v53 = vld [vmem:[%s0 + $0x10] sm:$0xff]
  %v54 = vld [vmem:[%s0 + $0x18] sm:$0xff]
  %v55 = vld [vmem:[%s0 + $0x20] sm:$0xff]
  %v56 = vld [vmem:[%s0 + $0x28] sm:$0xff]
  %v57 = vld [vmem:[%s0 + $0x30] sm:$0xff]
  %v58 = vld [vmem:[%s0 + $0x38] sm:$0xff]
  %v59 = vld [vmem:[%s0 + $0x40] sm:$0xff]
  %v60 = vld [vmem:[%s0 + $0x48] sm:$0xff]
  %v61 = vld [vmem:[%s0 + $0x50] sm:$0xff]
  %v62 = vld [vmem:[%s0 + $0x58] sm:$0xff]
  %v63 = vld [vmem:[%s0 + $0x60] sm:$0xff]
  %v64 = vld [vmem:[%s0 + $0x68] sm:$0xff]
  %v65 = vld [vmem:[%s0 + $0x70] sm:$0xff]
  %v66 = vld [vmem:[%s0 + $0x78] sm:$0xff]
  %v67 = vld [vmem:[%s0 + $0x80] sm:$0xff]
  %v68 = vld [vmem:[%s0 + $0x88] sm:$0xff]
  %v69 = vld [vmem:[%s0 + $0x90] sm:$0xff]
  %v70 = vld [vmem:[%s0 + $0x98] sm:$0xff]
  %v71 = vld [vmem:[%s0 + $0xa0] sm:$0xff]
  %v72 = vld [vmem:[%s0 + $0xa8] sm:$0xff]
  %v73 = vld [vmem:[%s0 + $0xb0] sm:$0xff]
  %v74 = vld [vmem:[%s0 + $0xb8] sm:$0xff]
  %v75 = vld [vmem:[%s0 + $0xc0] sm:$0xff]
  %v76 = vld [vmem:[%s0 + $0xc8] sm:$0xff]
  %v77 = vld [vmem:[%s0 + $0xd0] sm:$0xff]
  %v78 = vld [vmem:[%s0 + $0xd8] sm:$0xff]
  %v79 = vld [vmem:[%s0 + $0xe0] sm:$0xff]
  %v80 = vld [vmem:[%s0 + $0xe8] sm:$0xff]
  %v81 = vld [vmem:[%s0 + $0xf0] sm:$0xff]
  %v82 = vld [vmem:[%s0 + $0xf8] sm:$0xff]
  %v83 = vunpack.c.l.bf16 %v51
  %v84 = vunpack.c.h.bf16 %v51
  %v85 = vunpack.c.l.bf16 %v52
  %v86 = vunpack.c.h.bf16 %v52
  %v87 = vunpack.c.l.bf16 %v53
  %v88 = vunpack.c.h.bf16 %v53
  %v89 = vunpack.c.l.bf16 %v54
  %v90 = vunpack.c.h.bf16 %v54
  %v91 = vunpack.c.l.bf16 %v55
  %v92 = vunpack.c.h.bf16 %v55
  %v93 = vunpack.c.l.bf16 %v56
  %v94 = vunpack.c.h.bf16 %v56
  %v95 = vunpack.c.l.bf16 %v57
  %v96 = vunpack.c.h.bf16 %v57
  %v97 = vunpack.c.l.bf16 %v58
  %v98 = vunpack.c.h.bf16 %v58
  %v99 = vunpack.c.l.bf16 %v59
  %v100 = vunpack.c.h.bf16 %v59
  %v101 = vunpack.c.l.bf16 %v60
  %v102 = vunpack.c.h.bf16 %v60
  %v103 = vunpack.c.l.bf16 %v61
  %v104 = vunpack.c.h.bf16 %v61
  %v105 = vunpack.c.l.bf16 %v62
  %v106 = vunpack.c.h.bf16 %v62
  %v107 = vunpack.c.l.bf16 %v63
  %v108 = vunpack.c.h.bf16 %v63
  %v109 = vunpack.c.l.bf16 %v64
  %v110 = vunpack.c.h.bf16 %v64
  %v111 = vunpack.c.l.bf16 %v65
  %v112 = vunpack.c.h.bf16 %v65
  %v113 = vunpack.c.l.bf16 %v66
  %v114 = vunpack.c.h.bf16 %v66
  %v115 = vunpack.c.l.bf16 %v67
  %v116 = vunpack.c.h.bf16 %v67
  %v117 = vunpack.c.l.bf16 %v68
  %v118 = vunpack.c.h.bf16 %v68
  %v119 = vunpack.c.l.bf16 %v69
  %v120 = vunpack.c.h.bf16 %v69
  %v121 = vunpack.c.l.bf16 %v70
  %v122 = vunpack.c.h.bf16 %v70
  %v123 = vunpack.c.l.bf16 %v71
  %v124 = vunpack.c.h.bf16 %v71
  %v125 = vunpack.c.l.bf16 %v72
  %v126 = vunpack.c.h.bf16 %v72
  %v127 = vunpack.c.l.bf16 %v73
  %v128 = vunpack.c.h.bf16 %v73
  %v129 = vunpack.c.l.bf16 %v74
  %v130 = vunpack.c.h.bf16 %v74
  %v131 = vunpack.c.l.bf16 %v75
  %v132 = vunpack.c.h.bf16 %v75
  %v133 = vunpack.c.l.bf16 %v76
  %v134 = vunpack.c.h.bf16 %v76
  %v135 = vunpack.c.l.bf16 %v77
  %v136 = vunpack.c.h.bf16 %v77
  %v137 = vunpack.c.l.bf16 %v78
  %v138 = vunpack.c.h.bf16 %v78
  %v139 = vunpack.c.l.bf16 %v79
  %v140 = vunpack.c.h.bf16 %v79
  %v141 = vunpack.c.l.bf16 %v80
  %v142 = vunpack.c.h.bf16 %v80
  %v143 = vunpack.c.l.bf16 %v81
  %v144 = vunpack.c.h.bf16 %v81
  %v145 = vunpack.c.l.bf16 %v82
  %v146 = vunpack.c.h.bf16 %v82
  %v148 = vperm.slane %v47, 0
  %v149 = vperm.slane %v47, 1
  %v152 = vmul.f32 %v83, %v148
  %v153 = vmul.f32 %v84, %v149
  %v154 = vmul.f32 %v85, %v148
  %v155 = vmul.f32 %v86, %v149
  %v156 = vmul.f32 %v87, %v148
  %v157 = vmul.f32 %v88, %v149
  %v158 = vmul.f32 %v89, %v148
  %v159 = vmul.f32 %v90, %v149
  %v160 = vmul.f32 %v91, %v148
  %v161 = vmul.f32 %v92, %v149
  %v162 = vmul.f32 %v93, %v148
  %v163 = vmul.f32 %v94, %v149
  %v164 = vmul.f32 %v95, %v148
  %v165 = vmul.f32 %v96, %v149
  %v166 = vmul.f32 %v97, %v148
  %v167 = vmul.f32 %v98, %v149
  %v168 = vmul.f32 %v99, %v148
  %v169 = vmul.f32 %v100, %v149
  %v170 = vmul.f32 %v101, %v148
  %v171 = vmul.f32 %v102, %v149
  %v172 = vmul.f32 %v103, %v148
  %v173 = vmul.f32 %v104, %v149
  %v174 = vmul.f32 %v105, %v148
  %v175 = vmul.f32 %v106, %v149
  %v176 = vmul.f32 %v107, %v148
  %v177 = vmul.f32 %v108, %v149
  %v178 = vmul.f32 %v109, %v148
  %v179 = vmul.f32 %v110, %v149
  %v180 = vmul.f32 %v111, %v148
  %v181 = vmul.f32 %v112, %v149
  %v182 = vmul.f32 %v113, %v148
  %v183 = vmul.f32 %v114, %v149
  %v184 = vmul.f32 %v115, %v148
  %v185 = vmul.f32 %v116, %v149
  %v186 = vmul.f32 %v117, %v148
  %v187 = vmul.f32 %v118, %v149
  %v188 = vmul.f32 %v119, %v148
  %v189 = vmul.f32 %v120, %v149
  %v190 = vmul.f32 %v121, %v148
  %v191 = vmul.f32 %v122, %v149
  %v192 = vmul.f32 %v123, %v148
  %v193 = vmul.f32 %v124, %v149
  %v194 = vmul.f32 %v125, %v148
  %v195 = vmul.f32 %v126, %v149
  %v196 = vmul.f32 %v127, %v148
  %v197 = vmul.f32 %v128, %v149
  %v198 = vmul.f32 %v129, %v148
  %v199 = vmul.f32 %v130, %v149
  %v200 = vmul.f32 %v131, %v148
  %v201 = vmul.f32 %v132, %v149
  %v202 = vmul.f32 %v133, %v148
  %v203 = vmul.f32 %v134, %v149
  %v204 = vmul.f32 %v135, %v148
  %v205 = vmul.f32 %v136, %v149
  %v206 = vmul.f32 %v137, %v148
  %v207 = vmul.f32 %v138, %v149
  %v208 = vmul.f32 %v139, %v148
  %v209 = vmul.f32 %v140, %v149
  %v210 = vmul.f32 %v141, %v148
  %v211 = vmul.f32 %v142, %v149
  %v212 = vmul.f32 %v143, %v148
  %v213 = vmul.f32 %v144, %v149
  %v214 = vmul.f32 %v145, %v148
  %v215 = vmul.f32 %v146, %v149
  %v217 = vperm.slane %v50, 0
  %v218 = vperm.slane %v50, 1
  %v221 = vadd.f32 %v152, %v217
  %v222 = vadd.f32 %v153, %v218
  %v223 = vadd.f32 %v154, %v217
  %v224 = vadd.f32 %v155, %v218
  %v225 = vadd.f32 %v156, %v217
  %v226 = vadd.f32 %v157, %v218
  %v227 = vadd.f32 %v158, %v217
  %v228 = vadd.f32 %v159, %v218
  %v229 = vadd.f32 %v160, %v217
  %v230 = vadd.f32 %v161, %v218
  %v231 = vadd.f32 %v162, %v217
  %v232 = vadd.f32 %v163, %v218
  %v233 = vadd.f32 %v164, %v217
  %v234 = vadd.f32 %v165, %v218
  %v235 = vadd.f32 %v166, %v217
  %v236 = vadd.f32 %v167, %v218
  %v237 = vadd.f32 %v168, %v217
  %v238 = vadd.f32 %v169, %v218
  %v239 = vadd.f32 %v170, %v217
  %v240 = vadd.f32 %v171, %v218
  %v241 = vadd.f32 %v172, %v217
  %v242 = vadd.f32 %v173, %v218
  %v243 = vadd.f32 %v174, %v217
  %v244 = vadd.f32 %v175, %v218
  %v245 = vadd.f32 %v176, %v217
  %v246 = vadd.f32 %v177, %v218
  %v247 = vadd.f32 %v178, %v217
  %v248 = vadd.f32 %v179, %v218
  %v249 = vadd.f32 %v180, %v217
  %v250 = vadd.f32 %v181, %v218
  %v251 = vadd.f32 %v182, %v217
  %v252 = vadd.f32 %v183, %v218
  %v253 = vadd.f32 %v184, %v217
  %v254 = vadd.f32 %v185, %v218
  %v255 = vadd.f32 %v186, %v217
  %v256 = vadd.f32 %v187, %v218
  %v257 = vadd.f32 %v188, %v217
  %v258 = vadd.f32 %v189, %v218
  %v259 = vadd.f32 %v190, %v217
  %v260 = vadd.f32 %v191, %v218
  %v261 = vadd.f32 %v192, %v217
  %v262 = vadd.f32 %v193, %v218
  %v263 = vadd.f32 %v194, %v217
  %v264 = vadd.f32 %v195, %v218
  %v265 = vadd.f32 %v196, %v217
  %v266 = vadd.f32 %v197, %v218
  %v267 = vadd.f32 %v198, %v217
  %v268 = vadd.f32 %v199, %v218
  %v269 = vadd.f32 %v200, %v217
  %v270 = vadd.f32 %v201, %v218
  %v271 = vadd.f32 %v202, %v217
  %v272 = vadd.f32 %v203, %v218
  %v273 = vadd.f32 %v204, %v217
  %v274 = vadd.f32 %v205, %v218
  %v275 = vadd.f32 %v206, %v217
  %v276 = vadd.f32 %v207, %v218
  %v277 = vadd.f32 %v208, %v217
  %v278 = vadd.f32 %v209, %v218
  %v279 = vadd.f32 %v210, %v217
  %v280 = vadd.f32 %v211, %v218
  %v281 = vadd.f32 %v212, %v217
  %v282 = vadd.f32 %v213, %v218
  %v283 = vadd.f32 %v214, %v217
  %v284 = vadd.f32 %v215, %v218
  %vm285 = vcmp.gt.f32.partialorder %v221, 0.0
  %vm286 = vcmp.gt.f32.partialorder %v222, 0.0
  %vm287 = vcmp.gt.f32.partialorder %v223, 0.0
  %vm288 = vcmp.gt.f32.partialorder %v224, 0.0
  %vm289 = vcmp.gt.f32.partialorder %v225, 0.0
  %vm290 = vcmp.gt.f32.partialorder %v226, 0.0
  %vm291 = vcmp.gt.f32.partialorder %v227, 0.0
  %vm292 = vcmp.gt.f32.partialorder %v228, 0.0
  %vm293 = vcmp.gt.f32.partialorder %v229, 0.0
  %vm294 = vcmp.gt.f32.partialorder %v230, 0.0
  %vm295 = vcmp.gt.f32.partialorder %v231, 0.0
  %vm296 = vcmp.gt.f32.partialorder %v232, 0.0
  %vm297 = vcmp.gt.f32.partialorder %v233, 0.0
  %vm298 = vcmp.gt.f32.partialorder %v234, 0.0
  %vm299 = vcmp.gt.f32.partialorder %v235, 0.0
  %vm300 = vcmp.gt.f32.partialorder %v236, 0.0
  %vm301 = vcmp.gt.f32.partialorder %v237, 0.0
  %vm302 = vcmp.gt.f32.partialorder %v238, 0.0
  %vm303 = vcmp.gt.f32.partialorder %v239, 0.0
  %vm304 = vcmp.gt.f32.partialorder %v240, 0.0
  %vm305 = vcmp.gt.f32.partialorder %v241, 0.0
  %vm306 = vcmp.gt.f32.partialorder %v242, 0.0
  %vm307 = vcmp.gt.f32.partialorder %v243, 0.0
  %vm308 = vcmp.gt.f32.partialorder %v244, 0.0
  %vm309 = vcmp.gt.f32.partialorder %v245, 0.0
  %vm310 = vcmp.gt.f32.partialorder %v246, 0.0
  %vm311 = vcmp.gt.f32.partialorder %v247, 0.0
  %vm312 = vcmp.gt.f32.partialorder %v248, 0.0
  %vm313 = vcmp.gt.f32.partialorder %v249, 0.0
  %vm314 = vcmp.gt.f32.partialorder %v250, 0.0
  %vm315 = vcmp.gt.f32.partialorder %v251, 0.0
  %vm316 = vcmp.gt.f32.partialorder %v252, 0.0
  %vm317 = vcmp.gt.f32.partialorder %v253, 0.0
  %vm318 = vcmp.gt.f32.partialorder %v254, 0.0
  %vm319 = vcmp.gt.f32.partialorder %v255, 0.0
  %vm320 = vcmp.gt.f32.partialorder %v256, 0.0
  %vm321 = vcmp.gt.f32.partialorder %v257, 0.0
  %vm322 = vcmp.gt.f32.partialorder %v258, 0.0
  %vm323 = vcmp.gt.f32.partialorder %v259, 0.0
  %vm324 = vcmp.gt.f32.partialorder %v260, 0.0
  %vm325 = vcmp.gt.f32.partialorder %v261, 0.0
  %vm326 = vcmp.gt.f32.partialorder %v262, 0.0
  %vm327 = vcmp.gt.f32.partialorder %v263, 0.0
  %vm328 = vcmp.gt.f32.partialorder %v264, 0.0
  %vm329 = vcmp.gt.f32.partialorder %v265, 0.0
  %vm330 = vcmp.gt.f32.partialorder %v266, 0.0
  %vm331 = vcmp.gt.f32.partialorder %v267, 0.0
  %vm332 = vcmp.gt.f32.partialorder %v268, 0.0
  %vm333 = vcmp.gt.f32.partialorder %v269, 0.0
  %vm334 = vcmp.gt.f32.partialorder %v270, 0.0
  %vm335 = vcmp.gt.f32.partialorder %v271, 0.0
  %vm336 = vcmp.gt.f32.partialorder %v272, 0.0
  %vm337 = vcmp.gt.f32.partialorder %v273, 0.0
  %vm338 = vcmp.gt.f32.partialorder %v274, 0.0
  %vm339 = vcmp.gt.f32.partialorder %v275, 0.0
  %vm340 = vcmp.gt.f32.partialorder %v276, 0.0
  %vm341 = vcmp.gt.f32.partialorder %v277, 0.0
  %vm342 = vcmp.gt.f32.partialorder %v278, 0.0
  %vm343 = vcmp.gt.f32.partialorder %v279, 0.0
  %vm344 = vcmp.gt.f32.partialorder %v280, 0.0
  %vm345 = vcmp.gt.f32.partialorder %v281, 0.0
  %vm346 = vcmp.gt.f32.partialorder %v282, 0.0
  %vm347 = vcmp.gt.f32.partialorder %v283, 0.0
  %vm348 = vcmp.gt.f32.partialorder %v284, 0.0
  %v349 = vmul.f32 %v221, 0.2
  %v350 = vmul.f32 %v222, 0.2
  %v351 = vmul.f32 %v223, 0.2
  %v352 = vmul.f32 %v224, 0.2
  %v353 = vmul.f32 %v225, 0.2
  %v354 = vmul.f32 %v226, 0.2
  %v355 = vmul.f32 %v227, 0.2
  %v356 = vmul.f32 %v228, 0.2
  %v357 = vmul.f32 %v229, 0.2
  %v358 = vmul.f32 %v230, 0.2
  %v359 = vmul.f32 %v231, 0.2
  %v360 = vmul.f32 %v232, 0.2
  %v361 = vmul.f32 %v233, 0.2
  %v362 = vmul.f32 %v234, 0.2
  %v363 = vmul.f32 %v235, 0.2
  %v364 = vmul.f32 %v236, 0.2
  %v365 = vmul.f32 %v237, 0.2
  %v366 = vmul.f32 %v238, 0.2
  %v367 = vmul.f32 %v239, 0.2
  %v368 = vmul.f32 %v240, 0.2
  %v369 = vmul.f32 %v241, 0.2
  %v370 = vmul.f32 %v242, 0.2
  %v371 = vmul.f32 %v243, 0.2
  %v372 = vmul.f32 %v244, 0.2
  %v373 = vmul.f32 %v245, 0.2
  %v374 = vmul.f32 %v246, 0.2
  %v375 = vmul.f32 %v247, 0.2
  %v376 = vmul.f32 %v248, 0.2
  %v377 = vmul.f32 %v249, 0.2
  %v378 = vmul.f32 %v250, 0.2
  %v379 = vmul.f32 %v251, 0.2
  %v380 = vmul.f32 %v252, 0.2
  %v381 = vmul.f32 %v253, 0.2
  %v382 = vmul.f32 %v254, 0.2
  %v383 = vmul.f32 %v255, 0.2
  %v384 = vmul.f32 %v256, 0.2
  %v385 = vmul.f32 %v257, 0.2
  %v386 = vmul.f32 %v258, 0.2
  %v387 = vmul.f32 %v259, 0.2
  %v388 = vmul.f32 %v260, 0.2
  %v389 = vmul.f32 %v261, 0.2
  %v390 = vmul.f32 %v262, 0.2
  %v391 = vmul.f32 %v263, 0.2
  %v392 = vmul.f32 %v264, 0.2
  %v393 = vmul.f32 %v265, 0.2
  %v394 = vmul.f32 %v266, 0.2
  %v395 = vmul.f32 %v267, 0.2
  %v396 = vmul.f32 %v268, 0.2
  %v397 = vmul.f32 %v269, 0.2
  %v398 = vmul.f32 %v270, 0.2
  %v399 = vmul.f32 %v271, 0.2
  %v400 = vmul.f32 %v272, 0.2
  %v401 = vmul.f32 %v273, 0.2
  %v402 = vmul.f32 %v274, 0.2
  %v403 = vmul.f32 %v275, 0.2
  %v404 = vmul.f32 %v276, 0.2
  %v405 = vmul.f32 %v277, 0.2
  %v406 = vmul.f32 %v278, 0.2
  %v407 = vmul.f32 %v279, 0.2
  %v408 = vmul.f32 %v280, 0.2
  %v409 = vmul.f32 %v281, 0.2
  %v410 = vmul.f32 %v282, 0.2
  %v411 = vmul.f32 %v283, 0.2
  %v412 = vmul.f32 %v284, 0.2
  %v413 = vsel %vm285, %v221, %v349
  %v414 = vsel %vm286, %v222, %v350
  %v415 = vsel %vm287, %v223, %v351
  %v416 = vsel %vm288, %v224, %v352
  %v417 = vsel %vm289, %v225, %v353
  %v418 = vsel %vm290, %v226, %v354
  %v419 = vsel %vm291, %v227, %v355
  %v420 = vsel %vm292, %v228, %v356
  %v421 = vsel %vm293, %v229, %v357
  %v422 = vsel %vm294, %v230, %v358
  %v423 = vsel %vm295, %v231, %v359
  %v424 = vsel %vm296, %v232, %v360
  %v425 = vsel %vm297, %v233, %v361
  %v426 = vsel %vm298, %v234, %v362
  %v427 = vsel %vm299, %v235, %v363
  %v428 = vsel %vm300, %v236, %v364
  %v429 = vsel %vm301, %v237, %v365
  %v430 = vsel %vm302, %v238, %v366
  %v431 = vsel %vm303, %v239, %v367
  %v432 = vsel %vm304, %v240, %v368
  %v433 = vsel %vm305, %v241, %v369
  %v434 = vsel %vm306, %v242, %v370
  %v435 = vsel %vm307, %v243, %v371
  %v436 = vsel %vm308, %v244, %v372
  %v437 = vsel %vm309, %v245, %v373
  %v438 = vsel %vm310, %v246, %v374
  %v439 = vsel %vm311, %v247, %v375
  %v440 = vsel %vm312, %v248, %v376
  %v441 = vsel %vm313, %v249, %v377
  %v442 = vsel %vm314, %v250, %v378
  %v443 = vsel %vm315, %v251, %v379
  %v444 = vsel %vm316, %v252, %v380
  %v445 = vsel %vm317, %v253, %v381
  %v446 = vsel %vm318, %v254, %v382
  %v447 = vsel %vm319, %v255, %v383
  %v448 = vsel %vm320, %v256, %v384
  %v449 = vsel %vm321, %v257, %v385
  %v450 = vsel %vm322, %v258, %v386
  %v451 = vsel %vm323, %v259, %v387
  %v452 = vsel %vm324, %v260, %v388
  %v453 = vsel %vm325, %v261, %v389
  %v454 = vsel %vm326, %v262, %v390
  %v455 = vsel %vm327, %v263, %v391
  %v456 = vsel %vm328, %v264, %v392
  %v457 = vsel %vm329, %v265, %v393
  %v458 = vsel %vm330, %v266, %v394
  %v459 = vsel %vm331, %v267, %v395
  %v460 = vsel %vm332, %v268, %v396
  %v461 = vsel %vm333, %v269, %v397
  %v462 = vsel %vm334, %v270, %v398
  %v463 = vsel %vm335, %v271, %v399
  %v464 = vsel %vm336, %v272, %v400
  %v465 = vsel %vm337, %v273, %v401
  %v466 = vsel %vm338, %v274, %v402
  %v467 = vsel %vm339, %v275, %v403
  %v468 = vsel %vm340, %v276, %v404
  %v469 = vsel %vm341, %v277, %v405
  %v470 = vsel %vm342, %v278, %v406
  %v471 = vsel %vm343, %v279, %v407
  %v472 = vsel %vm344, %v280, %v408
  %v473 = vsel %vm345, %v281, %v409
  %v474 = vsel %vm346, %v282, %v410
  %v475 = vsel %vm347, %v283, %v411
  %v476 = vsel %vm348, %v284, %v412
  %v477 = vpack.c.bf16 %v415, %v413
  %v478 = vpack.c.bf16 %v416, %v414
  %v479 = vpack.c.bf16 %v419, %v417
  %v480 = vpack.c.bf16 %v420, %v418
  %v481 = vpack.c.bf16 %v423, %v421
  %v482 = vpack.c.bf16 %v424, %v422
  %v483 = vpack.c.bf16 %v427, %v425
  %v484 = vpack.c.bf16 %v428, %v426
  %v485 = vpack.c.bf16 %v431, %v429
  %v486 = vpack.c.bf16 %v432, %v430
  %v487 = vpack.c.bf16 %v435, %v433
  %v488 = vpack.c.bf16 %v436, %v434
  %v489 = vpack.c.bf16 %v439, %v437
  %v490 = vpack.c.bf16 %v440, %v438
  %v491 = vpack.c.bf16 %v443, %v441
  %v492 = vpack.c.bf16 %v444, %v442
  %v493 = vpack.c.bf16 %v447, %v445
  %v494 = vpack.c.bf16 %v448, %v446
  %v495 = vpack.c.bf16 %v451, %v449
  %v496 = vpack.c.bf16 %v452, %v450
  %v497 = vpack.c.bf16 %v455, %v453
  %v498 = vpack.c.bf16 %v456, %v454
  %v499 = vpack.c.bf16 %v459, %v457
  %v500 = vpack.c.bf16 %v460, %v458
  %v501 = vpack.c.bf16 %v463, %v461
  %v502 = vpack.c.bf16 %v464, %v462
  %v503 = vpack.c.bf16 %v467, %v465
  %v504 = vpack.c.bf16 %v468, %v466
  %v505 = vpack.c.bf16 %v471, %v469
  %v506 = vpack.c.bf16 %v472, %v470
  %v507 = vpack.c.bf16 %v475, %v473
  %v508 = vpack.c.bf16 %v476, %v474
  %v509 = vld [vmem:[%s5] sm:$0xf]
  %v510 = vld [vmem:[%s5 + $0x4] sm:$0xf]
  %v511 = vld [vmem:[%s5 + $0x8] sm:$0xf]
  %v512 = vld [vmem:[%s5 + $0xc] sm:$0xf]
  %v513 = vld [vmem:[%s5 + $0x10] sm:$0xf]
  %v514 = vld [vmem:[%s5 + $0x14] sm:$0xf]
  %v515 = vld [vmem:[%s5 + $0x18] sm:$0xf]
  %v516 = vld [vmem:[%s5 + $0x1c] sm:$0xf]
  %v517 = vld [vmem:[%s5 + $0x20] sm:$0xf]
  %v518 = vld [vmem:[%s5 + $0x24] sm:$0xf]
  %v519 = vld [vmem:[%s5 + $0x28] sm:$0xf]
  %v520 = vld [vmem:[%s5 + $0x2c] sm:$0xf]
  %v521 = vld [vmem:[%s5 + $0x30] sm:$0xf]
  %v522 = vld [vmem:[%s5 + $0x34] sm:$0xf]
  %v523 = vld [vmem:[%s5 + $0x38] sm:$0xf]
  %v524 = vld [vmem:[%s5 + $0x3c] sm:$0xf]
  %v525 = vld [vmem:[%s5 + $0x40] sm:$0xf]
  %v526 = vld [vmem:[%s5 + $0x44] sm:$0xf]
  %v527 = vld [vmem:[%s5 + $0x48] sm:$0xf]
  %v528 = vld [vmem:[%s5 + $0x4c] sm:$0xf]
  %v529 = vld [vmem:[%s5 + $0x50] sm:$0xf]
  %v530 = vld [vmem:[%s5 + $0x54] sm:$0xf]
  %v531 = vld [vmem:[%s5 + $0x58] sm:$0xf]
  %v532 = vld [vmem:[%s5 + $0x5c] sm:$0xf]
  %v533 = vld [vmem:[%s5 + $0x60] sm:$0xf]
  %v534 = vld [vmem:[%s5 + $0x64] sm:$0xf]
  %v535 = vld [vmem:[%s5 + $0x68] sm:$0xf]
  %v536 = vld [vmem:[%s5 + $0x6c] sm:$0xf]
  %v537 = vld [vmem:[%s5 + $0x70] sm:$0xf]
  %v538 = vld [vmem:[%s5 + $0x74] sm:$0xf]
  %v539 = vld [vmem:[%s5 + $0x78] sm:$0xf]
  %v540 = vld [vmem:[%s5 + $0x7c] sm:$0xf]
  %v541 = vld [vmem:[%s6] sm:$0x1]
  %v543 = vperm.slane %v541, 0
  %v577 = vunpack.c.l.b16 %v509
  %v578 = vunpack.c.l.b16 %v510
  %v579 = vunpack.c.l.b16 %v511
  %v580 = vunpack.c.l.b16 %v512
  %v581 = vunpack.c.l.b16 %v513
  %v582 = vunpack.c.l.b16 %v514
  %v583 = vunpack.c.l.b16 %v515
  %v584 = vunpack.c.l.b16 %v516
  %v585 = vunpack.c.l.b16 %v517
  %v586 = vunpack.c.l.b16 %v518
  %v587 = vunpack.c.l.b16 %v519
  %v588 = vunpack.c.l.b16 %v520
  %v589 = vunpack.c.l.b16 %v521
  %v590 = vunpack.c.l.b16 %v522
  %v591 = vunpack.c.l.b16 %v523
  %v592 = vunpack.c.l.b16 %v524
  %v593 = vunpack.c.l.b16 %v525
  %v594 = vunpack.c.l.b16 %v526
  %v595 = vunpack.c.l.b16 %v527
  %v596 = vunpack.c.l.b16 %v528
  %v597 = vunpack.c.l.b16 %v529
  %v598 = vunpack.c.l.b16 %v530
  %v599 = vunpack.c.l.b16 %v531
  %v600 = vunpack.c.l.b16 %v532
  %v601 = vunpack.c.l.b16 %v533
  %v602 = vunpack.c.l.b16 %v534
  %v603 = vunpack.c.l.b16 %v535
  %v604 = vunpack.c.l.b16 %v536
  %v605 = vunpack.c.l.b16 %v537
  %v606 = vunpack.c.l.b16 %v538
  %v607 = vunpack.c.l.b16 %v539
  %v608 = vunpack.c.l.b16 %v540
  %v609 = vpack.c.b16 %v578, %v577
  %v610 = vpack.c.b16 %v580, %v579
  %v611 = vpack.c.b16 %v582, %v581
  %v612 = vpack.c.b16 %v584, %v583
  %v613 = vpack.c.b16 %v586, %v585
  %v614 = vpack.c.b16 %v588, %v587
  %v615 = vpack.c.b16 %v590, %v589
  %v616 = vpack.c.b16 %v592, %v591
  %v617 = vpack.c.b16 %v594, %v593
  %v618 = vpack.c.b16 %v596, %v595
  %v619 = vpack.c.b16 %v598, %v597
  %v620 = vpack.c.b16 %v600, %v599
  %v621 = vpack.c.b16 %v602, %v601
  %v622 = vpack.c.b16 %v604, %v603
  %v623 = vpack.c.b16 %v606, %v605
  %v624 = vpack.c.b16 %v608, %v607
  %641 = vmatpush.bf16.msra.mxu0 %v616
  %642 = vmatpush.bf16.msra.mxu0 %v615
  %643 = vmatpush.bf16.msra.mxu0 %v614
  %644 = vmatpush.bf16.msra.mxu0 %v613
  %645 = vmatpush.bf16.msra.mxu0 %v612
  %646 = vmatpush.bf16.msra.mxu0 %v611
  %647 = vmatpush.bf16.msra.mxu0 %v610
  %648 = vmatpush.bf16.msra.mxu0 %v609
  %649 = vmatmul.bf16.gmra.mxu0 %v477
  %v650 = vpop.f32.mrf.mxu0
  %v651 = vadd.f32 %v543, %v650
  %v652 = vpop.f32.mrf.mxu0
  %v653 = vadd.f32 %v543, %v652
  %654 = vmatmul.bf16.gmra.mxu0 %v479
  %v655 = vpop.f32.mrf.mxu0
  %v656 = vadd.f32 %v543, %v655
  %v657 = vpop.f32.mrf.mxu0
  %v658 = vadd.f32 %v543, %v657
  %659 = vmatmul.bf16.gmra.mxu0 %v481
  %v660 = vpop.f32.mrf.mxu0
  %v661 = vadd.f32 %v543, %v660
  %v662 = vpop.f32.mrf.mxu0
  %v663 = vadd.f32 %v543, %v662
  %664 = vmatmul.bf16.gmra.mxu0 %v483
  %v665 = vpop.f32.mrf.mxu0
  %v666 = vadd.f32 %v543, %v665
  %v667 = vpop.f32.mrf.mxu0
  %v668 = vadd.f32 %v543, %v667
  %669 = vmatmul.bf16.gmra.mxu0 %v485
  %v670 = vpop.f32.mrf.mxu0
  %v671 = vadd.f32 %v543, %v670
  %v672 = vpop.f32.mrf.mxu0
  %v673 = vadd.f32 %v543, %v672
  %674 = vmatmul.bf16.gmra.mxu0 %v487
  %v675 = vpop.f32.mrf.mxu0
  %v676 = vadd.f32 %v543, %v675
  %v677 = vpop.f32.mrf.mxu0
  %v678 = vadd.f32 %v543, %v677
  %679 = vmatmul.bf16.gmra.mxu0 %v489
  %v680 = vpop.f32.mrf.mxu0
  %v681 = vadd.f32 %v543, %v680
  %v682 = vpop.f32.mrf.mxu0
  %v683 = vadd.f32 %v543, %v682
  %684 = vmatmul.bf16.gmra.mxu0 %v491
  %v685 = vpop.f32.mrf.mxu0
  %v686 = vadd.f32 %v543, %v685
  %v687 = vpop.f32.mrf.mxu0
  %v688 = vadd.f32 %v543, %v687
  %689 = vmatmul.bf16.gmra.mxu0 %v493
  %v690 = vpop.f32.mrf.mxu0
  %v691 = vadd.f32 %v543, %v690
  %v692 = vpop.f32.mrf.mxu0
  %v693 = vadd.f32 %v543, %v692
  %694 = vmatmul.bf16.gmra.mxu0 %v495
  %v695 = vpop.f32.mrf.mxu0
  %v696 = vadd.f32 %v543, %v695
  %v697 = vpop.f32.mrf.mxu0
  %v698 = vadd.f32 %v543, %v697
  %699 = vmatmul.bf16.gmra.mxu0 %v497
  %v700 = vpop.f32.mrf.mxu0
  %v701 = vadd.f32 %v543, %v700
  %v702 = vpop.f32.mrf.mxu0
  %v703 = vadd.f32 %v543, %v702
  %704 = vmatmul.bf16.gmra.mxu0 %v499
  %v705 = vpop.f32.mrf.mxu0
  %v706 = vadd.f32 %v543, %v705
  %v707 = vpop.f32.mrf.mxu0
  %v708 = vadd.f32 %v543, %v707
  %709 = vmatmul.bf16.gmra.mxu0 %v501
  %v710 = vpop.f32.mrf.mxu0
  %v711 = vadd.f32 %v543, %v710
  %v712 = vpop.f32.mrf.mxu0
  %v713 = vadd.f32 %v543, %v712
  %714 = vmatmul.bf16.gmra.mxu0 %v503
  %v715 = vpop.f32.mrf.mxu0
  %v716 = vadd.f32 %v543, %v715
  %v717 = vpop.f32.mrf.mxu0
  %v718 = vadd.f32 %v543, %v717
  %719 = vmatmul.bf16.gmra.mxu0 %v505
  %v720 = vpop.f32.mrf.mxu0
  %v721 = vadd.f32 %v543, %v720
  %v722 = vpop.f32.mrf.mxu0
  %v723 = vadd.f32 %v543, %v722
  %724 = vmatmul.bf16.gmra.mxu0 %v507
  %v725 = vpop.f32.mrf.mxu0
  %v726 = vadd.f32 %v543, %v725
  %v727 = vpop.f32.mrf.mxu0
  %v728 = vadd.f32 %v543, %v727
  %729 = vdwg.mxu0
  %730 = vmatpush.bf16.msra.mxu0 %v624
  %731 = vmatpush.bf16.msra.mxu0 %v623
  %732 = vmatpush.bf16.msra.mxu0 %v622
  %733 = vmatpush.bf16.msra.mxu0 %v621
  %734 = vmatpush.bf16.msra.mxu0 %v620
  %735 = vmatpush.bf16.msra.mxu0 %v619
  %736 = vmatpush.bf16.msra.mxu0 %v618
  %737 = vmatpush.bf16.msra.mxu0 %v617
  %738 = vmatmul.bf16.gmra.mxu0 %v478
  %v739 = vpop.f32.mrf.mxu0
  %v740 = vadd.f32 %v651, %v739
  %v741 = vpop.f32.mrf.mxu0
  %v742 = vadd.f32 %v653, %v741
  %743 = vmatmul.bf16.gmra.mxu0 %v480
  %v744 = vpop.f32.mrf.mxu0
  %v745 = vadd.f32 %v656, %v744
  %v746 = vpop.f32.mrf.mxu0
  %v747 = vadd.f32 %v658, %v746
  %748 = vmatmul.bf16.gmra.mxu0 %v482
  %v749 = vpop.f32.mrf.mxu0
  %v750 = vadd.f32 %v661, %v749
  %v751 = vpop.f32.mrf.mxu0
  %v752 = vadd.f32 %v663, %v751
  %753 = vmatmul.bf16.gmra.mxu0 %v484
  %v754 = vpop.f32.mrf.mxu0
  %v755 = vadd.f32 %v666, %v754
  %v756 = vpop.f32.mrf.mxu0
  %v757 = vadd.f32 %v668, %v756
  %758 = vmatmul.bf16.gmra.mxu0 %v486
  %v759 = vpop.f32.mrf.mxu0
  %v760 = vadd.f32 %v671, %v759
  %v761 = vpop.f32.mrf.mxu0
  %v762 = vadd.f32 %v673, %v761
  %763 = vmatmul.bf16.gmra.mxu0 %v488
  %v764 = vpop.f32.mrf.mxu0
  %v765 = vadd.f32 %v676, %v764
  %v766 = vpop.f32.mrf.mxu0
  %v767 = vadd.f32 %v678, %v766
  %768 = vmatmul.bf16.gmra.mxu0 %v490
  %v769 = vpop.f32.mrf.mxu0
  %v770 = vadd.f32 %v681, %v769
  %v771 = vpop.f32.mrf.mxu0
  %v772 = vadd.f32 %v683, %v771
  %773 = vmatmul.bf16.gmra.mxu0 %v492
  %v774 = vpop.f32.mrf.mxu0
  %v775 = vadd.f32 %v686, %v774
  %v776 = vpop.f32.mrf.mxu0
  %v777 = vadd.f32 %v688, %v776
  %778 = vmatmul.bf16.gmra.mxu0 %v494
  %v779 = vpop.f32.mrf.mxu0
  %v780 = vadd.f32 %v691, %v779
  %v781 = vpop.f32.mrf.mxu0
  %v782 = vadd.f32 %v693, %v781
  %783 = vmatmul.bf16.gmra.mxu0 %v496
  %v784 = vpop.f32.mrf.mxu0
  %v785 = vadd.f32 %v696, %v784
  %v786 = vpop.f32.mrf.mxu0
  %v787 = vadd.f32 %v698, %v786
  %788 = vmatmul.bf16.gmra.mxu0 %v498
  %v789 = vpop.f32.mrf.mxu0
  %v790 = vadd.f32 %v701, %v789
  %v791 = vpop.f32.mrf.mxu0
  %v792 = vadd.f32 %v703, %v791
  %793 = vmatmul.bf16.gmra.mxu0 %v500
  %v794 = vpop.f32.mrf.mxu0
  %v795 = vadd.f32 %v706, %v794
  %v796 = vpop.f32.mrf.mxu0
  %v797 = vadd.f32 %v708, %v796
  %798 = vmatmul.bf16.gmra.mxu0 %v502
  %v799 = vpop.f32.mrf.mxu0
  %v800 = vadd.f32 %v711, %v799
  %v801 = vpop.f32.mrf.mxu0
  %v802 = vadd.f32 %v713, %v801
  %803 = vmatmul.bf16.gmra.mxu0 %v504
  %v804 = vpop.f32.mrf.mxu0
  %v805 = vadd.f32 %v716, %v804
  %v806 = vpop.f32.mrf.mxu0
  %v807 = vadd.f32 %v718, %v806
  %808 = vmatmul.bf16.gmra.mxu0 %v506
  %v809 = vpop.f32.mrf.mxu0
  %v810 = vadd.f32 %v721, %v809
  %v811 = vpop.f32.mrf.mxu0
  %v812 = vadd.f32 %v723, %v811
  %813 = vmatmul.bf16.gmra.mxu0 %v508
  %v814 = vpop.f32.mrf.mxu0
  %v815 = vadd.f32 %v726, %v814
  %v816 = vpop.f32.mrf.mxu0
  %v817 = vadd.f32 %v728, %v816
  %818 = vdwg.mxu0
  %819 = vst [vmem:[%s7] sm:$0xff] %v740
  %820 = vst [vmem:[%s7 + $0x8] sm:$0xff] %v742
  %821 = vst [vmem:[%s7 + $0x10] sm:$0xff] %v745
  %822 = vst [vmem:[%s7 + $0x18] sm:$0xff] %v747
  %823 = vst [vmem:[%s7 + $0x20] sm:$0xff] %v750
  %824 = vst [vmem:[%s7 + $0x28] sm:$0xff] %v752
  %825 = vst [vmem:[%s7 + $0x30] sm:$0xff] %v755
  %826 = vst [vmem:[%s7 + $0x38] sm:$0xff] %v757
  %827 = vst [vmem:[%s7 + $0x40] sm:$0xff] %v760
  %828 = vst [vmem:[%s7 + $0x48] sm:$0xff] %v762
  %829 = vst [vmem:[%s7 + $0x50] sm:$0xff] %v765
  %830 = vst [vmem:[%s7 + $0x58] sm:$0xff] %v767
  %831 = vst [vmem:[%s7 + $0x60] sm:$0xff] %v770
  %832 = vst [vmem:[%s7 + $0x68] sm:$0xff] %v772
  %833 = vst [vmem:[%s7 + $0x70] sm:$0xff] %v775
  %834 = vst [vmem:[%s7 + $0x78] sm:$0xff] %v777
  %835 = vst [vmem:[%s7 + $0x80] sm:$0xff] %v780
  %836 = vst [vmem:[%s7 + $0x88] sm:$0xff] %v782
  %837 = vst [vmem:[%s7 + $0x90] sm:$0xff] %v785
  %838 = vst [vmem:[%s7 + $0x98] sm:$0xff] %v787
  %839 = vst [vmem:[%s7 + $0xa0] sm:$0xff] %v790
  %840 = vst [vmem:[%s7 + $0xa8] sm:$0xff] %v792
  %841 = vst [vmem:[%s7 + $0xb0] sm:$0xff] %v795
  %842 = vst [vmem:[%s7 + $0xb8] sm:$0xff] %v797
  %843 = vst [vmem:[%s7 + $0xc0] sm:$0xff] %v800
  %844 = vst [vmem:[%s7 + $0xc8] sm:$0xff] %v802
  %845 = vst [vmem:[%s7 + $0xd0] sm:$0xff] %v805
  %846 = vst [vmem:[%s7 + $0xd8] sm:$0xff] %v807
  %847 = vst [vmem:[%s7 + $0xe0] sm:$0xff] %v810
  %848 = vst [vmem:[%s7 + $0xe8] sm:$0xff] %v812
  %849 = vst [vmem:[%s7 + $0xf0] sm:$0xff] %v815
  %850 = vst [vmem:[%s7 + $0xf8] sm:$0xff] %v817
  // Predicated region
  $region30: #{generator_forward.3} parent=0 // pred_check
    _
  $region31: #{generator_forward.3} parent=0 // pred_check_branch
    %852 = sbr.rel (0) target = $region33
  $region32: #{generator_forward.3} parent=0 // pred_region
    _
  $region33: #{generator_forward.3} parent=0 // pred_fallthru
    _
  // Predicated region
  $region34: #{generator_forward.3} parent=0 // pred_check
    _
  $region35: #{generator_forward.3} parent=0 // pred_check_branch
    %854 = sbr.rel (0) target = $region37
  $region36: #{generator_forward.3} parent=0 // pred_region
    _
  $region37: #{generator_forward.3} parent=0 // pred_fallthru
    _

// kernel: generator_forward.2
$region0: #{generator_forward.2}
  #allocation0 [shape = 'u32[]', space=smem, size = 0x4, offset = 0x4, fixed_abs, tag = 'smem constant byte address 0x4 - core index']
  #allocation1 [shape = 'u32[72,128]{1,0:T(1,128)}', space=vmem, size = 0x9000, scoped, tag = 'internal scratch']
  %s0 = inlined_call_operand.vmem [shape: bf16[256,16], index: 0, kind: input, shape index: {}]
  %s1 = inlined_call_operand.vmem [shape: bf16[16,256], index: 1, kind: input, shape index: {}]
  %s2 = inlined_call_operand.vmem [shape: f32[1,256], index: 2, kind: input, shape index: {}]
  %s3 = inlined_call_operand.vmem [shape: bf16[256,256], index: 3, kind: input, shape index: {}]
  %s4 = inlined_call_operand.vmem [shape: f32[1,256], index: 4, kind: input, shape index: {}]
  %s5 = inlined_call_operand.vmem [shape: bf16[256,256], index: 5, kind: input, shape index: {}]
  %s6 = inlined_call_operand.vmem [shape: f32[1,256], index: 6, kind: input, shape index: {}]
  %s7 = inlined_call_operand.vmem [shape: bf16[256,256], index: 7, kind: output, shape index: {0}]
  %s8 = inlined_call_operand.vmem [shape: f32[1,1,256], index: 8, kind: output, shape index: {1}]
  %s9 = inlined_call_operand.vmem [shape: f32[1,1,256], index: 9, kind: output, shape index: {2}]
  %10 = xla_tuple %s7, %s8, %s9
  %s11 = sld [smem:[#allocation0]]
  $region54: #{generator_forward.2} parent=0
    _
  %s13 = ssub.s32 1, %s11
  %s14 = scalar_select 0, %s13, %s11
  // Predicated region
  $region2: #{generator_forward.2} parent=0 // pred_check
    _
  $region3: #{generator_forward.2} parent=0 // pred_check_branch
    %16 = sbr.rel (0) target = $region5
  $region4: #{generator_forward.2} parent=0 // pred_region
    _
  $region5: #{generator_forward.2} parent=0 // pred_fallthru
    _
  // Predicated region
  $region6: #{generator_forward.2} parent=0 // pred_check
    _
  $region7: #{generator_forward.2} parent=0 // pred_check_branch
    %18 = sbr.rel (0) target = $region9
  $region8: #{generator_forward.2} parent=0 // pred_region
    _
  $region9: #{generator_forward.2} parent=0 // pred_fallthru
    _
  // Predicated region
  $region10: #{generator_forward.2} parent=0 // pred_check
    _
  $region11: #{generator_forward.2} parent=0 // pred_check_branch
    %20 = sbr.rel (0) target = $region13
  $region12: #{generator_forward.2} parent=0 // pred_region
    _
  $region13: #{generator_forward.2} parent=0 // pred_fallthru
    _
  // Predicated region
  $region14: #{generator_forward.2} parent=0 // pred_check
    _
  $region15: #{generator_forward.2} parent=0 // pred_check_branch
    %22 = sbr.rel (0) target = $region17
  $region16: #{generator_forward.2} parent=0 // pred_region
    _
  $region17: #{generator_forward.2} parent=0 // pred_fallthru
    _
  // Predicated region
  $region18: #{generator_forward.2} parent=0 // pred_check
    _
  $region19: #{generator_forward.2} parent=0 // pred_check_branch
    %24 = sbr.rel (0) target = $region21
  $region20: #{generator_forward.2} parent=0 // pred_region
    _
  $region21: #{generator_forward.2} parent=0 // pred_fallthru
    _
  // Predicated region
  $region22: #{generator_forward.2} parent=0 // pred_check
    _
  $region23: #{generator_forward.2} parent=0 // pred_check_branch
    %26 = sbr.rel (0) target = $region25
  $region24: #{generator_forward.2} parent=0 // pred_region
    _
  $region25: #{generator_forward.2} parent=0 // pred_fallthru
    _
  // Predicated region
  $region26: #{generator_forward.2} parent=0 // pred_check
    _
  $region27: #{generator_forward.2} parent=0 // pred_check_branch
    %28 = sbr.rel (0) target = $region29
  $region28: #{generator_forward.2} parent=0 // pred_region
    _
  $region29: #{generator_forward.2} parent=0 // pred_fallthru
    _
  %v30 = vld [vmem:[%s0] sm:$0xf]
  %v31 = vld [vmem:[%s0 + $0x4] sm:$0xf]
  %v32 = vld [vmem:[%s0 + $0x8] sm:$0xf]
  %v33 = vld [vmem:[%s0 + $0xc] sm:$0xf]
  %v34 = vld [vmem:[%s0 + $0x10] sm:$0xf]
  %v35 = vld [vmem:[%s0 + $0x14] sm:$0xf]
  %v36 = vld [vmem:[%s0 + $0x18] sm:$0xf]
  %v37 = vld [vmem:[%s0 + $0x1c] sm:$0xf]
  %v38 = vld [vmem:[%s0 + $0x20] sm:$0xf]
  %v39 = vld [vmem:[%s0 + $0x24] sm:$0xf]
  %v40 = vld [vmem:[%s0 + $0x28] sm:$0xf]
  %v41 = vld [vmem:[%s0 + $0x2c] sm:$0xf]
  %v42 = vld [vmem:[%s0 + $0x30] sm:$0xf]
  %v43 = vld [vmem:[%s0 + $0x34] sm:$0xf]
  %v44 = vld [vmem:[%s0 + $0x38] sm:$0xf]
  %v45 = vld [vmem:[%s0 + $0x3c] sm:$0xf]
  %v46 = vld [vmem:[%s0 + $0x40] sm:$0xf]
  %v47 = vld [vmem:[%s0 + $0x44] sm:$0xf]
  %v48 = vld [vmem:[%s0 + $0x48] sm:$0xf]
  %v49 = vld [vmem:[%s0 + $0x4c] sm:$0xf]
  %v50 = vld [vmem:[%s0 + $0x50] sm:$0xf]
  %v51 = vld [vmem:[%s0 + $0x54] sm:$0xf]
  %v52 = vld [vmem:[%s0 + $0x58] sm:$0xf]
  %v53 = vld [vmem:[%s0 + $0x5c] sm:$0xf]
  %v54 = vld [vmem:[%s0 + $0x60] sm:$0xf]
  %v55 = vld [vmem:[%s0 + $0x64] sm:$0xf]
  %v56 = vld [vmem:[%s0 + $0x68] sm:$0xf]
  %v57 = vld [vmem:[%s0 + $0x6c] sm:$0xf]
  %v58 = vld [vmem:[%s0 + $0x70] sm:$0xf]
  %v59 = vld [vmem:[%s0 + $0x74] sm:$0xf]
  %v60 = vld [vmem:[%s0 + $0x78] sm:$0xf]
  %v61 = vld [vmem:[%s0 + $0x7c] sm:$0xf]
  %v62 = vld [vmem:[%s1] sm:$0xff]
  %v63 = vld [vmem:[%s1 + $0x8] sm:$0xff]
  %v64 = vld [vmem:[%s2] sm:$0x3]
  %v66 = vperm.slane %v64, 0
  %v67 = vperm.slane %v64, 1
  %v102 = vunpack.c.l.b16 %v30
  %v103 = vunpack.c.l.b16 %v31
  %v104 = vunpack.c.l.b16 %v32
  %v105 = vunpack.c.l.b16 %v33
  %v106 = vunpack.c.l.b16 %v34
  %v107 = vunpack.c.l.b16 %v35
  %v108 = vunpack.c.l.b16 %v36
  %v109 = vunpack.c.l.b16 %v37
  %v110 = vunpack.c.l.b16 %v38
  %v111 = vunpack.c.l.b16 %v39
  %v112 = vunpack.c.l.b16 %v40
  %v113 = vunpack.c.l.b16 %v41
  %v114 = vunpack.c.l.b16 %v42
  %v115 = vunpack.c.l.b16 %v43
  %v116 = vunpack.c.l.b16 %v44
  %v117 = vunpack.c.l.b16 %v45
  %v118 = vunpack.c.l.b16 %v46
  %v119 = vunpack.c.l.b16 %v47
  %v120 = vunpack.c.l.b16 %v48
  %v121 = vunpack.c.l.b16 %v49
  %v122 = vunpack.c.l.b16 %v50
  %v123 = vunpack.c.l.b16 %v51
  %v124 = vunpack.c.l.b16 %v52
  %v125 = vunpack.c.l.b16 %v53
  %v126 = vunpack.c.l.b16 %v54
  %v127 = vunpack.c.l.b16 %v55
  %v128 = vunpack.c.l.b16 %v56
  %v129 = vunpack.c.l.b16 %v57
  %v130 = vunpack.c.l.b16 %v58
  %v131 = vunpack.c.l.b16 %v59
  %v132 = vunpack.c.l.b16 %v60
  %v133 = vunpack.c.l.b16 %v61
  %v134 = vpack.c.b16 %v103, %v102
  %v135 = vpack.c.b16 %v105, %v104
  %v136 = vpack.c.b16 %v107, %v106
  %v137 = vpack.c.b16 %v109, %v108
  %v138 = vpack.c.b16 %v111, %v110
  %v139 = vpack.c.b16 %v113, %v112
  %v140 = vpack.c.b16 %v115, %v114
  %v141 = vpack.c.b16 %v117, %v116
  %v142 = vpack.c.b16 %v119, %v118
  %v143 = vpack.c.b16 %v121, %v120
  %v144 = vpack.c.b16 %v123, %v122
  %v145 = vpack.c.b16 %v125, %v124
  %v146 = vpack.c.b16 %v127, %v126
  %v147 = vpack.c.b16 %v129, %v128
  %v148 = vpack.c.b16 %v131, %v130
  %v149 = vpack.c.b16 %v133, %v132
  %v152 = vunpack.c.l.b16 %v62
  %v153 = vunpack.c.h.b16 %v62
  %v154 = vunpack.c.l.b16 %v63
  %v155 = vunpack.c.h.b16 %v63
  %v156 = vpack.c.b16 %v154, %v152
  %v157 = vpack.c.b16 %v155, %v153
  %vm160 = vcmask 130048
  %v162 = vsel %vm160, %v134, 0
  %v165 = vsel %vm160, %v135, 0
  %v168 = vsel %vm160, %v136, 0
  %v171 = vsel %vm160, %v137, 0
  %v174 = vsel %vm160, %v138, 0
  %v177 = vsel %vm160, %v139, 0
  %v180 = vsel %vm160, %v140, 0
  %v183 = vsel %vm160, %v141, 0
  %v186 = vsel %vm160, %v142, 0
  %v189 = vsel %vm160, %v143, 0
  %v192 = vsel %vm160, %v144, 0
  %v195 = vsel %vm160, %v145, 0
  %v198 = vsel %vm160, %v146, 0
  %v201 = vsel %vm160, %v147, 0
  %v204 = vsel %vm160, %v148, 0
  %v207 = vsel %vm160, %v149, 0
  %209 = vmatpush.bf16.msra.mxu0 0
  %210 = vmatpush.bf16.msra.mxu0 0
  %211 = vmatpush.bf16.msra.mxu0 0
  %212 = vmatpush.bf16.msra.mxu0 0
  %213 = vmatpush.bf16.msra.mxu0 0
  %214 = vmatpush.bf16.msra.mxu0 0
  %215 = vmatpush.bf16.msra.mxu0 0
  %216 = vmatpush.bf16.msra.mxu0 %v156
  %217 = vmatmul.bf16.gmra.mxu0 %v162
  %v218 = vpop.f32.mrf.mxu0
  %v219 = vadd.f32 %v66, %v218
  %v220 = vpop.f32.mrf.mxu0
  %v221 = vadd.f32 %v66, %v220
  %222 = vmatmul.bf16.gmra.mxu0 %v165
  %v223 = vpop.f32.mrf.mxu0
  %v224 = vadd.f32 %v66, %v223
  %v225 = vpop.f32.mrf.mxu0
  %v226 = vadd.f32 %v66, %v225
  %227 = vmatmul.bf16.gmra.mxu0 %v168
  %v228 = vpop.f32.mrf.mxu0
  %v229 = vadd.f32 %v66, %v228
  %v230 = vpop.f32.mrf.mxu0
  %v231 = vadd.f32 %v66, %v230
  %232 = vmatmul.bf16.gmra.mxu0 %v171
  %v233 = vpop.f32.mrf.mxu0
  %v234 = vadd.f32 %v66, %v233
  %v235 = vpop.f32.mrf.mxu0
  %v236 = vadd.f32 %v66, %v235
  %237 = vmatmul.bf16.gmra.mxu0 %v174
  %v238 = vpop.f32.mrf.mxu0
  %v239 = vadd.f32 %v66, %v238
  %v240 = vpop.f32.mrf.mxu0
  %v241 = vadd.f32 %v66, %v240
  %242 = vmatmul.bf16.gmra.mxu0 %v177
  %v243 = vpop.f32.mrf.mxu0
  %v244 = vadd.f32 %v66, %v243
  %v245 = vpop.f32.mrf.mxu0
  %v246 = vadd.f32 %v66, %v245
  %247 = vmatmul.bf16.gmra.mxu0 %v180
  %v248 = vpop.f32.mrf.mxu0
  %v249 = vadd.f32 %v66, %v248
  %v250 = vpop.f32.mrf.mxu0
  %v251 = vadd.f32 %v66, %v250
  %252 = vmatmul.bf16.gmra.mxu0 %v183
  %v253 = vpop.f32.mrf.mxu0
  %v254 = vadd.f32 %v66, %v253
  %v255 = vpop.f32.mrf.mxu0
  %v256 = vadd.f32 %v66, %v255
  %257 = vmatmul.bf16.gmra.mxu0 %v186
  %v258 = vpop.f32.mrf.mxu0
  %v259 = vadd.f32 %v66, %v258
  %v260 = vpop.f32.mrf.mxu0
  %v261 = vadd.f32 %v66, %v260
  %262 = vmatmul.bf16.gmra.mxu0 %v189
  %v263 = vpop.f32.mrf.mxu0
  %v264 = vadd.f32 %v66, %v263
  %v265 = vpop.f32.mrf.mxu0
  %v266 = vadd.f32 %v66, %v265
  %267 = vmatmul.bf16.gmra.mxu0 %v192
  %v268 = vpop.f32.mrf.mxu0
  %v269 = vadd.f32 %v66, %v268
  %v270 = vpop.f32.mrf.mxu0
  %v271 = vadd.f32 %v66, %v270
  %272 = vmatmul.bf16.gmra.mxu0 %v195
  %v273 = vpop.f32.mrf.mxu0
  %v274 = vadd.f32 %v66, %v273
  %v275 = vpop.f32.mrf.mxu0
  %v276 = vadd.f32 %v66, %v275
  %277 = vmatmul.bf16.gmra.mxu0 %v198
  %v278 = vpop.f32.mrf.mxu0
  %v279 = vadd.f32 %v66, %v278
  %v280 = vpop.f32.mrf.mxu0
  %v281 = vadd.f32 %v66, %v280
  %282 = vmatmul.bf16.gmra.mxu0 %v201
  %v283 = vpop.f32.mrf.mxu0
  %v284 = vadd.f32 %v66, %v283
  %v285 = vpop.f32.mrf.mxu0
  %v286 = vadd.f32 %v66, %v285
  %287 = vmatmul.bf16.gmra.mxu0 %v204
  %v288 = vpop.f32.mrf.mxu0
  %v289 = vadd.f32 %v66, %v288
  %v290 = vpop.f32.mrf.mxu0
  %v291 = vadd.f32 %v66, %v290
  %292 = vmatmul.bf16.gmra.mxu0 %v207
  %v293 = vpop.f32.mrf.mxu0
  %v294 = vadd.f32 %v66, %v293
  %v295 = vpop.f32.mrf.mxu0
  %v296 = vadd.f32 %v66, %v295
  %297 = vdwg.mxu0
  %298 = vmatpush.bf16.msra.mxu0 0
  %299 = vmatpush.bf16.msra.mxu0 0
  %300 = vmatpush.bf16.msra.mxu0 0
  %301 = vmatpush.bf16.msra.mxu0 0
  %302 = vmatpush.bf16.msra.mxu0 0
  %303 = vmatpush.bf16.msra.mxu0 0
  %304 = vmatpush.bf16.msra.mxu0 0
  %305 = vmatpush.bf16.msra.mxu0 %v157
  %306 = vmatmul.bf16.gmra.mxu0 %v162
  %v307 = vpop.f32.mrf.mxu0
  %v308 = vadd.f32 %v67, %v307
  %v309 = vpop.f32.mrf.mxu0
  %v310 = vadd.f32 %v67, %v309
  %311 = vmatmul.bf16.gmra.mxu0 %v165
  %v312 = vpop.f32.mrf.mxu0
  %v313 = vadd.f32 %v67, %v312
  %v314 = vpop.f32.mrf.mxu0
  %v315 = vadd.f32 %v67, %v314
  %316 = vmatmul.bf16.gmra.mxu0 %v168
  %v317 = vpop.f32.mrf.mxu0
  %v318 = vadd.f32 %v67, %v317
  %v319 = vpop.f32.mrf.mxu0
  %v320 = vadd.f32 %v67, %v319
  %321 = vmatmul.bf16.gmra.mxu0 %v171
  %v322 = vpop.f32.mrf.mxu0
  %v323 = vadd.f32 %v67, %v322
  %v324 = vpop.f32.mrf.mxu0
  %v325 = vadd.f32 %v67, %v324
  %326 = vmatmul.bf16.gmra.mxu0 %v174
  %v327 = vpop.f32.mrf.mxu0
  %v328 = vadd.f32 %v67, %v327
  %v329 = vpop.f32.mrf.mxu0
  %v330 = vadd.f32 %v67, %v329
  %331 = vmatmul.bf16.gmra.mxu0 %v177
  %v332 = vpop.f32.mrf.mxu0
  %v333 = vadd.f32 %v67, %v332
  %v334 = vpop.f32.mrf.mxu0
  %v335 = vadd.f32 %v67, %v334
  %336 = vmatmul.bf16.gmra.mxu0 %v180
  %v337 = vpop.f32.mrf.mxu0
  %v338 = vadd.f32 %v67, %v337
  %v339 = vpop.f32.mrf.mxu0
  %v340 = vadd.f32 %v67, %v339
  %341 = vmatmul.bf16.gmra.mxu0 %v183
  %v342 = vpop.f32.mrf.mxu0
  %v343 = vadd.f32 %v67, %v342
  %v344 = vpop.f32.mrf.mxu0
  %v345 = vadd.f32 %v67, %v344
  %346 = vmatmul.bf16.gmra.mxu0 %v186
  %v347 = vpop.f32.mrf.mxu0
  %v348 = vadd.f32 %v67, %v347
  %v349 = vpop.f32.mrf.mxu0
  %v350 = vadd.f32 %v67, %v349
  %351 = vmatmul.bf16.gmra.mxu0 %v189
  %v352 = vpop.f32.mrf.mxu0
  %v353 = vadd.f32 %v67, %v352
  %v354 = vpop.f32.mrf.mxu0
  %v355 = vadd.f32 %v67, %v354
  %356 = vmatmul.bf16.gmra.mxu0 %v192
  %v357 = vpop.f32.mrf.mxu0
  %v358 = vadd.f32 %v67, %v357
  %v359 = vpop.f32.mrf.mxu0
  %v360 = vadd.f32 %v67, %v359
  %361 = vmatmul.bf16.gmra.mxu0 %v195
  %v362 = vpop.f32.mrf.mxu0
  %v363 = vadd.f32 %v67, %v362
  %v364 = vpop.f32.mrf.mxu0
  %v365 = vadd.f32 %v67, %v364
  %366 = vmatmul.bf16.gmra.mxu0 %v198
  %v367 = vpop.f32.mrf.mxu0
  %v368 = vadd.f32 %v67, %v367
  %v369 = vpop.f32.mrf.mxu0
  %v370 = vadd.f32 %v67, %v369
  %371 = vmatmul.bf16.gmra.mxu0 %v201
  %v372 = vpop.f32.mrf.mxu0
  %v373 = vadd.f32 %v67, %v372
  %v374 = vpop.f32.mrf.mxu0
  %v375 = vadd.f32 %v67, %v374
  %376 = vmatmul.bf16.gmra.mxu0 %v204
  %v377 = vpop.f32.mrf.mxu0
  %v378 = vadd.f32 %v67, %v377
  %v379 = vpop.f32.mrf.mxu0
  %v380 = vadd.f32 %v67, %v379
  %381 = vmatmul.bf16.gmra.mxu0 %v207
  %v382 = vpop.f32.mrf.mxu0
  %v383 = vadd.f32 %v67, %v382
  %v384 = vpop.f32.mrf.mxu0
  %v385 = vadd.f32 %v67, %v384
  %386 = vdwg.mxu0
  %vm387 = vcmp.gt.f32.partialorder %v219, 0.0
  %vm388 = vcmp.gt.f32.partialorder %v308, 0.0
  %vm389 = vcmp.gt.f32.partialorder %v221, 0.0
  %vm390 = vcmp.gt.f32.partialorder %v310, 0.0
  %vm391 = vcmp.gt.f32.partialorder %v224, 0.0
  %vm392 = vcmp.gt.f32.partialorder %v313, 0.0
  %vm393 = vcmp.gt.f32.partialorder %v226, 0.0
  %vm394 = vcmp.gt.f32.partialorder %v315, 0.0
  %vm395 = vcmp.gt.f32.partialorder %v229, 0.0
  %vm396 = vcmp.gt.f32.partialorder %v318, 0.0
  %vm397 = vcmp.gt.f32.partialorder %v231, 0.0
  %vm398 = vcmp.gt.f32.partialorder %v320, 0.0
  %vm399 = vcmp.gt.f32.partialorder %v234, 0.0
  %vm400 = vcmp.gt.f32.partialorder %v323, 0.0
  %vm401 = vcmp.gt.f32.partialorder %v236, 0.0
  %vm402 = vcmp.gt.f32.partialorder %v325, 0.0
  %vm403 = vcmp.gt.f32.partialorder %v239, 0.0
  %vm404 = vcmp.gt.f32.partialorder %v328, 0.0
  %vm405 = vcmp.gt.f32.partialorder %v241, 0.0
  %vm406 = vcmp.gt.f32.partialorder %v330, 0.0
  %vm407 = vcmp.gt.f32.partialorder %v244, 0.0
  %vm408 = vcmp.gt.f32.partialorder %v333, 0.0
  %vm409 = vcmp.gt.f32.partialorder %v246, 0.0
  %vm410 = vcmp.gt.f32.partialorder %v335, 0.0
  %vm411 = vcmp.gt.f32.partialorder %v249, 0.0
  %vm412 = vcmp.gt.f32.partialorder %v338, 0.0
  %vm413 = vcmp.gt.f32.partialorder %v251, 0.0
  %vm414 = vcmp.gt.f32.partialorder %v340, 0.0
  %vm415 = vcmp.gt.f32.partialorder %v254, 0.0
  %vm416 = vcmp.gt.f32.partialorder %v343, 0.0
  %vm417 = vcmp.gt.f32.partialorder %v256, 0.0
  %vm418 = vcmp.gt.f32.partialorder %v345, 0.0
  %vm419 = vcmp.gt.f32.partialorder %v259, 0.0
  %vm420 = vcmp.gt.f32.partialorder %v348, 0.0
  %vm421 = vcmp.gt.f32.partialorder %v261, 0.0
  %vm422 = vcmp.gt.f32.partialorder %v350, 0.0
  %vm423 = vcmp.gt.f32.partialorder %v264, 0.0
  %vm424 = vcmp.gt.f32.partialorder %v353, 0.0
  %vm425 = vcmp.gt.f32.partialorder %v266, 0.0
  %vm426 = vcmp.gt.f32.partialorder %v355, 0.0
  %vm427 = vcmp.gt.f32.partialorder %v269, 0.0
  %vm428 = vcmp.gt.f32.partialorder %v358, 0.0
  %vm429 = vcmp.gt.f32.partialorder %v271, 0.0
  %vm430 = vcmp.gt.f32.partialorder %v360, 0.0
  %vm431 = vcmp.gt.f32.partialorder %v274, 0.0
  %vm432 = vcmp.gt.f32.partialorder %v363, 0.0
  %vm433 = vcmp.gt.f32.partialorder %v276, 0.0
  %vm434 = vcmp.gt.f32.partialorder %v365, 0.0
  %vm435 = vcmp.gt.f32.partialorder %v279, 0.0
  %vm436 = vcmp.gt.f32.partialorder %v368, 0.0
  %vm437 = vcmp.gt.f32.partialorder %v281, 0.0
  %vm438 = vcmp.gt.f32.partialorder %v370, 0.0
  %vm439 = vcmp.gt.f32.partialorder %v284, 0.0
  %vm440 = vcmp.gt.f32.partialorder %v373, 0.0
  %vm441 = vcmp.gt.f32.partialorder %v286, 0.0
  %vm442 = vcmp.gt.f32.partialorder %v375, 0.0
  %vm443 = vcmp.gt.f32.partialorder %v289, 0.0
  %vm444 = vcmp.gt.f32.partialorder %v378, 0.0
  %vm445 = vcmp.gt.f32.partialorder %v291, 0.0
  %vm446 = vcmp.gt.f32.partialorder %v380, 0.0
  %vm447 = vcmp.gt.f32.partialorder %v294, 0.0
  %vm448 = vcmp.gt.f32.partialorder %v383, 0.0
  %vm449 = vcmp.gt.f32.partialorder %v296, 0.0
  %vm450 = vcmp.gt.f32.partialorder %v385, 0.0
  %v451 = vmul.f32 %v219, 0.2
  %v452 = vmul.f32 %v308, 0.2
  %v453 = vmul.f32 %v221, 0.2
  %v454 = vmul.f32 %v310, 0.2
  %v455 = vmul.f32 %v224, 0.2
  %v456 = vmul.f32 %v313, 0.2
  %v457 = vmul.f32 %v226, 0.2
  %v458 = vmul.f32 %v315, 0.2
  %v459 = vmul.f32 %v229, 0.2
  %v460 = vmul.f32 %v318, 0.2
  %v461 = vmul.f32 %v231, 0.2
  %v462 = vmul.f32 %v320, 0.2
  %v463 = vmul.f32 %v234, 0.2
  %v464 = vmul.f32 %v323, 0.2
  %v465 = vmul.f32 %v236, 0.2
  %v466 = vmul.f32 %v325, 0.2
  %v467 = vmul.f32 %v239, 0.2
  %v468 = vmul.f32 %v328, 0.2
  %v469 = vmul.f32 %v241, 0.2
  %v470 = vmul.f32 %v330, 0.2
  %v471 = vmul.f32 %v244, 0.2
  %v472 = vmul.f32 %v333, 0.2
  %v473 = vmul.f32 %v246, 0.2
  %v474 = vmul.f32 %v335, 0.2
  %v475 = vmul.f32 %v249, 0.2
  %v476 = vmul.f32 %v338, 0.2
  %v477 = vmul.f32 %v251, 0.2
  %v478 = vmul.f32 %v340, 0.2
  %v479 = vmul.f32 %v254, 0.2
  %v480 = vmul.f32 %v343, 0.2
  %v481 = vmul.f32 %v256, 0.2
  %v482 = vmul.f32 %v345, 0.2
  %v483 = vmul.f32 %v259, 0.2
  %v484 = vmul.f32 %v348, 0.2
  %v485 = vmul.f32 %v261, 0.2
  %v486 = vmul.f32 %v350, 0.2
  %v487 = vmul.f32 %v264, 0.2
  %v488 = vmul.f32 %v353, 0.2
  %v489 = vmul.f32 %v266, 0.2
  %v490 = vmul.f32 %v355, 0.2
  %v491 = vmul.f32 %v269, 0.2
  %v492 = vmul.f32 %v358, 0.2
  %v493 = vmul.f32 %v271, 0.2
  %v494 = vmul.f32 %v360, 0.2
  %v495 = vmul.f32 %v274, 0.2
  %v496 = vmul.f32 %v363, 0.2
  %v497 = vmul.f32 %v276, 0.2
  %v498 = vmul.f32 %v365, 0.2
  %v499 = vmul.f32 %v279, 0.2
  %v500 = vmul.f32 %v368, 0.2
  %v501 = vmul.f32 %v281, 0.2
  %v502 = vmul.f32 %v370, 0.2
  %v503 = vmul.f32 %v284, 0.2
  %v504 = vmul.f32 %v373, 0.2
  %v505 = vmul.f32 %v286, 0.2
  %v506 = vmul.f32 %v375, 0.2
  %v507 = vmul.f32 %v289, 0.2
  %v508 = vmul.f32 %v378, 0.2
  %v509 = vmul.f32 %v291, 0.2
  %v510 = vmul.f32 %v380, 0.2
  %v511 = vmul.f32 %v294, 0.2
  %v512 = vmul.f32 %v383, 0.2
  %v513 = vmul.f32 %v296, 0.2
  %v514 = vmul.f32 %v385, 0.2
  %v515 = vsel %vm387, %v219, %v451
  %v516 = vsel %vm388, %v308, %v452
  %v517 = vsel %vm389, %v221, %v453
  %v518 = vsel %vm390, %v310, %v454
  %v519 = vsel %vm391, %v224, %v455
  %v520 = vsel %vm392, %v313, %v456
  %v521 = vsel %vm393, %v226, %v457
  %v522 = vsel %vm394, %v315, %v458
  %v523 = vsel %vm395, %v229, %v459
  %v524 = vsel %vm396, %v318, %v460
  %v525 = vsel %vm397, %v231, %v461
  %v526 = vsel %vm398, %v320, %v462
  %v527 = vsel %vm399, %v234, %v463
  %v528 = vsel %vm400, %v323, %v464
  %v529 = vsel %vm401, %v236, %v465
  %v530 = vsel %vm402, %v325, %v466
  %v531 = vsel %vm403, %v239, %v467
  %v532 = vsel %vm404, %v328, %v468
  %v533 = vsel %vm405, %v241, %v469
  %v534 = vsel %vm406, %v330, %v470
  %v535 = vsel %vm407, %v244, %v471
  %v536 = vsel %vm408, %v333, %v472
  %v537 = vsel %vm409, %v246, %v473
  %v538 = vsel %vm410, %v335, %v474
  %v539 = vsel %vm411, %v249, %v475
  %v540 = vsel %vm412, %v338, %v476
  %v541 = vsel %vm413, %v251, %v477
  %v542 = vsel %vm414, %v340, %v478
  %v543 = vsel %vm415, %v254, %v479
  %v544 = vsel %vm416, %v343, %v480
  %v545 = vsel %vm417, %v256, %v481
  %v546 = vsel %vm418, %v345, %v482
  %v547 = vsel %vm419, %v259, %v483
  %v548 = vsel %vm420, %v348, %v484
  %v549 = vsel %vm421, %v261, %v485
  %v550 = vsel %vm422, %v350, %v486
  %v551 = vsel %vm423, %v264, %v487
  %v552 = vsel %vm424, %v353, %v488
  %v553 = vsel %vm425, %v266, %v489
  %v554 = vsel %vm426, %v355, %v490
  %v555 = vsel %vm427, %v269, %v491
  %v556 = vsel %vm428, %v358, %v492
  %v557 = vsel %vm429, %v271, %v493
  %v558 = vsel %vm430, %v360, %v494
  %v559 = vsel %vm431, %v274, %v495
  %v560 = vsel %vm432, %v363, %v496
  %v561 = vsel %vm433, %v276, %v497
  %v562 = vsel %vm434, %v365, %v498
  %v563 = vsel %vm435, %v279, %v499
  %v564 = vsel %vm436, %v368, %v500
  %v565 = vsel %vm437, %v281, %v501
  %v566 = vsel %vm438, %v370, %v502
  %v567 = vsel %vm439, %v284, %v503
  %v568 = vsel %vm440, %v373, %v504
  %v569 = vsel %vm441, %v286, %v505
  %v570 = vsel %vm442, %v375, %v506
  %v571 = vsel %vm443, %v289, %v507
  %v572 = vsel %vm444, %v378, %v508
  %v573 = vsel %vm445, %v291, %v509
  %v574 = vsel %vm446, %v380, %v510
  %v575 = vsel %vm447, %v294, %v511
  %v576 = vsel %vm448, %v383, %v512
  %v577 = vsel %vm449, %v296, %v513
  %v578 = vsel %vm450, %v385, %v514
  %v579 = vpack.c.bf16 %v517, %v515
  %v580 = vpack.c.bf16 %v518, %v516
  %v581 = vpack.c.bf16 %v521, %v519
  %v582 = vpack.c.bf16 %v522, %v520
  %v583 = vpack.c.bf16 %v525, %v523
  %v584 = vpack.c.bf16 %v526, %v524
  %v585 = vpack.c.bf16 %v529, %v527
  %v586 = vpack.c.bf16 %v530, %v528
  %v587 = vpack.c.bf16 %v533, %v531
  %v588 = vpack.c.bf16 %v534, %v532
  %v589 = vpack.c.bf16 %v537, %v535
  %v590 = vpack.c.bf16 %v538, %v536
  %v591 = vpack.c.bf16 %v541, %v539
  %v592 = vpack.c.bf16 %v542, %v540
  %v593 = vpack.c.bf16 %v545, %v543
  %v594 = vpack.c.bf16 %v546, %v544
  %v595 = vpack.c.bf16 %v549, %v547
  %v596 = vpack.c.bf16 %v550, %v548
  %v597 = vpack.c.bf16 %v553, %v551
  %v598 = vpack.c.bf16 %v554, %v552
  %v599 = vpack.c.bf16 %v557, %v555
  %v600 = vpack.c.bf16 %v558, %v556
  %v601 = vpack.c.bf16 %v561, %v559
  %v602 = vpack.c.bf16 %v562, %v560
  %v603 = vpack.c.bf16 %v565, %v563
  %v604 = vpack.c.bf16 %v566, %v564
  %v605 = vpack.c.bf16 %v569, %v567
  %v606 = vpack.c.bf16 %v570, %v568
  %v607 = vpack.c.bf16 %v573, %v571
  %v608 = vpack.c.bf16 %v574, %v572
  %v609 = vpack.c.bf16 %v577, %v575
  %v610 = vpack.c.bf16 %v578, %v576
  %v611 = vld [vmem:[%s3] sm:$0xff]
  %v612 = vld [vmem:[%s3 + $0x8] sm:$0xff]
  %v613 = vld [vmem:[%s3 + $0x10] sm:$0xff]
  %v614 = vld [vmem:[%s3 + $0x18] sm:$0xff]
  %v615 = vld [vmem:[%s3 + $0x20] sm:$0xff]
  %v616 = vld [vmem:[%s3 + $0x28] sm:$0xff]
  %v617 = vld [vmem:[%s3 + $0x30] sm:$0xff]
  %v618 = vld [vmem:[%s3 + $0x38] sm:$0xff]
  %v619 = vld [vmem:[%s3 + $0x40] sm:$0xff]
  %v620 = vld [vmem:[%s3 + $0x48] sm:$0xff]
  %v621 = vld [vmem:[%s3 + $0x50] sm:$0xff]
  %v622 = vld [vmem:[%s3 + $0x58] sm:$0xff]
  %v623 = vld [vmem:[%s3 + $0x60] sm:$0xff]
  %v624 = vld [vmem:[%s3 + $0x68] sm:$0xff]
  %v625 = vld [vmem:[%s3 + $0x70] sm:$0xff]
  %v626 = vld [vmem:[%s3 + $0x78] sm:$0xff]
  %v627 = vld [vmem:[%s3 + $0x80] sm:$0xff]
  %v628 = vld [vmem:[%s3 + $0x88] sm:$0xff]
  %v629 = vld [vmem:[%s3 + $0x90] sm:$0xff]
  %v630 = vld [vmem:[%s3 + $0x98] sm:$0xff]
  %v631 = vld [vmem:[%s3 + $0xa0] sm:$0xff]
  %v632 = vld [vmem:[%s3 + $0xa8] sm:$0xff]
  %v633 = vld [vmem:[%s3 + $0xb0] sm:$0xff]
  %v634 = vld [vmem:[%s3 + $0xb8] sm:$0xff]
  %v635 = vld [vmem:[%s3 + $0xc0] sm:$0xff]
  %v636 = vld [vmem:[%s3 + $0xc8] sm:$0xff]
  %v637 = vld [vmem:[%s3 + $0xd0] sm:$0xff]
  %v638 = vld [vmem:[%s3 + $0xd8] sm:$0xff]
  %v639 = vld [vmem:[%s3 + $0xe0] sm:$0xff]
  %v640 = vld [vmem:[%s3 + $0xe8] sm:$0xff]
  %v641 = vld [vmem:[%s3 + $0xf0] sm:$0xff]
  %v642 = vld [vmem:[%s3 + $0xf8] sm:$0xff]
  %v643 = vld [vmem:[%s4] sm:$0x3]
  %v645 = vperm.slane %v643, 0
  %v646 = vperm.slane %v643, 1
  %v681 = vunpack.c.l.b16 %v611
  %v682 = vunpack.c.h.b16 %v611
  %v683 = vunpack.c.l.b16 %v612
  %v684 = vunpack.c.h.b16 %v612
  %v685 = vunpack.c.l.b16 %v613
  %v686 = vunpack.c.h.b16 %v613
  %v687 = vunpack.c.l.b16 %v614
  %v688 = vunpack.c.h.b16 %v614
  %v689 = vunpack.c.l.b16 %v615
  %v690 = vunpack.c.h.b16 %v615
  %v691 = vunpack.c.l.b16 %v616
  %v692 = vunpack.c.h.b16 %v616
  %v693 = vunpack.c.l.b16 %v617
  %v694 = vunpack.c.h.b16 %v617
  %v695 = vunpack.c.l.b16 %v618
  %v696 = vunpack.c.h.b16 %v618
  %v697 = vunpack.c.l.b16 %v619
  %v698 = vunpack.c.h.b16 %v619
  %v699 = vunpack.c.l.b16 %v620
  %v700 = vunpack.c.h.b16 %v620
  %v701 = vunpack.c.l.b16 %v621
  %v702 = vunpack.c.h.b16 %v621
  %v703 = vunpack.c.l.b16 %v622
  %v704 = vunpack.c.h.b16 %v622
  %v705 = vunpack.c.l.b16 %v623
  %v706 = vunpack.c.h.b16 %v623
  %v707 = vunpack.c.l.b16 %v624
  %v708 = vunpack.c.h.b16 %v624
  %v709 = vunpack.c.l.b16 %v625
  %v710 = vunpack.c.h.b16 %v625
  %v711 = vunpack.c.l.b16 %v626
  %v712 = vunpack.c.h.b16 %v626
  %v713 = vunpack.c.l.b16 %v627
  %v714 = vunpack.c.h.b16 %v627
  %v715 = vunpack.c.l.b16 %v628
  %v716 = vunpack.c.h.b16 %v628
  %v717 = vunpack.c.l.b16 %v629
  %v718 = vunpack.c.h.b16 %v629
  %v719 = vunpack.c.l.b16 %v630
  %v720 = vunpack.c.h.b16 %v630
  %v721 = vunpack.c.l.b16 %v631
  %v722 = vunpack.c.h.b16 %v631
  %v723 = vunpack.c.l.b16 %v632
  %v724 = vunpack.c.h.b16 %v632
  %v725 = vunpack.c.l.b16 %v633
  %v726 = vunpack.c.h.b16 %v633
  %v727 = vunpack.c.l.b16 %v634
  %v728 = vunpack.c.h.b16 %v634
  %v729 = vunpack.c.l.b16 %v635
  %v730 = vunpack.c.h.b16 %v635
  %v731 = vunpack.c.l.b16 %v636
  %v732 = vunpack.c.h.b16 %v636
  %v733 = vunpack.c.l.b16 %v637
  %v734 = vunpack.c.h.b16 %v637
  %v735 = vunpack.c.l.b16 %v638
  %v736 = vunpack.c.h.b16 %v638
  %v737 = vunpack.c.l.b16 %v639
  %v738 = vunpack.c.h.b16 %v639
  %v739 = vunpack.c.l.b16 %v640
  %v740 = vunpack.c.h.b16 %v640
  %v741 = vunpack.c.l.b16 %v641
  %v742 = vunpack.c.h.b16 %v641
  %v743 = vunpack.c.l.b16 %v642
  %v744 = vunpack.c.h.b16 %v642
  %v745 = vpack.c.b16 %v683, %v681
  %v746 = vpack.c.b16 %v684, %v682
  %v747 = vpack.c.b16 %v687, %v685
  %v748 = vpack.c.b16 %v688, %v686
  %v749 = vpack.c.b16 %v691, %v689
  %v750 = vpack.c.b16 %v692, %v690
  %v751 = vpack.c.b16 %v695, %v693
  %v752 = vpack.c.b16 %v696, %v694
  %v753 = vpack.c.b16 %v699, %v697
  %v754 = vpack.c.b16 %v700, %v698
  %v755 = vpack.c.b16 %v703, %v701
  %v756 = vpack.c.b16 %v704, %v702
  %v757 = vpack.c.b16 %v707, %v705
  %v758 = vpack.c.b16 %v708, %v706
  %v759 = vpack.c.b16 %v711, %v709
  %v760 = vpack.c.b16 %v712, %v710
  %v761 = vpack.c.b16 %v715, %v713
  %v762 = vpack.c.b16 %v716, %v714
  %v763 = vpack.c.b16 %v719, %v717
  %v764 = vpack.c.b16 %v720, %v718
  %v765 = vpack.c.b16 %v723, %v721
  %v766 = vpack.c.b16 %v724, %v722
  %v767 = vpack.c.b16 %v727, %v725
  %v768 = vpack.c.b16 %v728, %v726
  %v769 = vpack.c.b16 %v731, %v729
  %v770 = vpack.c.b16 %v732, %v730
  %v771 = vpack.c.b16 %v735, %v733
  %v772 = vpack.c.b16 %v736, %v734
  %v773 = vpack.c.b16 %v739, %v737
  %v774 = vpack.c.b16 %v740, %v738
  %v775 = vpack.c.b16 %v743, %v741
  %v776 = vpack.c.b16 %v744, %v742
  %809 = vmatpush.bf16.msra.mxu0 %v759
  %810 = vmatpush.bf16.msra.mxu0 %v757
  %811 = vmatpush.bf16.msra.mxu0 %v755
  %812 = vmatpush.bf16.msra.mxu0 %v753
  %813 = vmatpush.bf16.msra.mxu0 %v751
  %814 = vmatpush.bf16.msra.mxu0 %v749
  %815 = vmatpush.bf16.msra.mxu0 %v747
  %816 = vmatpush.bf16.msra.mxu0 %v745
  %817 = vmatmul.bf16.gmra.mxu0 %v579
  %v818 = vpop.f32.mrf.mxu0
  %v819 = vadd.f32 %v645, %v818
  %v820 = vpop.f32.mrf.mxu0
  %v821 = vadd.f32 %v645, %v820
  %822 = vmatmul.bf16.gmra.mxu0 %v581
  %v823 = vpop.f32.mrf.mxu0
  %v824 = vadd.f32 %v645, %v823
  %v825 = vpop.f32.mrf.mxu0
  %v826 = vadd.f32 %v645, %v825
  %827 = vmatmul.bf16.gmra.mxu0 %v583
  %v828 = vpop.f32.mrf.mxu0
  %v829 = vadd.f32 %v645, %v828
  %v830 = vpop.f32.mrf.mxu0
  %v831 = vadd.f32 %v645, %v830
  %832 = vmatmul.bf16.gmra.mxu0 %v585
  %v833 = vpop.f32.mrf.mxu0
  %v834 = vadd.f32 %v645, %v833
  %v835 = vpop.f32.mrf.mxu0
  %v836 = vadd.f32 %v645, %v835
  %837 = vmatmul.bf16.gmra.mxu0 %v587
  %v838 = vpop.f32.mrf.mxu0
  %v839 = vadd.f32 %v645, %v838
  %v840 = vpop.f32.mrf.mxu0
  %v841 = vadd.f32 %v645, %v840
  %842 = vmatmul.bf16.gmra.mxu0 %v589
  %v843 = vpop.f32.mrf.mxu0
  %v844 = vadd.f32 %v645, %v843
  %v845 = vpop.f32.mrf.mxu0
  %v846 = vadd.f32 %v645, %v845
  %847 = vmatmul.bf16.gmra.mxu0 %v591
  %v848 = vpop.f32.mrf.mxu0
  %v849 = vadd.f32 %v645, %v848
  %v850 = vpop.f32.mrf.mxu0
  %v851 = vadd.f32 %v645, %v850
  %852 = vmatmul.bf16.gmra.mxu0 %v593
  %v853 = vpop.f32.mrf.mxu0
  %v854 = vadd.f32 %v645, %v853
  %v855 = vpop.f32.mrf.mxu0
  %v856 = vadd.f32 %v645, %v855
  %857 = vmatmul.bf16.gmra.mxu0 %v595
  %v858 = vpop.f32.mrf.mxu0
  %v859 = vadd.f32 %v645, %v858
  %v860 = vpop.f32.mrf.mxu0
  %v861 = vadd.f32 %v645, %v860
  %862 = vmatmul.bf16.gmra.mxu0 %v597
  %v863 = vpop.f32.mrf.mxu0
  %v864 = vadd.f32 %v645, %v863
  %v865 = vpop.f32.mrf.mxu0
  %v866 = vadd.f32 %v645, %v865
  %867 = vmatmul.bf16.gmra.mxu0 %v599
  %v868 = vpop.f32.mrf.mxu0
  %v869 = vadd.f32 %v645, %v868
  %v870 = vpop.f32.mrf.mxu0
  %v871 = vadd.f32 %v645, %v870
  %872 = vmatmul.bf16.gmra.mxu0 %v601
  %v873 = vpop.f32.mrf.mxu0
  %v874 = vadd.f32 %v645, %v873
  %v875 = vpop.f32.mrf.mxu0
  %v876 = vadd.f32 %v645, %v875
  %877 = vmatmul.bf16.gmra.mxu0 %v603
  %v878 = vpop.f32.mrf.mxu0
  %v879 = vadd.f32 %v645, %v878
  %v880 = vpop.f32.mrf.mxu0
  %v881 = vadd.f32 %v645, %v880
  %882 = vmatmul.bf16.gmra.mxu0 %v605
  %v883 = vpop.f32.mrf.mxu0
  %v884 = vadd.f32 %v645, %v883
  %v885 = vpop.f32.mrf.mxu0
  %v886 = vadd.f32 %v645, %v885
  %887 = vmatmul.bf16.gmra.mxu0 %v607
  %v888 = vpop.f32.mrf.mxu0
  %v889 = vadd.f32 %v645, %v888
  %v890 = vpop.f32.mrf.mxu0
  %v891 = vadd.f32 %v645, %v890
  %892 = vmatmul.bf16.gmra.mxu0 %v609
  %v893 = vpop.f32.mrf.mxu0
  %v894 = vadd.f32 %v645, %v893
  %v895 = vpop.f32.mrf.mxu0
  %v896 = vadd.f32 %v645, %v895
  %897 = vdwg.mxu0
  %898 = vmatpush.bf16.msra.mxu0 %v775
  %899 = vmatpush.bf16.msra.mxu0 %v773
  %900 = vmatpush.bf16.msra.mxu0 %v771
  %901 = vmatpush.bf16.msra.mxu0 %v769
  %902 = vmatpush.bf16.msra.mxu0 %v767
  %903 = vmatpush.bf16.msra.mxu0 %v765
  %904 = vmatpush.bf16.msra.mxu0 %v763
  %905 = vmatpush.bf16.msra.mxu0 %v761
  %906 = vmatmul.bf16.gmra.mxu0 %v580
  %v907 = vpop.f32.mrf.mxu0
  %v908 = vadd.f32 %v819, %v907
  %v909 = vpop.f32.mrf.mxu0
  %v910 = vadd.f32 %v821, %v909
  %911 = vmatmul.bf16.gmra.mxu0 %v582
  %v912 = vpop.f32.mrf.mxu0
  %v913 = vadd.f32 %v824, %v912
  %v914 = vpop.f32.mrf.mxu0
  %v915 = vadd.f32 %v826, %v914
  %916 = vmatmul.bf16.gmra.mxu0 %v584
  %v917 = vpop.f32.mrf.mxu0
  %v918 = vadd.f32 %v829, %v917
  %v919 = vpop.f32.mrf.mxu0
  %v920 = vadd.f32 %v831, %v919
  %921 = vmatmul.bf16.gmra.mxu0 %v586
  %v922 = vpop.f32.mrf.mxu0
  %v923 = vadd.f32 %v834, %v922
  %v924 = vpop.f32.mrf.mxu0
  %v925 = vadd.f32 %v836, %v924
  %926 = vmatmul.bf16.gmra.mxu0 %v588
  %v927 = vpop.f32.mrf.mxu0
  %v928 = vadd.f32 %v839, %v927
  %v929 = vpop.f32.mrf.mxu0
  %v930 = vadd.f32 %v841, %v929
  %931 = vmatmul.bf16.gmra.mxu0 %v590
  %v932 = vpop.f32.mrf.mxu0
  %v933 = vadd.f32 %v844, %v932
  %v934 = vpop.f32.mrf.mxu0
  %v935 = vadd.f32 %v846, %v934
  %936 = vmatmul.bf16.gmra.mxu0 %v592
  %v937 = vpop.f32.mrf.mxu0
  %v938 = vadd.f32 %v849, %v937
  %v939 = vpop.f32.mrf.mxu0
  %v940 = vadd.f32 %v851, %v939
  %941 = vmatmul.bf16.gmra.mxu0 %v594
  %v942 = vpop.f32.mrf.mxu0
  %v943 = vadd.f32 %v854, %v942
  %v944 = vpop.f32.mrf.mxu0
  %v945 = vadd.f32 %v856, %v944
  %946 = vmatmul.bf16.gmra.mxu0 %v596
  %v947 = vpop.f32.mrf.mxu0
  %v948 = vadd.f32 %v859, %v947
  %v949 = vpop.f32.mrf.mxu0
  %v950 = vadd.f32 %v861, %v949
  %951 = vmatmul.bf16.gmra.mxu0 %v598
  %v952 = vpop.f32.mrf.mxu0
  %v953 = vadd.f32 %v864, %v952
  %v954 = vpop.f32.mrf.mxu0
  %v955 = vadd.f32 %v866, %v954
  %956 = vmatmul.bf16.gmra.mxu0 %v600
  %v957 = vpop.f32.mrf.mxu0
  %v958 = vadd.f32 %v869, %v957
  %v959 = vpop.f32.mrf.mxu0
  %v960 = vadd.f32 %v871, %v959
  %961 = vmatmul.bf16.gmra.mxu0 %v602
  %v962 = vpop.f32.mrf.mxu0
  %v963 = vadd.f32 %v874, %v962
  %v964 = vpop.f32.mrf.mxu0
  %v965 = vadd.f32 %v876, %v964
  %966 = vmatmul.bf16.gmra.mxu0 %v604
  %v967 = vpop.f32.mrf.mxu0
  %v968 = vadd.f32 %v879, %v967
  %v969 = vpop.f32.mrf.mxu0
  %v970 = vadd.f32 %v881, %v969
  %971 = vmatmul.bf16.gmra.mxu0 %v606
  %v972 = vpop.f32.mrf.mxu0
  %v973 = vadd.f32 %v884, %v972
  %v974 = vpop.f32.mrf.mxu0
  %v975 = vadd.f32 %v886, %v974
  %976 = vmatmul.bf16.gmra.mxu0 %v608
  %v977 = vpop.f32.mrf.mxu0
  %v978 = vadd.f32 %v889, %v977
  %v979 = vpop.f32.mrf.mxu0
  %v980 = vadd.f32 %v891, %v979
  %981 = vmatmul.bf16.gmra.mxu0 %v610
  %v982 = vpop.f32.mrf.mxu0
  %v983 = vadd.f32 %v894, %v982
  %v984 = vpop.f32.mrf.mxu0
  %v985 = vadd.f32 %v896, %v984
  %986 = vdwg.mxu0
  %987 = vmatpush.bf16.msra.mxu0 %v760
  %988 = vmatpush.bf16.msra.mxu0 %v758
  %989 = vmatpush.bf16.msra.mxu0 %v756
  %990 = vmatpush.bf16.msra.mxu0 %v754
  %991 = vmatpush.bf16.msra.mxu0 %v752
  %992 = vmatpush.bf16.msra.mxu0 %v750
  %993 = vmatpush.bf16.msra.mxu0 %v748
  %994 = vmatpush.bf16.msra.mxu0 %v746
  %995 = vmatmul.bf16.gmra.mxu0 %v579
  %v996 = vpop.f32.mrf.mxu0
  %v997 = vadd.f32 %v646, %v996
  %v998 = vpop.f32.mrf.mxu0
  %v999 = vadd.f32 %v646, %v998
  %1000 = vmatmul.bf16.gmra.mxu0 %v581
  %v1001 = vpop.f32.mrf.mxu0
  %v1002 = vadd.f32 %v646, %v1001
  %v1003 = vpop.f32.mrf.mxu0
  %v1004 = vadd.f32 %v646, %v1003
  %1005 = vmatmul.bf16.gmra.mxu0 %v583
  %v1006 = vpop.f32.mrf.mxu0
  %v1007 = vadd.f32 %v646, %v1006
  %v1008 = vpop.f32.mrf.mxu0
  %v1009 = vadd.f32 %v646, %v1008
  %1010 = vmatmul.bf16.gmra.mxu0 %v585
  %v1011 = vpop.f32.mrf.mxu0
  %v1012 = vadd.f32 %v646, %v1011
  %v1013 = vpop.f32.mrf.mxu0
  %v1014 = vadd.f32 %v646, %v1013
  %1015 = vmatmul.bf16.gmra.mxu0 %v587
  %v1016 = vpop.f32.mrf.mxu0
  %v1017 = vadd.f32 %v646, %v1016
  %v1018 = vpop.f32.mrf.mxu0
  %v1019 = vadd.f32 %v646, %v1018
  %1020 = vmatmul.bf16.gmra.mxu0 %v589
  %v1021 = vpop.f32.mrf.mxu0
  %v1022 = vadd.f32 %v646, %v1021
  %v1023 = vpop.f32.mrf.mxu0
  %v1024 = vadd.f32 %v646, %v1023
  %1025 = vmatmul.bf16.gmra.mxu0 %v591
  %v1026 = vpop.f32.mrf.mxu0
  %v1027 = vadd.f32 %v646, %v1026
  %v1028 = vpop.f32.mrf.mxu0
  %v1029 = vadd.f32 %v646, %v1028
  %1030 = vmatmul.bf16.gmra.mxu0 %v593
  %v1031 = vpop.f32.mrf.mxu0
  %v1032 = vadd.f32 %v646, %v1031
  %v1033 = vpop.f32.mrf.mxu0
  %v1034 = vadd.f32 %v646, %v1033
  %1035 = vmatmul.bf16.gmra.mxu0 %v595
  %v1036 = vpop.f32.mrf.mxu0
  %v1037 = vadd.f32 %v646, %v1036
  %v1038 = vpop.f32.mrf.mxu0
  %v1039 = vadd.f32 %v646, %v1038
  %1040 = vmatmul.bf16.gmra.mxu0 %v597
  %v1041 = vpop.f32.mrf.mxu0
  %v1042 = vadd.f32 %v646, %v1041
  %v1043 = vpop.f32.mrf.mxu0
  %v1044 = vadd.f32 %v646, %v1043
  %1045 = vmatmul.bf16.gmra.mxu0 %v599
  %v1046 = vpop.f32.mrf.mxu0
  %v1047 = vadd.f32 %v646, %v1046
  %v1048 = vpop.f32.mrf.mxu0
  %v1049 = vadd.f32 %v646, %v1048
  %1050 = vmatmul.bf16.gmra.mxu0 %v601
  %v1051 = vpop.f32.mrf.mxu0
  %v1052 = vadd.f32 %v646, %v1051
  %v1053 = vpop.f32.mrf.mxu0
  %v1054 = vadd.f32 %v646, %v1053
  %1055 = vmatmul.bf16.gmra.mxu0 %v603
  %v1056 = vpop.f32.mrf.mxu0
  %v1057 = vadd.f32 %v646, %v1056
  %v1058 = vpop.f32.mrf.mxu0
  %v1059 = vadd.f32 %v646, %v1058
  %1060 = vmatmul.bf16.gmra.mxu0 %v605
  %v1061 = vpop.f32.mrf.mxu0
  %v1062 = vadd.f32 %v646, %v1061
  %v1063 = vpop.f32.mrf.mxu0
  %v1064 = vadd.f32 %v646, %v1063
  %1065 = vmatmul.bf16.gmra.mxu0 %v607
  %v1066 = vpop.f32.mrf.mxu0
  %v1067 = vadd.f32 %v646, %v1066
  %v1068 = vpop.f32.mrf.mxu0
  %v1069 = vadd.f32 %v646, %v1068
  %1070 = vmatmul.bf16.gmra.mxu0 %v609
  %v1071 = vpop.f32.mrf.mxu0
  %v1072 = vadd.f32 %v646, %v1071
  %v1073 = vpop.f32.mrf.mxu0
  %v1074 = vadd.f32 %v646, %v1073
  %1075 = vdwg.mxu0
  %1076 = vmatpush.bf16.msra.mxu0 %v776
  %1077 = vmatpush.bf16.msra.mxu0 %v774
  %1078 = vmatpush.bf16.msra.mxu0 %v772
  %1079 = vmatpush.bf16.msra.mxu0 %v770
  %1080 = vmatpush.bf16.msra.mxu0 %v768
  %1081 = vmatpush.bf16.msra.mxu0 %v766
  %1082 = vmatpush.bf16.msra.mxu0 %v764
  %1083 = vmatpush.bf16.msra.mxu0 %v762
  %1084 = vmatmul.bf16.gmra.mxu0 %v580
  %v1085 = vpop.f32.mrf.mxu0
  %v1086 = vadd.f32 %v997, %v1085
  %v1087 = vpop.f32.mrf.mxu0
  %v1088 = vadd.f32 %v999, %v1087
  %1089 = vmatmul.bf16.gmra.mxu0 %v582
  %v1090 = vpop.f32.mrf.mxu0
  %v1091 = vadd.f32 %v1002, %v1090
  %v1092 = vpop.f32.mrf.mxu0
  %v1093 = vadd.f32 %v1004, %v1092
  %1094 = vmatmul.bf16.gmra.mxu0 %v584
  %v1095 = vpop.f32.mrf.mxu0
  %v1096 = vadd.f32 %v1007, %v1095
  %v1097 = vpop.f32.mrf.mxu0
  %v1098 = vadd.f32 %v1009, %v1097
  %1099 = vmatmul.bf16.gmra.mxu0 %v586
  %v1100 = vpop.f32.mrf.mxu0
  %v1101 = vadd.f32 %v1012, %v1100
  %v1102 = vpop.f32.mrf.mxu0
  %v1103 = vadd.f32 %v1014, %v1102
  %1104 = vmatmul.bf16.gmra.mxu0 %v588
  %v1105 = vpop.f32.mrf.mxu0
  %v1106 = vadd.f32 %v1017, %v1105
  %v1107 = vpop.f32.mrf.mxu0
  %v1108 = vadd.f32 %v1019, %v1107
  %1109 = vmatmul.bf16.gmra.mxu0 %v590
  %v1110 = vpop.f32.mrf.mxu0
  %v1111 = vadd.f32 %v1022, %v1110
  %v1112 = vpop.f32.mrf.mxu0
  %v1113 = vadd.f32 %v1024, %v1112
  %1114 = vmatmul.bf16.gmra.mxu0 %v592
  %v1115 = vpop.f32.mrf.mxu0
  %v1116 = vadd.f32 %v1027, %v1115
  %v1117 = vpop.f32.mrf.mxu0
  %v1118 = vadd.f32 %v1029, %v1117
  %1119 = vmatmul.bf16.gmra.mxu0 %v594
  %v1120 = vpop.f32.mrf.mxu0
  %v1121 = vadd.f32 %v1032, %v1120
  %v1122 = vpop.f32.mrf.mxu0
  %v1123 = vadd.f32 %v1034, %v1122
  %1124 = vmatmul.bf16.gmra.mxu0 %v596
  %v1125 = vpop.f32.mrf.mxu0
  %v1126 = vadd.f32 %v1037, %v1125
  %v1127 = vpop.f32.mrf.mxu0
  %v1128 = vadd.f32 %v1039, %v1127
  %1129 = vmatmul.bf16.gmra.mxu0 %v598
  %v1130 = vpop.f32.mrf.mxu0
  %v1131 = vadd.f32 %v1042, %v1130
  %v1132 = vpop.f32.mrf.mxu0
  %v1133 = vadd.f32 %v1044, %v1132
  %1134 = vmatmul.bf16.gmra.mxu0 %v600
  %v1135 = vpop.f32.mrf.mxu0
  %v1136 = vadd.f32 %v1047, %v1135
  %v1137 = vpop.f32.mrf.mxu0
  %v1138 = vadd.f32 %v1049, %v1137
  %1139 = vmatmul.bf16.gmra.mxu0 %v602
  %v1140 = vpop.f32.mrf.mxu0
  %v1141 = vadd.f32 %v1052, %v1140
  %v1142 = vpop.f32.mrf.mxu0
  %v1143 = vadd.f32 %v1054, %v1142
  %1144 = vmatmul.bf16.gmra.mxu0 %v604
  %v1145 = vpop.f32.mrf.mxu0
  %v1146 = vadd.f32 %v1057, %v1145
  %v1147 = vpop.f32.mrf.mxu0
  %v1148 = vadd.f32 %v1059, %v1147
  %1149 = vmatmul.bf16.gmra.mxu0 %v606
  %v1150 = vpop.f32.mrf.mxu0
  %v1151 = vadd.f32 %v1062, %v1150
  %v1152 = vpop.f32.mrf.mxu0
  %v1153 = vadd.f32 %v1064, %v1152
  %1154 = vmatmul.bf16.gmra.mxu0 %v608
  %v1155 = vpop.f32.mrf.mxu0
  %v1156 = vadd.f32 %v1067, %v1155
  %v1157 = vpop.f32.mrf.mxu0
  %v1158 = vadd.f32 %v1069, %v1157
  %1159 = vmatmul.bf16.gmra.mxu0 %v610
  %v1160 = vpop.f32.mrf.mxu0
  %v1161 = vadd.f32 %v1072, %v1160
  %v1162 = vpop.f32.mrf.mxu0
  %v1163 = vadd.f32 %v1074, %v1162
  %1164 = vdwg.mxu0
  %vm1165 = vcmp.gt.f32.partialorder %v908, 0.0
  %vm1166 = vcmp.gt.f32.partialorder %v1086, 0.0
  %vm1167 = vcmp.gt.f32.partialorder %v910, 0.0
  %vm1168 = vcmp.gt.f32.partialorder %v1088, 0.0
  %vm1169 = vcmp.gt.f32.partialorder %v913, 0.0
  %vm1170 = vcmp.gt.f32.partialorder %v1091, 0.0
  %vm1171 = vcmp.gt.f32.partialorder %v915, 0.0
  %vm1172 = vcmp.gt.f32.partialorder %v1093, 0.0
  %vm1173 = vcmp.gt.f32.partialorder %v918, 0.0
  %vm1174 = vcmp.gt.f32.partialorder %v1096, 0.0
  %vm1175 = vcmp.gt.f32.partialorder %v920, 0.0
  %vm1176 = vcmp.gt.f32.partialorder %v1098, 0.0
  %vm1177 = vcmp.gt.f32.partialorder %v923, 0.0
  %vm1178 = vcmp.gt.f32.partialorder %v1101, 0.0
  %vm1179 = vcmp.gt.f32.partialorder %v925, 0.0
  %vm1180 = vcmp.gt.f32.partialorder %v1103, 0.0
  %vm1181 = vcmp.gt.f32.partialorder %v928, 0.0
  %vm1182 = vcmp.gt.f32.partialorder %v1106, 0.0
  %vm1183 = vcmp.gt.f32.partialorder %v930, 0.0
  %vm1184 = vcmp.gt.f32.partialorder %v1108, 0.0
  %vm1185 = vcmp.gt.f32.partialorder %v933, 0.0
  %vm1186 = vcmp.gt.f32.partialorder %v1111, 0.0
  %vm1187 = vcmp.gt.f32.partialorder %v935, 0.0
  %vm1188 = vcmp.gt.f32.partialorder %v1113, 0.0
  %vm1189 = vcmp.gt.f32.partialorder %v938, 0.0
  %vm1190 = vcmp.gt.f32.partialorder %v1116, 0.0
  %vm1191 = vcmp.gt.f32.partialorder %v940, 0.0
  %vm1192 = vcmp.gt.f32.partialorder %v1118, 0.0
  %vm1193 = vcmp.gt.f32.partialorder %v943, 0.0
  %vm1194 = vcmp.gt.f32.partialorder %v1121, 0.0
  %vm1195 = vcmp.gt.f32.partialorder %v945, 0.0
  %vm1196 = vcmp.gt.f32.partialorder %v1123, 0.0
  %vm1197 = vcmp.gt.f32.partialorder %v948, 0.0
  %vm1198 = vcmp.gt.f32.partialorder %v1126, 0.0
  %vm1199 = vcmp.gt.f32.partialorder %v950, 0.0
  %vm1200 = vcmp.gt.f32.partialorder %v1128, 0.0
  %vm1201 = vcmp.gt.f32.partialorder %v953, 0.0
  %vm1202 = vcmp.gt.f32.partialorder %v1131, 0.0
  %vm1203 = vcmp.gt.f32.partialorder %v955, 0.0
  %vm1204 = vcmp.gt.f32.partialorder %v1133, 0.0
  %vm1205 = vcmp.gt.f32.partialorder %v958, 0.0
  %vm1206 = vcmp.gt.f32.partialorder %v1136, 0.0
  %vm1207 = vcmp.gt.f32.partialorder %v960, 0.0
  %vm1208 = vcmp.gt.f32.partialorder %v1138, 0.0
  %vm1209 = vcmp.gt.f32.partialorder %v963, 0.0
  %vm1210 = vcmp.gt.f32.partialorder %v1141, 0.0
  %vm1211 = vcmp.gt.f32.partialorder %v965, 0.0
  %vm1212 = vcmp.gt.f32.partialorder %v1143, 0.0
  %vm1213 = vcmp.gt.f32.partialorder %v968, 0.0
  %vm1214 = vcmp.gt.f32.partialorder %v1146, 0.0
  %vm1215 = vcmp.gt.f32.partialorder %v970, 0.0
  %vm1216 = vcmp.gt.f32.partialorder %v1148, 0.0
  %vm1217 = vcmp.gt.f32.partialorder %v973, 0.0
  %vm1218 = vcmp.gt.f32.partialorder %v1151, 0.0
  %vm1219 = vcmp.gt.f32.partialorder %v975, 0.0
  %vm1220 = vcmp.gt.f32.partialorder %v1153, 0.0
  %vm1221 = vcmp.gt.f32.partialorder %v978, 0.0
  %vm1222 = vcmp.gt.f32.partialorder %v1156, 0.0
  %vm1223 = vcmp.gt.f32.partialorder %v980, 0.0
  %vm1224 = vcmp.gt.f32.partialorder %v1158, 0.0
  %vm1225 = vcmp.gt.f32.partialorder %v983, 0.0
  %vm1226 = vcmp.gt.f32.partialorder %v1161, 0.0
  %vm1227 = vcmp.gt.f32.partialorder %v985, 0.0
  %vm1228 = vcmp.gt.f32.partialorder %v1163, 0.0
  %v1229 = vmul.f32 %v908, 0.2
  %v1230 = vmul.f32 %v1086, 0.2
  %v1231 = vmul.f32 %v910, 0.2
  %v1232 = vmul.f32 %v1088, 0.2
  %v1233 = vmul.f32 %v913, 0.2
  %v1234 = vmul.f32 %v1091, 0.2
  %v1235 = vmul.f32 %v915, 0.2
  %v1236 = vmul.f32 %v1093, 0.2
  %v1237 = vmul.f32 %v918, 0.2
  %v1238 = vmul.f32 %v1096, 0.2
  %v1239 = vmul.f32 %v920, 0.2
  %v1240 = vmul.f32 %v1098, 0.2
  %v1241 = vmul.f32 %v923, 0.2
  %v1242 = vmul.f32 %v1101, 0.2
  %v1243 = vmul.f32 %v925, 0.2
  %v1244 = vmul.f32 %v1103, 0.2
  %v1245 = vmul.f32 %v928, 0.2
  %v1246 = vmul.f32 %v1106, 0.2
  %v1247 = vmul.f32 %v930, 0.2
  %v1248 = vmul.f32 %v1108, 0.2
  %v1249 = vmul.f32 %v933, 0.2
  %v1250 = vmul.f32 %v1111, 0.2
  %v1251 = vmul.f32 %v935, 0.2
  %v1252 = vmul.f32 %v1113, 0.2
  %v1253 = vmul.f32 %v938, 0.2
  %v1254 = vmul.f32 %v1116, 0.2
  %v1255 = vmul.f32 %v940, 0.2
  %v1256 = vmul.f32 %v1118, 0.2
  %v1257 = vmul.f32 %v943, 0.2
  %v1258 = vmul.f32 %v1121, 0.2
  %v1259 = vmul.f32 %v945, 0.2
  %v1260 = vmul.f32 %v1123, 0.2
  %v1261 = vmul.f32 %v948, 0.2
  %v1262 = vmul.f32 %v1126, 0.2
  %v1263 = vmul.f32 %v950, 0.2
  %v1264 = vmul.f32 %v1128, 0.2
  %v1265 = vmul.f32 %v953, 0.2
  %v1266 = vmul.f32 %v1131, 0.2
  %v1267 = vmul.f32 %v955, 0.2
  %v1268 = vmul.f32 %v1133, 0.2
  %v1269 = vmul.f32 %v958, 0.2
  %v1270 = vmul.f32 %v1136, 0.2
  %v1271 = vmul.f32 %v960, 0.2
  %v1272 = vmul.f32 %v1138, 0.2
  %v1273 = vmul.f32 %v963, 0.2
  %v1274 = vmul.f32 %v1141, 0.2
  %v1275 = vmul.f32 %v965, 0.2
  %v1276 = vmul.f32 %v1143, 0.2
  %v1277 = vmul.f32 %v968, 0.2
  %v1278 = vmul.f32 %v1146, 0.2
  %v1279 = vmul.f32 %v970, 0.2
  %v1280 = vmul.f32 %v1148, 0.2
  %v1281 = vmul.f32 %v973, 0.2
  %v1282 = vmul.f32 %v1151, 0.2
  %v1283 = vmul.f32 %v975, 0.2
  %v1284 = vmul.f32 %v1153, 0.2
  %v1285 = vmul.f32 %v978, 0.2
  %v1286 = vmul.f32 %v1156, 0.2
  %v1287 = vmul.f32 %v980, 0.2
  %v1288 = vmul.f32 %v1158, 0.2
  %v1289 = vmul.f32 %v983, 0.2
  %v1290 = vmul.f32 %v1161, 0.2
  %v1291 = vmul.f32 %v985, 0.2
  %v1292 = vmul.f32 %v1163, 0.2
  %v1293 = vsel %vm1165, %v908, %v1229
  %v1294 = vsel %vm1166, %v1086, %v1230
  %v1295 = vsel %vm1167, %v910, %v1231
  %v1296 = vsel %vm1168, %v1088, %v1232
  %v1297 = vsel %vm1169, %v913, %v1233
  %v1298 = vsel %vm1170, %v1091, %v1234
  %v1299 = vsel %vm1171, %v915, %v1235
  %v1300 = vsel %vm1172, %v1093, %v1236
  %v1301 = vsel %vm1173, %v918, %v1237
  %v1302 = vsel %vm1174, %v1096, %v1238
  %v1303 = vsel %vm1175, %v920, %v1239
  %v1304 = vsel %vm1176, %v1098, %v1240
  %v1305 = vsel %vm1177, %v923, %v1241
  %v1306 = vsel %vm1178, %v1101, %v1242
  %v1307 = vsel %vm1179, %v925, %v1243
  %v1308 = vsel %vm1180, %v1103, %v1244
  %v1309 = vsel %vm1181, %v928, %v1245
  %v1310 = vsel %vm1182, %v1106, %v1246
  %v1311 = vsel %vm1183, %v930, %v1247
  %v1312 = vsel %vm1184, %v1108, %v1248
  %v1313 = vsel %vm1185, %v933, %v1249
  %v1314 = vsel %vm1186, %v1111, %v1250
  %v1315 = vsel %vm1187, %v935, %v1251
  %v1316 = vsel %vm1188, %v1113, %v1252
  %v1317 = vsel %vm1189, %v938, %v1253
  %v1318 = vsel %vm1190, %v1116, %v1254
  %v1319 = vsel %vm1191, %v940, %v1255
  %v1320 = vsel %vm1192, %v1118, %v1256
  %v1321 = vsel %vm1193, %v943, %v1257
  %v1322 = vsel %vm1194, %v1121, %v1258
  %v1323 = vsel %vm1195, %v945, %v1259
  %v1324 = vsel %vm1196, %v1123, %v1260
  %v1325 = vsel %vm1197, %v948, %v1261
  %v1326 = vsel %vm1198, %v1126, %v1262
  %v1327 = vsel %vm1199, %v950, %v1263
  %v1328 = vsel %vm1200, %v1128, %v1264
  %v1329 = vsel %vm1201, %v953, %v1265
  %v1330 = vsel %vm1202, %v1131, %v1266
  %v1331 = vsel %vm1203, %v955, %v1267
  %v1332 = vsel %vm1204, %v1133, %v1268
  %v1333 = vsel %vm1205, %v958, %v1269
  %v1334 = vsel %vm1206, %v1136, %v1270
  %v1335 = vsel %vm1207, %v960, %v1271
  %v1336 = vsel %vm1208, %v1138, %v1272
  %v1337 = vsel %vm1209, %v963, %v1273
  %v1338 = vsel %vm1210, %v1141, %v1274
  %v1339 = vsel %vm1211, %v965, %v1275
  %v1340 = vsel %vm1212, %v1143, %v1276
  %v1341 = vsel %vm1213, %v968, %v1277
  %v1342 = vsel %vm1214, %v1146, %v1278
  %v1343 = vsel %vm1215, %v970, %v1279
  %v1344 = vsel %vm1216, %v1148, %v1280
  %v1345 = vsel %vm1217, %v973, %v1281
  %v1346 = vsel %vm1218, %v1151, %v1282
  %v1347 = vsel %vm1219, %v975, %v1283
  %v1348 = vsel %vm1220, %v1153, %v1284
  %v1349 = vsel %vm1221, %v978, %v1285
  %v1350 = vsel %vm1222, %v1156, %v1286
  %v1351 = vsel %vm1223, %v980, %v1287
  %v1352 = vsel %vm1224, %v1158, %v1288
  %v1353 = vsel %vm1225, %v983, %v1289
  %v1354 = vsel %vm1226, %v1161, %v1290
  %v1355 = vsel %vm1227, %v985, %v1291
  %v1356 = vsel %vm1228, %v1163, %v1292
  %v1357 = vpack.c.bf16 %v1295, %v1293
  %v1358 = vpack.c.bf16 %v1296, %v1294
  %v1359 = vpack.c.bf16 %v1299, %v1297
  %v1360 = vpack.c.bf16 %v1300, %v1298
  %v1361 = vpack.c.bf16 %v1303, %v1301
  %v1362 = vpack.c.bf16 %v1304, %v1302
  %v1363 = vpack.c.bf16 %v1307, %v1305
  %v1364 = vpack.c.bf16 %v1308, %v1306
  %v1365 = vpack.c.bf16 %v1311, %v1309
  %v1366 = vpack.c.bf16 %v1312, %v1310
  %v1367 = vpack.c.bf16 %v1315, %v1313
  %v1368 = vpack.c.bf16 %v1316, %v1314
  %v1369 = vpack.c.bf16 %v1319, %v1317
  %v1370 = vpack.c.bf16 %v1320, %v1318
  %v1371 = vpack.c.bf16 %v1323, %v1321
  %v1372 = vpack.c.bf16 %v1324, %v1322
  %v1373 = vpack.c.bf16 %v1327, %v1325
  %v1374 = vpack.c.bf16 %v1328, %v1326
  %v1375 = vpack.c.bf16 %v1331, %v1329
  %v1376 = vpack.c.bf16 %v1332, %v1330
  %v1377 = vpack.c.bf16 %v1335, %v1333
  %v1378 = vpack.c.bf16 %v1336, %v1334
  %v1379 = vpack.c.bf16 %v1339, %v1337
  %v1380 = vpack.c.bf16 %v1340, %v1338
  %v1381 = vpack.c.bf16 %v1343, %v1341
  %v1382 = vpack.c.bf16 %v1344, %v1342
  %v1383 = vpack.c.bf16 %v1347, %v1345
  %v1384 = vpack.c.bf16 %v1348, %v1346
  %v1385 = vpack.c.bf16 %v1351, %v1349
  %v1386 = vpack.c.bf16 %v1352, %v1350
  %v1387 = vpack.c.bf16 %v1355, %v1353
  %v1388 = vpack.c.bf16 %v1356, %v1354
  %v1389 = vld [vmem:[%s5] sm:$0xff]
  %v1390 = vld [vmem:[%s5 + $0x8] sm:$0xff]
  %v1391 = vld [vmem:[%s5 + $0x10] sm:$0xff]
  %v1392 = vld [vmem:[%s5 + $0x18] sm:$0xff]
  %v1393 = vld [vmem:[%s5 + $0x20] sm:$0xff]
  %v1394 = vld [vmem:[%s5 + $0x28] sm:$0xff]
  %v1395 = vld [vmem:[%s5 + $0x30] sm:$0xff]
  %v1396 = vld [vmem:[%s5 + $0x38] sm:$0xff]
  %v1397 = vld [vmem:[%s5 + $0x40] sm:$0xff]
  %v1398 = vld [vmem:[%s5 + $0x48] sm:$0xff]
  %v1399 = vld [vmem:[%s5 + $0x50] sm:$0xff]
  %v1400 = vld [vmem:[%s5 + $0x58] sm:$0xff]
  %v1401 = vld [vmem:[%s5 + $0x60] sm:$0xff]
  %v1402 = vld [vmem:[%s5 + $0x68] sm:$0xff]
  %v1403 = vld [vmem:[%s5 + $0x70] sm:$0xff]
  %v1404 = vld [vmem:[%s5 + $0x78] sm:$0xff]
  %v1405 = vld [vmem:[%s5 + $0x80] sm:$0xff]
  %v1406 = vld [vmem:[%s5 + $0x88] sm:$0xff]
  %v1407 = vld [vmem:[%s5 + $0x90] sm:$0xff]
  %v1408 = vld [vmem:[%s5 + $0x98] sm:$0xff]
  %v1409 = vld [vmem:[%s5 + $0xa0] sm:$0xff]
  %v1410 = vld [vmem:[%s5 + $0xa8] sm:$0xff]
  %v1411 = vld [vmem:[%s5 + $0xb0] sm:$0xff]
  %v1412 = vld [vmem:[%s5 + $0xb8] sm:$0xff]
  %v1413 = vld [vmem:[%s5 + $0xc0] sm:$0xff]
  %v1414 = vld [vmem:[%s5 + $0xc8] sm:$0xff]
  %v1415 = vld [vmem:[%s5 + $0xd0] sm:$0xff]
  %v1416 = vld [vmem:[%s5 + $0xd8] sm:$0xff]
  %v1417 = vld [vmem:[%s5 + $0xe0] sm:$0xff]
  %v1418 = vld [vmem:[%s5 + $0xe8] sm:$0xff]
  %v1419 = vld [vmem:[%s5 + $0xf0] sm:$0xff]
  %v1420 = vld [vmem:[%s5 + $0xf8] sm:$0xff]
  %v1421 = vld [vmem:[%s6] sm:$0x3]
  %v1423 = vperm.slane %v1421, 0
  %v1424 = vperm.slane %v1421, 1
  %v1459 = vunpack.c.l.b16 %v1389
  %v1460 = vunpack.c.h.b16 %v1389
  %v1461 = vunpack.c.l.b16 %v1390
  %v1462 = vunpack.c.h.b16 %v1390
  %v1463 = vunpack.c.l.b16 %v1391
  %v1464 = vunpack.c.h.b16 %v1391
  %v1465 = vunpack.c.l.b16 %v1392
  %v1466 = vunpack.c.h.b16 %v1392
  %v1467 = vunpack.c.l.b16 %v1393
  %v1468 = vunpack.c.h.b16 %v1393
  %v1469 = vunpack.c.l.b16 %v1394
  %v1470 = vunpack.c.h.b16 %v1394
  %v1471 = vunpack.c.l.b16 %v1395
  %v1472 = vunpack.c.h.b16 %v1395
  %v1473 = vunpack.c.l.b16 %v1396
  %v1474 = vunpack.c.h.b16 %v1396
  %v1475 = vunpack.c.l.b16 %v1397
  %v1476 = vunpack.c.h.b16 %v1397
  %v1477 = vunpack.c.l.b16 %v1398
  %v1478 = vunpack.c.h.b16 %v1398
  %v1479 = vunpack.c.l.b16 %v1399
  %v1480 = vunpack.c.h.b16 %v1399
  %v1481 = vunpack.c.l.b16 %v1400
  %v1482 = vunpack.c.h.b16 %v1400
  %v1483 = vunpack.c.l.b16 %v1401
  %v1484 = vunpack.c.h.b16 %v1401
  %v1485 = vunpack.c.l.b16 %v1402
  %v1486 = vunpack.c.h.b16 %v1402
  %v1487 = vunpack.c.l.b16 %v1403
  %v1488 = vunpack.c.h.b16 %v1403
  %v1489 = vunpack.c.l.b16 %v1404
  %v1490 = vunpack.c.h.b16 %v1404
  %v1491 = vunpack.c.l.b16 %v1405
  %v1492 = vunpack.c.h.b16 %v1405
  %v1493 = vunpack.c.l.b16 %v1406
  %v1494 = vunpack.c.h.b16 %v1406
  %v1495 = vunpack.c.l.b16 %v1407
  %v1496 = vunpack.c.h.b16 %v1407
  %v1497 = vunpack.c.l.b16 %v1408
  %v1498 = vunpack.c.h.b16 %v1408
  %v1499 = vunpack.c.l.b16 %v1409
  %v1500 = vunpack.c.h.b16 %v1409
  %v1501 = vunpack.c.l.b16 %v1410
  %v1502 = vunpack.c.h.b16 %v1410
  %v1503 = vunpack.c.l.b16 %v1411
  %v1504 = vunpack.c.h.b16 %v1411
  %v1505 = vunpack.c.l.b16 %v1412
  %v1506 = vunpack.c.h.b16 %v1412
  %v1507 = vunpack.c.l.b16 %v1413
  %v1508 = vunpack.c.h.b16 %v1413
  %v1509 = vunpack.c.l.b16 %v1414
  %v1510 = vunpack.c.h.b16 %v1414
  %v1511 = vunpack.c.l.b16 %v1415
  %v1512 = vunpack.c.h.b16 %v1415
  %v1513 = vunpack.c.l.b16 %v1416
  %v1514 = vunpack.c.h.b16 %v1416
  %v1515 = vunpack.c.l.b16 %v1417
  %v1516 = vunpack.c.h.b16 %v1417
  %v1517 = vunpack.c.l.b16 %v1418
  %v1518 = vunpack.c.h.b16 %v1418
  %v1519 = vunpack.c.l.b16 %v1419
  %v1520 = vunpack.c.h.b16 %v1419
  %v1521 = vunpack.c.l.b16 %v1420
  %v1522 = vunpack.c.h.b16 %v1420
  %v1523 = vpack.c.b16 %v1461, %v1459
  %v1524 = vpack.c.b16 %v1462, %v1460
  %v1525 = vpack.c.b16 %v1465, %v1463
  %v1526 = vpack.c.b16 %v1466, %v1464
  %v1527 = vpack.c.b16 %v1469, %v1467
  %v1528 = vpack.c.b16 %v1470, %v1468
  %v1529 = vpack.c.b16 %v1473, %v1471
  %v1530 = vpack.c.b16 %v1474, %v1472
  %v1531 = vpack.c.b16 %v1477, %v1475
  %v1532 = vpack.c.b16 %v1478, %v1476
  %v1533 = vpack.c.b16 %v1481, %v1479
  %v1534 = vpack.c.b16 %v1482, %v1480
  %v1535 = vpack.c.b16 %v1485, %v1483
  %v1536 = vpack.c.b16 %v1486, %v1484
  %v1537 = vpack.c.b16 %v1489, %v1487
  %v1538 = vpack.c.b16 %v1490, %v1488
  %v1539 = vpack.c.b16 %v1493, %v1491
  %v1540 = vpack.c.b16 %v1494, %v1492
  %v1541 = vpack.c.b16 %v1497, %v1495
  %v1542 = vpack.c.b16 %v1498, %v1496
  %v1543 = vpack.c.b16 %v1501, %v1499
  %v1544 = vpack.c.b16 %v1502, %v1500
  %v1545 = vpack.c.b16 %v1505, %v1503
  %v1546 = vpack.c.b16 %v1506, %v1504
  %v1547 = vpack.c.b16 %v1509, %v1507
  %v1548 = vpack.c.b16 %v1510, %v1508
  %v1549 = vpack.c.b16 %v1513, %v1511
  %v1550 = vpack.c.b16 %v1514, %v1512
  %v1551 = vpack.c.b16 %v1517, %v1515
  %v1552 = vpack.c.b16 %v1518, %v1516
  %v1553 = vpack.c.b16 %v1521, %v1519
  %v1554 = vpack.c.b16 %v1522, %v1520
  %1587 = vmatpush.bf16.msra.mxu0 %v1537
  %1588 = vmatpush.bf16.msra.mxu0 %v1535
  %1589 = vmatpush.bf16.msra.mxu0 %v1533
  %1590 = vmatpush.bf16.msra.mxu0 %v1531
  %1591 = vmatpush.bf16.msra.mxu0 %v1529
  %1592 = vmatpush.bf16.msra.mxu0 %v1527
  %1593 = vmatpush.bf16.msra.mxu0 %v1525
  %1594 = vmatpush.bf16.msra.mxu0 %v1523
  %1595 = vmatmul.bf16.gmra.mxu0 %v1357
  %v1596 = vpop.f32.mrf.mxu0
  %v1597 = vadd.f32 %v1423, %v1596
  %v1598 = vpop.f32.mrf.mxu0
  %v1599 = vadd.f32 %v1423, %v1598
  %1600 = vmatmul.bf16.gmra.mxu0 %v1359
  %v1601 = vpop.f32.mrf.mxu0
  %v1602 = vadd.f32 %v1423, %v1601
  %v1603 = vpop.f32.mrf.mxu0
  %v1604 = vadd.f32 %v1423, %v1603
  %1605 = vmatmul.bf16.gmra.mxu0 %v1361
  %v1606 = vpop.f32.mrf.mxu0
  %v1607 = vadd.f32 %v1423, %v1606
  %v1608 = vpop.f32.mrf.mxu0
  %v1609 = vadd.f32 %v1423, %v1608
  %1610 = vmatmul.bf16.gmra.mxu0 %v1363
  %v1611 = vpop.f32.mrf.mxu0
  %v1612 = vadd.f32 %v1423, %v1611
  %v1613 = vpop.f32.mrf.mxu0
  %v1614 = vadd.f32 %v1423, %v1613
  %1615 = vmatmul.bf16.gmra.mxu0 %v1365
  %v1616 = vpop.f32.mrf.mxu0
  %v1617 = vadd.f32 %v1423, %v1616
  %v1618 = vpop.f32.mrf.mxu0
  %v1619 = vadd.f32 %v1423, %v1618
  %1620 = vmatmul.bf16.gmra.mxu0 %v1367
  %v1621 = vpop.f32.mrf.mxu0
  %v1622 = vadd.f32 %v1423, %v1621
  %v1623 = vpop.f32.mrf.mxu0
  %v1624 = vadd.f32 %v1423, %v1623
  %1625 = vmatmul.bf16.gmra.mxu0 %v1369
  %v1626 = vpop.f32.mrf.mxu0
  %v1627 = vadd.f32 %v1423, %v1626
  %v1628 = vpop.f32.mrf.mxu0
  %v1629 = vadd.f32 %v1423, %v1628
  %1630 = vmatmul.bf16.gmra.mxu0 %v1371
  %v1631 = vpop.f32.mrf.mxu0
  %v1632 = vadd.f32 %v1423, %v1631
  %v1633 = vpop.f32.mrf.mxu0
  %v1634 = vadd.f32 %v1423, %v1633
  %1635 = vmatmul.bf16.gmra.mxu0 %v1373
  %v1636 = vpop.f32.mrf.mxu0
  %v1637 = vadd.f32 %v1423, %v1636
  %v1638 = vpop.f32.mrf.mxu0
  %v1639 = vadd.f32 %v1423, %v1638
  %1640 = vmatmul.bf16.gmra.mxu0 %v1375
  %v1641 = vpop.f32.mrf.mxu0
  %v1642 = vadd.f32 %v1423, %v1641
  %v1643 = vpop.f32.mrf.mxu0
  %v1644 = vadd.f32 %v1423, %v1643
  %1645 = vmatmul.bf16.gmra.mxu0 %v1377
  %v1646 = vpop.f32.mrf.mxu0
  %v1647 = vadd.f32 %v1423, %v1646
  %v1648 = vpop.f32.mrf.mxu0
  %v1649 = vadd.f32 %v1423, %v1648
  %1650 = vmatmul.bf16.gmra.mxu0 %v1379
  %v1651 = vpop.f32.mrf.mxu0
  %v1652 = vadd.f32 %v1423, %v1651
  %v1653 = vpop.f32.mrf.mxu0
  %v1654 = vadd.f32 %v1423, %v1653
  %1655 = vmatmul.bf16.gmra.mxu0 %v1381
  %v1656 = vpop.f32.mrf.mxu0
  %v1657 = vadd.f32 %v1423, %v1656
  %v1658 = vpop.f32.mrf.mxu0
  %v1659 = vadd.f32 %v1423, %v1658
  %1660 = vmatmul.bf16.gmra.mxu0 %v1383
  %v1661 = vpop.f32.mrf.mxu0
  %v1662 = vadd.f32 %v1423, %v1661
  %v1663 = vpop.f32.mrf.mxu0
  %v1664 = vadd.f32 %v1423, %v1663
  %1665 = vmatmul.bf16.gmra.mxu0 %v1385
  %v1666 = vpop.f32.mrf.mxu0
  %v1667 = vadd.f32 %v1423, %v1666
  %v1668 = vpop.f32.mrf.mxu0
  %v1669 = vadd.f32 %v1423, %v1668
  %1670 = vmatmul.bf16.gmra.mxu0 %v1387
  %v1671 = vpop.f32.mrf.mxu0
  %v1672 = vadd.f32 %v1423, %v1671
  %v1673 = vpop.f32.mrf.mxu0
  %v1674 = vadd.f32 %v1423, %v1673
  %1675 = vdwg.mxu0
  %1676 = vmatpush.bf16.msra.mxu0 %v1553
  %1677 = vmatpush.bf16.msra.mxu0 %v1551
  %1678 = vmatpush.bf16.msra.mxu0 %v1549
  %1679 = vmatpush.bf16.msra.mxu0 %v1547
  %1680 = vmatpush.bf16.msra.mxu0 %v1545
  %1681 = vmatpush.bf16.msra.mxu0 %v1543
  %1682 = vmatpush.bf16.msra.mxu0 %v1541
  %1683 = vmatpush.bf16.msra.mxu0 %v1539
  %1684 = vmatmul.bf16.gmra.mxu0 %v1358
  %v1685 = vpop.f32.mrf.mxu0
  %v1686 = vadd.f32 %v1597, %v1685
  %v1687 = vpop.f32.mrf.mxu0
  %v1688 = vadd.f32 %v1599, %v1687
  %1689 = vmatmul.bf16.gmra.mxu0 %v1360
  %v1690 = vpop.f32.mrf.mxu0
  %v1691 = vadd.f32 %v1602, %v1690
  %v1692 = vpop.f32.mrf.mxu0
  %v1693 = vadd.f32 %v1604, %v1692
  %1694 = vmatmul.bf16.gmra.mxu0 %v1362
  %v1695 = vpop.f32.mrf.mxu0
  %v1696 = vadd.f32 %v1607, %v1695
  %v1697 = vpop.f32.mrf.mxu0
  %v1698 = vadd.f32 %v1609, %v1697
  %1699 = vmatmul.bf16.gmra.mxu0 %v1364
  %v1700 = vpop.f32.mrf.mxu0
  %v1701 = vadd.f32 %v1612, %v1700
  %v1702 = vpop.f32.mrf.mxu0
  %v1703 = vadd.f32 %v1614, %v1702
  %1704 = vmatmul.bf16.gmra.mxu0 %v1366
  %v1705 = vpop.f32.mrf.mxu0
  %v1706 = vadd.f32 %v1617, %v1705
  %v1707 = vpop.f32.mrf.mxu0
  %v1708 = vadd.f32 %v1619, %v1707
  %1709 = vmatmul.bf16.gmra.mxu0 %v1368
  %v1710 = vpop.f32.mrf.mxu0
  %v1711 = vadd.f32 %v1622, %v1710
  %v1712 = vpop.f32.mrf.mxu0
  %v1713 = vadd.f32 %v1624, %v1712
  %1714 = vmatmul.bf16.gmra.mxu0 %v1370
  %v1715 = vpop.f32.mrf.mxu0
  %v1716 = vadd.f32 %v1627, %v1715
  %v1717 = vpop.f32.mrf.mxu0
  %v1718 = vadd.f32 %v1629, %v1717
  %1719 = vmatmul.bf16.gmra.mxu0 %v1372
  %v1720 = vpop.f32.mrf.mxu0
  %v1721 = vadd.f32 %v1632, %v1720
  %v1722 = vpop.f32.mrf.mxu0
  %v1723 = vadd.f32 %v1634, %v1722
  %1724 = vmatmul.bf16.gmra.mxu0 %v1374
  %v1725 = vpop.f32.mrf.mxu0
  %v1726 = vadd.f32 %v1637, %v1725
  %v1727 = vpop.f32.mrf.mxu0
  %v1728 = vadd.f32 %v1639, %v1727
  %1729 = vmatmul.bf16.gmra.mxu0 %v1376
  %v1730 = vpop.f32.mrf.mxu0
  %v1731 = vadd.f32 %v1642, %v1730
  %v1732 = vpop.f32.mrf.mxu0
  %v1733 = vadd.f32 %v1644, %v1732
  %1734 = vmatmul.bf16.gmra.mxu0 %v1378
  %v1735 = vpop.f32.mrf.mxu0
  %v1736 = vadd.f32 %v1647, %v1735
  %v1737 = vpop.f32.mrf.mxu0
  %v1738 = vadd.f32 %v1649, %v1737
  %1739 = vmatmul.bf16.gmra.mxu0 %v1380
  %v1740 = vpop.f32.mrf.mxu0
  %v1741 = vadd.f32 %v1652, %v1740
  %v1742 = vpop.f32.mrf.mxu0
  %v1743 = vadd.f32 %v1654, %v1742
  %1744 = vmatmul.bf16.gmra.mxu0 %v1382
  %v1745 = vpop.f32.mrf.mxu0
  %v1746 = vadd.f32 %v1657, %v1745
  %v1747 = vpop.f32.mrf.mxu0
  %v1748 = vadd.f32 %v1659, %v1747
  %1749 = vmatmul.bf16.gmra.mxu0 %v1384
  %v1750 = vpop.f32.mrf.mxu0
  %v1751 = vadd.f32 %v1662, %v1750
  %v1752 = vpop.f32.mrf.mxu0
  %v1753 = vadd.f32 %v1664, %v1752
  %1754 = vmatmul.bf16.gmra.mxu0 %v1386
  %v1755 = vpop.f32.mrf.mxu0
  %v1756 = vadd.f32 %v1667, %v1755
  %v1757 = vpop.f32.mrf.mxu0
  %v1758 = vadd.f32 %v1669, %v1757
  %1759 = vmatmul.bf16.gmra.mxu0 %v1388
  %v1760 = vpop.f32.mrf.mxu0
  %v1761 = vadd.f32 %v1672, %v1760
  %v1762 = vpop.f32.mrf.mxu0
  %v1763 = vadd.f32 %v1674, %v1762
  %1764 = vdwg.mxu0
  %1765 = vmatpush.bf16.msra.mxu0 %v1538
  %1766 = vmatpush.bf16.msra.mxu0 %v1536
  %1767 = vmatpush.bf16.msra.mxu0 %v1534
  %1768 = vmatpush.bf16.msra.mxu0 %v1532
  %1769 = vmatpush.bf16.msra.mxu0 %v1530
  %1770 = vmatpush.bf16.msra.mxu0 %v1528
  %1771 = vmatpush.bf16.msra.mxu0 %v1526
  %1772 = vmatpush.bf16.msra.mxu0 %v1524
  %1773 = vmatmul.bf16.gmra.mxu0 %v1357
  %v1774 = vpop.f32.mrf.mxu0
  %v1775 = vadd.f32 %v1424, %v1774
  %v1776 = vpop.f32.mrf.mxu0
  %v1777 = vadd.f32 %v1424, %v1776
  %1778 = vmatmul.bf16.gmra.mxu0 %v1359
  %v1779 = vpop.f32.mrf.mxu0
  %v1780 = vadd.f32 %v1424, %v1779
  %v1781 = vpop.f32.mrf.mxu0
  %v1782 = vadd.f32 %v1424, %v1781
  %1783 = vmatmul.bf16.gmra.mxu0 %v1361
  %v1784 = vpop.f32.mrf.mxu0
  %v1785 = vadd.f32 %v1424, %v1784
  %v1786 = vpop.f32.mrf.mxu0
  %v1787 = vadd.f32 %v1424, %v1786
  %1788 = vmatmul.bf16.gmra.mxu0 %v1363
  %v1789 = vpop.f32.mrf.mxu0
  %v1790 = vadd.f32 %v1424, %v1789
  %v1791 = vpop.f32.mrf.mxu0
  %v1792 = vadd.f32 %v1424, %v1791
  %1793 = vmatmul.bf16.gmra.mxu0 %v1365
  %v1794 = vpop.f32.mrf.mxu0
  %v1795 = vadd.f32 %v1424, %v1794
  %v1796 = vpop.f32.mrf.mxu0
  %v1797 = vadd.f32 %v1424, %v1796
  %1798 = vmatmul.bf16.gmra.mxu0 %v1367
  %v1799 = vpop.f32.mrf.mxu0
  %v1800 = vadd.f32 %v1424, %v1799
  %v1801 = vpop.f32.mrf.mxu0
  %v1802 = vadd.f32 %v1424, %v1801
  %1803 = vmatmul.bf16.gmra.mxu0 %v1369
  %v1804 = vpop.f32.mrf.mxu0
  %v1805 = vadd.f32 %v1424, %v1804
  %v1806 = vpop.f32.mrf.mxu0
  %v1807 = vadd.f32 %v1424, %v1806
  %1808 = vmatmul.bf16.gmra.mxu0 %v1371
  %v1809 = vpop.f32.mrf.mxu0
  %v1810 = vadd.f32 %v1424, %v1809
  %v1811 = vpop.f32.mrf.mxu0
  %v1812 = vadd.f32 %v1424, %v1811
  %1813 = vmatmul.bf16.gmra.mxu0 %v1373
  %v1814 = vpop.f32.mrf.mxu0
  %v1815 = vadd.f32 %v1424, %v1814
  %v1816 = vpop.f32.mrf.mxu0
  %v1817 = vadd.f32 %v1424, %v1816
  %1818 = vmatmul.bf16.gmra.mxu0 %v1375
  %v1819 = vpop.f32.mrf.mxu0
  %v1820 = vadd.f32 %v1424, %v1819
  %v1821 = vpop.f32.mrf.mxu0
  %v1822 = vadd.f32 %v1424, %v1821
  %1823 = vmatmul.bf16.gmra.mxu0 %v1377
  %v1824 = vpop.f32.mrf.mxu0
  %v1825 = vadd.f32 %v1424, %v1824
  %v1826 = vpop.f32.mrf.mxu0
  %v1827 = vadd.f32 %v1424, %v1826
  %1828 = vmatmul.bf16.gmra.mxu0 %v1379
  %v1829 = vpop.f32.mrf.mxu0
  %v1830 = vadd.f32 %v1424, %v1829
  %v1831 = vpop.f32.mrf.mxu0
  %v1832 = vadd.f32 %v1424, %v1831
  %1833 = vmatmul.bf16.gmra.mxu0 %v1381
  %v1834 = vpop.f32.mrf.mxu0
  %v1835 = vadd.f32 %v1424, %v1834
  %v1836 = vpop.f32.mrf.mxu0
  %v1837 = vadd.f32 %v1424, %v1836
  %1838 = vmatmul.bf16.gmra.mxu0 %v1383
  %v1839 = vpop.f32.mrf.mxu0
  %v1840 = vadd.f32 %v1424, %v1839
  %v1841 = vpop.f32.mrf.mxu0
  %v1842 = vadd.f32 %v1424, %v1841
  %1843 = vmatmul.bf16.gmra.mxu0 %v1385
  %v1844 = vpop.f32.mrf.mxu0
  %v1845 = vadd.f32 %v1424, %v1844
  %v1846 = vpop.f32.mrf.mxu0
  %v1847 = vadd.f32 %v1424, %v1846
  %1848 = vmatmul.bf16.gmra.mxu0 %v1387
  %v1849 = vpop.f32.mrf.mxu0
  %v1850 = vadd.f32 %v1424, %v1849
  %v1851 = vpop.f32.mrf.mxu0
  %v1852 = vadd.f32 %v1424, %v1851
  %1853 = vdwg.mxu0
  %1854 = vmatpush.bf16.msra.mxu0 %v1554
  %1855 = vmatpush.bf16.msra.mxu0 %v1552
  %1856 = vmatpush.bf16.msra.mxu0 %v1550
  %1857 = vmatpush.bf16.msra.mxu0 %v1548
  %1858 = vmatpush.bf16.msra.mxu0 %v1546
  %1859 = vmatpush.bf16.msra.mxu0 %v1544
  %1860 = vmatpush.bf16.msra.mxu0 %v1542
  %1861 = vmatpush.bf16.msra.mxu0 %v1540
  %1862 = vmatmul.bf16.gmra.mxu0 %v1358
  %v1863 = vpop.f32.mrf.mxu0
  %v1864 = vadd.f32 %v1775, %v1863
  %v1865 = vpop.f32.mrf.mxu0
  %v1866 = vadd.f32 %v1777, %v1865
  %1867 = vmatmul.bf16.gmra.mxu0 %v1360
  %v1868 = vpop.f32.mrf.mxu0
  %v1869 = vadd.f32 %v1780, %v1868
  %v1870 = vpop.f32.mrf.mxu0
  %v1871 = vadd.f32 %v1782, %v1870
  %1872 = vmatmul.bf16.gmra.mxu0 %v1362
  %v1873 = vpop.f32.mrf.mxu0
  %v1874 = vadd.f32 %v1785, %v1873
  %v1875 = vpop.f32.mrf.mxu0
  %v1876 = vadd.f32 %v1787, %v1875
  %1877 = vmatmul.bf16.gmra.mxu0 %v1364
  %v1878 = vpop.f32.mrf.mxu0
  %v1879 = vadd.f32 %v1790, %v1878
  %v1880 = vpop.f32.mrf.mxu0
  %v1881 = vadd.f32 %v1792, %v1880
  %1882 = vmatmul.bf16.gmra.mxu0 %v1366
  %v1883 = vpop.f32.mrf.mxu0
  %v1884 = vadd.f32 %v1795, %v1883
  %v1885 = vpop.f32.mrf.mxu0
  %v1886 = vadd.f32 %v1797, %v1885
  %1887 = vmatmul.bf16.gmra.mxu0 %v1368
  %v1888 = vpop.f32.mrf.mxu0
  %v1889 = vadd.f32 %v1800, %v1888
  %v1890 = vpop.f32.mrf.mxu0
  %v1891 = vadd.f32 %v1802, %v1890
  %1892 = vmatmul.bf16.gmra.mxu0 %v1370
  %v1893 = vpop.f32.mrf.mxu0
  %v1894 = vadd.f32 %v1805, %v1893
  %v1895 = vpop.f32.mrf.mxu0
  %v1896 = vadd.f32 %v1807, %v1895
  %1897 = vmatmul.bf16.gmra.mxu0 %v1372
  %v1898 = vpop.f32.mrf.mxu0
  %v1899 = vadd.f32 %v1810, %v1898
  %v1900 = vpop.f32.mrf.mxu0
  %v1901 = vadd.f32 %v1812, %v1900
  %1902 = vmatmul.bf16.gmra.mxu0 %v1374
  %v1903 = vpop.f32.mrf.mxu0
  %v1904 = vadd.f32 %v1815, %v1903
  %v1905 = vpop.f32.mrf.mxu0
  %v1906 = vadd.f32 %v1817, %v1905
  %1907 = vmatmul.bf16.gmra.mxu0 %v1376
  %v1908 = vpop.f32.mrf.mxu0
  %v1909 = vadd.f32 %v1820, %v1908
  %v1910 = vpop.f32.mrf.mxu0
  %v1911 = vadd.f32 %v1822, %v1910
  %1912 = vmatmul.bf16.gmra.mxu0 %v1378
  %v1913 = vpop.f32.mrf.mxu0
  %v1914 = vadd.f32 %v1825, %v1913
  %v1915 = vpop.f32.mrf.mxu0
  %v1916 = vadd.f32 %v1827, %v1915
  %1917 = vmatmul.bf16.gmra.mxu0 %v1380
  %v1918 = vpop.f32.mrf.mxu0
  %v1919 = vadd.f32 %v1830, %v1918
  %v1920 = vpop.f32.mrf.mxu0
  %v1921 = vadd.f32 %v1832, %v1920
  %1922 = vmatmul.bf16.gmra.mxu0 %v1382
  %v1923 = vpop.f32.mrf.mxu0
  %v1924 = vadd.f32 %v1835, %v1923
  %v1925 = vpop.f32.mrf.mxu0
  %v1926 = vadd.f32 %v1837, %v1925
  %1927 = vmatmul.bf16.gmra.mxu0 %v1384
  %v1928 = vpop.f32.mrf.mxu0
  %v1929 = vadd.f32 %v1840, %v1928
  %v1930 = vpop.f32.mrf.mxu0
  %v1931 = vadd.f32 %v1842, %v1930
  %1932 = vmatmul.bf16.gmra.mxu0 %v1386
  %v1933 = vpop.f32.mrf.mxu0
  %v1934 = vadd.f32 %v1845, %v1933
  %v1935 = vpop.f32.mrf.mxu0
  %v1936 = vadd.f32 %v1847, %v1935
  %1937 = vmatmul.bf16.gmra.mxu0 %v1388
  %v1938 = vpop.f32.mrf.mxu0
  %v1939 = vadd.f32 %v1850, %v1938
  %v1940 = vpop.f32.mrf.mxu0
  %v1941 = vadd.f32 %v1852, %v1940
  %1942 = vdwg.mxu0
  %v1943 = vpack.c.bf16 %v1864, %v1686
  %v1944 = vpack.c.bf16 %v1866, %v1688
  %v1945 = vpack.c.bf16 %v1869, %v1691
  %v1946 = vpack.c.bf16 %v1871, %v1693
  %v1947 = vpack.c.bf16 %v1874, %v1696
  %v1948 = vpack.c.bf16 %v1876, %v1698
  %v1949 = vpack.c.bf16 %v1879, %v1701
  %v1950 = vpack.c.bf16 %v1881, %v1703
  %v1951 = vpack.c.bf16 %v1884, %v1706
  %v1952 = vpack.c.bf16 %v1886, %v1708
  %v1953 = vpack.c.bf16 %v1889, %v1711
  %v1954 = vpack.c.bf16 %v1891, %v1713
  %v1955 = vpack.c.bf16 %v1894, %v1716
  %v1956 = vpack.c.bf16 %v1896, %v1718
  %v1957 = vpack.c.bf16 %v1899, %v1721
  %v1958 = vpack.c.bf16 %v1901, %v1723
  %v1959 = vpack.c.bf16 %v1904, %v1726
  %v1960 = vpack.c.bf16 %v1906, %v1728
  %v1961 = vpack.c.bf16 %v1909, %v1731
  %v1962 = vpack.c.bf16 %v1911, %v1733
  %v1963 = vpack.c.bf16 %v1914, %v1736
  %v1964 = vpack.c.bf16 %v1916, %v1738
  %v1965 = vpack.c.bf16 %v1919, %v1741
  %v1966 = vpack.c.bf16 %v1921, %v1743
  %v1967 = vpack.c.bf16 %v1924, %v1746
  %v1968 = vpack.c.bf16 %v1926, %v1748
  %v1969 = vpack.c.bf16 %v1929, %v1751
  %v1970 = vpack.c.bf16 %v1931, %v1753
  %v1971 = vpack.c.bf16 %v1934, %v1756
  %v1972 = vpack.c.bf16 %v1936, %v1758
  %v1973 = vpack.c.bf16 %v1939, %v1761
  %v1974 = vpack.c.bf16 %v1941, %v1763
  %1975 = vst [vmem:[%s7] sm:$0xff] %v1943
  %1976 = vst [vmem:[%s7 + $0x8] sm:$0xff] %v1944
  %1977 = vst [vmem:[%s7 + $0x10] sm:$0xff] %v1945
  %1978 = vst [vmem:[%s7 + $0x18] sm:$0xff] %v1946
  %1979 = vst [vmem:[%s7 + $0x20] sm:$0xff] %v1947
  %1980 = vst [vmem:[%s7 + $0x28] sm:$0xff] %v1948
  %1981 = vst [vmem:[%s7 + $0x30] sm:$0xff] %v1949
  %1982 = vst [vmem:[%s7 + $0x38] sm:$0xff] %v1950
  %1983 = vst [vmem:[%s7 + $0x40] sm:$0xff] %v1951
  %1984 = vst [vmem:[%s7 + $0x48] sm:$0xff] %v1952
  %1985 = vst [vmem:[%s7 + $0x50] sm:$0xff] %v1953
  %1986 = vst [vmem:[%s7 + $0x58] sm:$0xff] %v1954
  %1987 = vst [vmem:[%s7 + $0x60] sm:$0xff] %v1955
  %1988 = vst [vmem:[%s7 + $0x68] sm:$0xff] %v1956
  %1989 = vst [vmem:[%s7 + $0x70] sm:$0xff] %v1957
  %1990 = vst [vmem:[%s7 + $0x78] sm:$0xff] %v1958
  %1991 = vst [vmem:[%s7 + $0x80] sm:$0xff] %v1959
  %1992 = vst [vmem:[%s7 + $0x88] sm:$0xff] %v1960
  %1993 = vst [vmem:[%s7 + $0x90] sm:$0xff] %v1961
  %1994 = vst [vmem:[%s7 + $0x98] sm:$0xff] %v1962
  %1995 = vst [vmem:[%s7 + $0xa0] sm:$0xff] %v1963
  %1996 = vst [vmem:[%s7 + $0xa8] sm:$0xff] %v1964
  %1997 = vst [vmem:[%s7 + $0xb0] sm:$0xff] %v1965
  %1998 = vst [vmem:[%s7 + $0xb8] sm:$0xff] %v1966
  %1999 = vst [vmem:[%s7 + $0xc0] sm:$0xff] %v1967
  %2000 = vst [vmem:[%s7 + $0xc8] sm:$0xff] %v1968
  %2001 = vst [vmem:[%s7 + $0xd0] sm:$0xff] %v1969
  %2002 = vst [vmem:[%s7 + $0xd8] sm:$0xff] %v1970
  %2003 = vst [vmem:[%s7 + $0xe0] sm:$0xff] %v1971
  %2004 = vst [vmem:[%s7 + $0xe8] sm:$0xff] %v1972
  %2005 = vst [vmem:[%s7 + $0xf0] sm:$0xff] %v1973
  %2006 = vst [vmem:[%s7 + $0xf8] sm:$0xff] %v1974
  %v2007 = vadd.f32 %v1686, %v1688
  %v2008 = vadd.f32 %v2007, %v1691
  %v2009 = vadd.f32 %v2008, %v1693
  %v2010 = vadd.f32 %v2009, %v1696
  %v2011 = vadd.f32 %v2010, %v1698
  %v2012 = vadd.f32 %v2011, %v1701
  %v2013 = vadd.f32 %v2012, %v1703
  %v2014 = vadd.f32 %v2013, %v1706
  %v2015 = vadd.f32 %v2014, %v1708
  %v2016 = vadd.f32 %v2015, %v1711
  %v2017 = vadd.f32 %v2016, %v1713
  %v2018 = vadd.f32 %v2017, %v1716
  %v2019 = vadd.f32 %v2018, %v1718
  %v2020 = vadd.f32 %v2019, %v1721
  %v2021 = vadd.f32 %v2020, %v1723
  %v2022 = vadd.f32 %v2021, %v1726
  %v2023 = vadd.f32 %v2022, %v1728
  %v2024 = vadd.f32 %v2023, %v1731
  %v2025 = vadd.f32 %v2024, %v1733
  %v2026 = vadd.f32 %v2025, %v1736
  %v2027 = vadd.f32 %v2026, %v1738
  %v2028 = vadd.f32 %v2027, %v1741
  %v2029 = vadd.f32 %v2028, %v1743
  %v2030 = vadd.f32 %v2029, %v1746
  %v2031 = vadd.f32 %v2030, %v1748
  %v2032 = vadd.f32 %v2031, %v1751
  %v2033 = vadd.f32 %v2032, %v1753
  %v2034 = vadd.f32 %v2033, %v1756
  %v2035 = vadd.f32 %v2034, %v1758
  %v2036 = vadd.f32 %v2035, %v1761
  %v2037 = vadd.f32 %v2036, %v1763
  %v2038 = vrot.slane %v2037, 4
  %v2039 = vadd.f32 %v2037, %v2038
  %v2040 = vrot.slane %v2039, 2
  %v2041 = vadd.f32 %v2039, %v2040
  %v2042 = vrot.slane %v2041, 1
  %v2043 = vadd.f32 %v2041, %v2042
  %v2044 = vadd.f32 %v1864, %v1866
  %v2045 = vadd.f32 %v2044, %v1869
  %v2046 = vadd.f32 %v2045, %v1871
  %v2047 = vadd.f32 %v2046, %v1874
  %v2048 = vadd.f32 %v2047, %v1876
  %v2049 = vadd.f32 %v2048, %v1879
  %v2050 = vadd.f32 %v2049, %v1881
  %v2051 = vadd.f32 %v2050, %v1884
  %v2052 = vadd.f32 %v2051, %v1886
  %v2053 = vadd.f32 %v2052, %v1889
  %v2054 = vadd.f32 %v2053, %v1891
  %v2055 = vadd.f32 %v2054, %v1894
  %v2056 = vadd.f32 %v2055, %v1896
  %v2057 = vadd.f32 %v2056, %v1899
  %v2058 = vadd.f32 %v2057, %v1901
  %v2059 = vadd.f32 %v2058, %v1904
  %v2060 = vadd.f32 %v2059, %v1906
  %v2061 = vadd.f32 %v2060, %v1909
  %v2062 = vadd.f32 %v2061, %v1911
  %v2063 = vadd.f32 %v2062, %v1914
  %v2064 = vadd.f32 %v2063, %v1916
  %v2065 = vadd.f32 %v2064, %v1919
  %v2066 = vadd.f32 %v2065, %v1921
  %v2067 = vadd.f32 %v2066, %v1924
  %v2068 = vadd.f32 %v2067, %v1926
  %v2069 = vadd.f32 %v2068, %v1929
  %v2070 = vadd.f32 %v2069, %v1931
  %v2071 = vadd.f32 %v2070, %v1934
  %v2072 = vadd.f32 %v2071, %v1936
  %v2073 = vadd.f32 %v2072, %v1939
  %v2074 = vadd.f32 %v2073, %v1941
  %v2075 = vrot.slane %v2074, 4
  %v2076 = vadd.f32 %v2074, %v2075
  %v2077 = vrot.slane %v2076, 2
  %v2078 = vadd.f32 %v2076, %v2077
  %v2079 = vrot.slane %v2078, 1
  %v2080 = vadd.f32 %v2078, %v2079
  %v2083 = vrot.slane %v2080, 7
  %vm2084 = vcmask 1040384
  %v2085 = vsel %vm2084, %v2043, %v2083
  %v2087 = vlaneseq
  %vm2088 = vcmp.ge.s32.totalorder %v2087, 0
  %vm2089 = vcmp.lt.s32.totalorder %v2087, 256
  %vm2090 = vmand %vm2088, %vm2089
  %2091 = vst.msk [vmem:[%s8] sm:$0x3] %vm2090, %v2085
  %v2092 = vmul.f32 %v1686, %v1686
  %v2093 = vmul.f32 %v1864, %v1864
  %v2094 = vmul.f32 %v1688, %v1688
  %v2095 = vmul.f32 %v1866, %v1866
  %v2096 = vmul.f32 %v1691, %v1691
  %v2097 = vmul.f32 %v1869, %v1869
  %v2098 = vmul.f32 %v1693, %v1693
  %v2099 = vmul.f32 %v1871, %v1871
  %v2100 = vmul.f32 %v1696, %v1696
  %v2101 = vmul.f32 %v1874, %v1874
  %v2102 = vmul.f32 %v1698, %v1698
  %v2103 = vmul.f32 %v1876, %v1876
  %v2104 = vmul.f32 %v1701, %v1701
  %v2105 = vmul.f32 %v1879, %v1879
  %v2106 = vmul.f32 %v1703, %v1703
  %v2107 = vmul.f32 %v1881, %v1881
  %v2108 = vmul.f32 %v1706, %v1706
  %v2109 = vmul.f32 %v1884, %v1884
  %v2110 = vmul.f32 %v1708, %v1708
  %v2111 = vmul.f32 %v1886, %v1886
  %v2112 = vmul.f32 %v1711, %v1711
  %v2113 = vmul.f32 %v1889, %v1889
  %v2114 = vmul.f32 %v1713, %v1713
  %v2115 = vmul.f32 %v1891, %v1891
  %v2116 = vmul.f32 %v1716, %v1716
  %v2117 = vmul.f32 %v1894, %v1894
  %v2118 = vmul.f32 %v1718, %v1718
  %v2119 = vmul.f32 %v1896, %v1896
  %v2120 = vmul.f32 %v1721, %v1721
  %v2121 = vmul.f32 %v1899, %v1899
  %v2122 = vmul.f32 %v1723, %v1723
  %v2123 = vmul.f32 %v1901, %v1901
  %v2124 = vmul.f32 %v1726, %v1726
  %v2125 = vmul.f32 %v1904, %v1904
  %v2126 = vmul.f32 %v1728, %v1728
  %v2127 = vmul.f32 %v1906, %v1906
  %v2128 = vmul.f32 %v1731, %v1731
  %v2129 = vmul.f32 %v1909, %v1909
  %v2130 = vmul.f32 %v1733, %v1733
  %v2131 = vmul.f32 %v1911, %v1911
  %v2132 = vmul.f32 %v1736, %v1736
  %v2133 = vmul.f32 %v1914, %v1914
  %v2134 = vmul.f32 %v1738, %v1738
  %v2135 = vmul.f32 %v1916, %v1916
  %v2136 = vmul.f32 %v1741, %v1741
  %v2137 = vmul.f32 %v1919, %v1919
  %v2138 = vmul.f32 %v1743, %v1743
  %v2139 = vmul.f32 %v1921, %v1921
  %v2140 = vmul.f32 %v1746, %v1746
  %v2141 = vmul.f32 %v1924, %v1924
  %v2142 = vmul.f32 %v1748, %v1748
  %v2143 = vmul.f32 %v1926, %v1926
  %v2144 = vmul.f32 %v1751, %v1751
  %v2145 = vmul.f32 %v1929, %v1929
  %v2146 = vmul.f32 %v1753, %v1753
  %v2147 = vmul.f32 %v1931, %v1931
  %v2148 = vmul.f32 %v1756, %v1756
  %v2149 = vmul.f32 %v1934, %v1934
  %v2150 = vmul.f32 %v1758, %v1758
  %v2151 = vmul.f32 %v1936, %v1936
  %v2152 = vmul.f32 %v1761, %v1761
  %v2153 = vmul.f32 %v1939, %v1939
  %v2154 = vmul.f32 %v1763, %v1763
  %v2155 = vmul.f32 %v1941, %v1941
  %v2156 = vadd.f32 %v2092, %v2094
  %v2157 = vadd.f32 %v2156, %v2096
  %v2158 = vadd.f32 %v2157, %v2098
  %v2159 = vadd.f32 %v2158, %v2100
  %v2160 = vadd.f32 %v2159, %v2102
  %v2161 = vadd.f32 %v2160, %v2104
  %v2162 = vadd.f32 %v2161, %v2106
  %v2163 = vadd.f32 %v2162, %v2108
  %v2164 = vadd.f32 %v2163, %v2110
  %v2165 = vadd.f32 %v2164, %v2112
  %v2166 = vadd.f32 %v2165, %v2114
  %v2167 = vadd.f32 %v2166, %v2116
  %v2168 = vadd.f32 %v2167, %v2118
  %v2169 = vadd.f32 %v2168, %v2120
  %v2170 = vadd.f32 %v2169, %v2122
  %v2171 = vadd.f32 %v2170, %v2124
  %v2172 = vadd.f32 %v2171, %v2126
  %v2173 = vadd.f32 %v2172, %v2128
  %v2174 = vadd.f32 %v2173, %v2130
  %v2175 = vadd.f32 %v2174, %v2132
  %v2176 = vadd.f32 %v2175, %v2134
  %v2177 = vadd.f32 %v2176, %v2136
  %v2178 = vadd.f32 %v2177, %v2138
  %v2179 = vadd.f32 %v2178, %v2140
  %v2180 = vadd.f32 %v2179, %v2142
  %v2181 = vadd.f32 %v2180, %v2144
  %v2182 = vadd.f32 %v2181, %v2146
  %v2183 = vadd.f32 %v2182, %v2148
  %v2184 = vadd.f32 %v2183, %v2150
  %v2185 = vadd.f32 %v2184, %v2152
  %v2186 = vadd.f32 %v2185, %v2154
  %v2187 = vrot.slane %v2186, 4
  %v2188 = vadd.f32 %v2186, %v2187
  %v2189 = vrot.slane %v2188, 2
  %v2190 = vadd.f32 %v2188, %v2189
  %v2191 = vrot.slane %v2190, 1
  %v2192 = vadd.f32 %v2190, %v2191
  %v2193 = vadd.f32 %v2093, %v2095
  %v2194 = vadd.f32 %v2193, %v2097
  %v2195 = vadd.f32 %v2194, %v2099
  %v2196 = vadd.f32 %v2195, %v2101
  %v2197 = vadd.f32 %v2196, %v2103
  %v2198 = vadd.f32 %v2197, %v2105
  %v2199 = vadd.f32 %v2198, %v2107
  %v2200 = vadd.f32 %v2199, %v2109
  %v2201 = vadd.f32 %v2200, %v2111
  %v2202 = vadd.f32 %v2201, %v2113
  %v2203 = vadd.f32 %v2202, %v2115
  %v2204 = vadd.f32 %v2203, %v2117
  %v2205 = vadd.f32 %v2204, %v2119
  %v2206 = vadd.f32 %v2205, %v2121
  %v2207 = vadd.f32 %v2206, %v2123
  %v2208 = vadd.f32 %v2207, %v2125
  %v2209 = vadd.f32 %v2208, %v2127
  %v2210 = vadd.f32 %v2209, %v2129
  %v2211 = vadd.f32 %v2210, %v2131
  %v2212 = vadd.f32 %v2211, %v2133
  %v2213 = vadd.f32 %v2212, %v2135
  %v2214 = vadd.f32 %v2213, %v2137
  %v2215 = vadd.f32 %v2214, %v2139
  %v2216 = vadd.f32 %v2215, %v2141
  %v2217 = vadd.f32 %v2216, %v2143
  %v2218 = vadd.f32 %v2217, %v2145
  %v2219 = vadd.f32 %v2218, %v2147
  %v2220 = vadd.f32 %v2219, %v2149
  %v2221 = vadd.f32 %v2220, %v2151
  %v2222 = vadd.f32 %v2221, %v2153
  %v2223 = vadd.f32 %v2222, %v2155
  %v2224 = vrot.slane %v2223, 4
  %v2225 = vadd.f32 %v2223, %v2224
  %v2226 = vrot.slane %v2225, 2
  %v2227 = vadd.f32 %v2225, %v2226
  %v2228 = vrot.slane %v2227, 1
  %v2229 = vadd.f32 %v2227, %v2228
  %v2232 = vrot.slane %v2229, 7
  %v2233 = vsel %vm2084, %v2192, %v2232
  %2235 = vst.msk [vmem:[%s9] sm:$0x3] %vm2090, %v2233
  // Predicated region
  $region30: #{generator_forward.2} parent=0 // pred_check
    _
  $region31: #{generator_forward.2} parent=0 // pred_check_branch
    %2237 = sbr.rel (0) target = $region33
  $region32: #{generator_forward.2} parent=0 // pred_region
    _
  $region33: #{generator_forward.2} parent=0 // pred_fallthru
    _
  // Predicated region
  $region34: #{generator_forward.2} parent=0 // pred_check
    _
  $region35: #{generator_forward.2} parent=0 // pred_check_branch
    %2239 = sbr.rel (0) target = $region37
  $region36: #{generator_forward.2} parent=0 // pred_region
    _
  $region37: #{generator_forward.2} parent=0 // pred_fallthru
    _
  // Predicated region
  $region38: #{generator_forward.2} parent=0 // pred_check
    _
  $region39: #{generator_forward.2} parent=0 // pred_check_branch
    %2241 = sbr.rel (0) target = $region41
  $region40: #{generator_forward.2} parent=0 // pred_region
    _
  $region41: #{generator_forward.2} parent=0 // pred_fallthru
    _
  // Predicated region
  $region42: #{generator_forward.2} parent=0 // pred_check
    _
  $region43: #{generator_forward.2} parent=0 // pred_check_branch
    %2243 = sbr.rel (0) target = $region45
  $region44: #{generator_forward.2} parent=0 // pred_region
    _
  $region45: #{generator_forward.2} parent=0 // pred_fallthru
    _
  // Predicated region
  $region46: #{generator_forward.2} parent=0 // pred_check
    _
  $region47: #{generator_forward.2} parent=0 // pred_check_branch
    %2245 = sbr.rel (0) target = $region49
  $region48: #{generator_forward.2} parent=0 // pred_region
    _
  $region49: #{generator_forward.2} parent=0 // pred_fallthru
    _
  // Predicated region
  $region50: #{generator_forward.2} parent=0 // pred_check
    _
  $region51: #{generator_forward.2} parent=0 // pred_check_branch
    %2247 = sbr.rel (0) target = $region53
  $region52: #{generator_forward.2} parent=0 // pred_region
    _
  $region53: #{generator_forward.2} parent=0 // pred_fallthru
    _

</llo_original>
